<compile_context>
chip_gen: v6e
topology: v6e:2x2x1
jax: 0.10.0
libtpu: 0.0.40
codegen_flags: <defaults>
</compile_context>

<pallas_src>
import functools

import jax
import jax.numpy as jnp
from jax.experimental import pallas as pl
from jax.experimental.pallas import tpu as pltpu

LANE = 128


def _round_up(n, m):
    return ((n + m - 1) // m) * m


def _pad_last(a, c):
    pad = c - a.shape[-1]
    if pad == 0:
        return a
    return jnp.pad(a, [(0, 0)] * (a.ndim - 1) + [(0, pad)])


def _hw_budget():
    """(target matmul rows per tile, VMEM budget cap) for this TPU generation."""
    try:
        vmem = pltpu.get_tpu_info().vmem_capacity_bytes
    except Exception:            # no TPU / interpret mode / older API -> conservative
        vmem = 64 * 2 ** 20
    if vmem <= 64 * 2 ** 20:     # v7x-class: 64 MiB per TensorCore
        return 512, 40 * 2 ** 20
    return 1536, 96 * 2 ** 20    # v5e / v6e: 128 MiB


def _pick_row_tile(out_h, out_w, target_rows):
    """Largest divisor of out_h such that the matmul M-dim (rows*out_w) <= target."""
    th = 1
    for d in range(1, out_h + 1):
        if out_h % d == 0 and d * out_w <= target_rows:
            th = d
    return th


def _space_to_depth(x, s):
    """NHWC space-to-depth: (N,H,W,C) -> (N,H/s,W/s,s*s*C), channel = (p*s+q)*C + c."""
    if s == 1:
        return x
    n, h, w, c = x.shape
    ph, pw = (-h) % s, (-w) % s
    if ph or pw:
        x = jnp.pad(x, ((0, 0), (0, ph), (0, pw), (0, 0)))
        h, w = h + ph, w + pw
    x = x.reshape(n, h // s, s, w // s, s, c)
    x = jnp.transpose(x, (0, 1, 3, 2, 4, 5))
    return x.reshape(n, h // s, w // s, s * s * c)


def _conv_bn_kernel(*refs, TH, Wout, KH, KW, stride, sc_mode, sc_stride, relu6):
    """Fused KxK conv (BN scale pre-folded into W) + bias (+ shortcut) (+ relu6).

    Grid: (batch, output-row tiles).  Refs, in order:
      xp_ref   (1, Hs, Ws, s*s*Cin)   bf16  padded input in space-to-depth layout
      w_ref    (KH*KW, Cin, Cout)     bf16  conv weight (BN scale folded in)
      bias_ref (1, Cout)              f32   folded BN bias
      [sc_ref  (1, Hs', Ws', ss*ss*Csc) bf16  padded block input (shortcut src)]
      [scw_ref (Csc, Cout) bf16, scb_ref (1, Cout) f32   1x1 projection shortcut]
      out_ref  (1, TH, Wout, Cout)
    """
    xp_ref, w_ref, bias_ref = refs[:3]
    i = 3
    sc_ref = scw_ref = scb_ref = None
    if sc_mode != "none":
        sc_ref = refs[i]
        i += 1
    if sc_mode == "conv":
        scw_ref, scb_ref = refs[i], refs[i + 1]
        i += 2
    out_ref = refs[i]

    s = stride
    Cin = xp_ref.shape[-1] // (s * s)        # per-phase channel count
    Cout = out_ref.shape[-1]
    M = TH * Wout

    # First output row handled by this tile (== space-to-depth row).
    h0 = pl.multiple_of(pl.program_id(1) * TH, TH)

    # One contiguous, UN-strided dynamic-slice read of the rows this tile needs.
    # All further slicing below is static and unit-stride (stride was folded
    # into channel phases by the wrapper-side space-to-depth).
    RH = TH + (KH - 1) // s
    xin = xp_ref[:, pl.ds(h0, RH), :, :][0]               # (RH, Ws, s*s*Cin) bf16

    # KxK conv as KH*KW lane-dense MXU matmuls (K = Cin), accumulated in f32.
    acc = jnp.zeros((M, Cout), jnp.float32)
    for ki in range(KH):
        for kj in range(KW):
            di, p = ki // s, ki % s
            dj, q = kj // s, kj % s
            c0 = (p * s + q) * Cin
            tap = xin[di:di + TH, dj:dj + Wout, c0:c0 + Cin]      # (TH, Wout, Cin)
            acc = acc + jnp.dot(tap.reshape(M, Cin), w_ref[ki * KW + kj],
                                preferred_element_type=jnp.float32)

    y = acc + bias_ref[...]                                       # folded-BN bias

    if sc_mode != "none":
        ss = sc_stride
        Csc = sc_ref.shape[-1] // (ss * ss)
        ro, p = 1 // ss, 1 % ss        # the +1 spatial-pad offset, in s2d coords
        c0 = (p * ss + p) * Csc        # row/col phases are both p
        scin = sc_ref[:, pl.ds(h0 + ro, TH), :, :][0]
        res = scin[:, ro:ro + Wout, c0:c0 + Csc]                  # (TH, Wout, Csc)
        if sc_mode == "identity":
            y = y + res.reshape(M, Cout).astype(jnp.float32)
        else:  # 1x1 projection conv + folded BN
            y = y + (jnp.dot(res.reshape(M, Csc), scw_ref[...],
                             preferred_element_type=jnp.float32) + scb_ref[...])

    if relu6:
        y = jnp.clip(y, 0.0, 6.0)

    out_ref[...] = y.reshape(1, TH, Wout, Cout).astype(out_ref.dtype)


def _conv_bn_call(xp, w_taps, bias, *, kh, kw, stride, out_h, out_w, relu6,
                  sc_src=None, sc_w=None, sc_bias=None, sc_stride=1,
                  out_dtype=jnp.float32):
    """One fused pallas_call: conv(kh x kw) + bias (+ shortcut) (+ relu6)."""
    N, Hs, Ws, Cx = xp.shape
    T, Ck, Cout = w_taps.shape

    target_rows, vmem_cap = _hw_budget()
    TH = _pick_row_tile(out_h, out_w, target_rows)
    grid = (N, out_h // TH)

    inputs = [xp, w_taps, bias]
    in_specs = [
        pl.BlockSpec((1, Hs, Ws, Cx), lambda n, h: (n, 0, 0, 0)),
        pl.BlockSpec((T, Ck, Cout), lambda n, h: (0, 0, 0)),
        pl.BlockSpec((1, Cout), lambda n, h: (0, 0)),
    ]
    blk_bytes = Hs * Ws * Cx * 2 + T * Ck * Cout * 2 + Cout * 4

    sc_mode = "none"
    if sc_src is not None:
        _, Hs2, Ws2, Cs2 = sc_src.shape
        inputs.append(sc_src)
        in_specs.append(pl.BlockSpec((1, Hs2, Ws2, Cs2), lambda n, h: (n, 0, 0, 0)))
        blk_bytes += Hs2 * Ws2 * Cs2 * 2
        if sc_w is not None:
            sc_mode = "conv"
            inputs += [sc_w, sc_bias]
            in_specs += [pl.BlockSpec(sc_w.shape, lambda n, h: (0, 0)),
                         pl.BlockSpec((1, Cout), lambda n, h: (0, 0))]
            blk_bytes += sc_w.size * 2 + Cout * 4
        else:
            sc_mode = "identity"
            assert Cs2 // (sc_stride * sc_stride) == Cout

    blk_bytes += TH * out_w * Cout * jnp.dtype(out_dtype).itemsize
    # In-kernel temporaries: row-window value, tap value, f32 accumulator/epilogue.
    RH = TH + (kh - 1) // stride
    tmp_bytes = RH * Ws * Cx * 2 + TH * out_w * Ck * 2 + 2 * TH * out_w * Cout * 4
    vmem_limit = int(min(vmem_cap,
                         max(2 * blk_bytes + tmp_bytes + (4 << 20), 16 << 20)))

    kernel = functools.partial(
        _conv_bn_kernel, TH=TH, Wout=out_w, KH=kh, KW=kw, stride=stride,
        sc_mode=sc_mode, sc_stride=sc_stride, relu6=relu6)

    return pl.pallas_call(
        kernel,
        out_shape=jax.ShapeDtypeStruct((N, out_h, out_w, Cout), out_dtype),
        grid=grid,
        in_specs=in_specs,
        out_specs=pl.BlockSpec((1, TH, out_w, Cout), lambda n, h: (n, h, 0, 0)),
        compiler_params=pltpu.CompilerParams(
            # Every (n, row-tile) output block is independent -> both axes parallel.
            dimension_semantics=("parallel", "parallel"),
            vmem_limit_bytes=vmem_limit),
    )(*inputs)


def fold_bn(gamma, beta, mean, var, eps=1e-5):
    scale = gamma / jnp.sqrt(var + eps)
    bias = beta - mean * scale
    return scale, bias


def _prep_conv_w(w_hwio, scale, cin_p, cout_p):
    """Fold BN scale into the conv weight (f32), pad channels, fold taps, cast bf16."""
    kh, kw, cin, cout = w_hwio.shape
    w = w_hwio * scale.reshape(1, 1, 1, cout)          # fold in f32 (before bf16 cast)
    w = jnp.pad(w, ((0, 0), (0, 0), (0, cin_p - cin), (0, cout_p - cout)))
    return w.reshape(kh * kw, cin_p, cout_p).astype(jnp.bfloat16)


def _prep_bias(bias, cout_p):
    return _pad_last(bias.reshape(1, -1).astype(jnp.float32), cout_p)


def basic_block_forward(x_nchw, params, *, in_planes, out_planes, stride):
    N, _, H, W = x_nchw.shape
    H1 = (H + 2 - 3) // stride + 1
    W1 = (W + 2 - 3) // stride + 1

    hidden_planes = params["w1"].shape[-1]
    cin_p = _round_up(in_planes, LANE)
    hid_p = _round_up(hidden_planes, LANE)
    out_p = _round_up(out_planes, LANE)

    # NCHW -> NHWC, channel-pad to a lane multiple, bf16, one spatial zero-pad
    # shared by conv1 and the fused shortcut, then fold the conv stride into
    # channel phases (space-to-depth) so all in-kernel reads are unit-stride.
    x = jnp.transpose(x_nchw, (0, 2, 3, 1))
    xp = jnp.pad(_pad_last(x, cin_p).astype(jnp.bfloat16),
                 ((0, 0), (1, 1), (1, 1), (0, 0)))
    xs2d = _space_to_depth(xp, stride)

    # Stage 1: out1 = relu6(bn1(conv1(x)))   (kept bf16 + channel-padded)
    s1, b1 = fold_bn(*params["bn1"])
    out1 = _conv_bn_call(xs2d, _prep_conv_w(params["w1"], s1, cin_p, hid_p),
                         _prep_bias(b1, hid_p),
                         kh=3, kw=3, stride=stride, out_h=H1, out_w=W1,
                         relu6=True, out_dtype=jnp.bfloat16)
    out1p = jnp.pad(out1, ((0, 0), (1, 1), (1, 1), (0, 0)))

    # Stage 2: out = relu6(bn2(conv2(out1)) + shortcut(x)), shortcut fused in-kernel.
    s2, b2 = fold_bn(*params["bn2"])
    w2 = _prep_conv_w(params["w2"], s2, hid_p, out_p)
    b2p = _prep_bias(b2, out_p)
    has_proj = (stride != 1) or (in_planes != out_planes)
    if has_proj:
        ssc, bsc = fold_bn(*params["bn_sc"])
        wsc = params["w_sc"][0, 0] * ssc.reshape(1, -1)            # (Cin, Cout) f32
        wsc = jnp.pad(wsc, ((0, cin_p - in_planes), (0, out_p - out_planes)))
        out = _conv_bn_call(out1p, w2, b2p, kh=3, kw=3, stride=1,
                            out_h=H1, out_w=W1, relu6=True,
                            sc_src=xs2d, sc_w=wsc.astype(jnp.bfloat16),
                            sc_bias=_prep_bias(bsc, out_p), sc_stride=stride,
                            out_dtype=jnp.float32)
    else:
        out = _conv_bn_call(out1p, w2, b2p, kh=3, kw=3, stride=1,
                            out_h=H1, out_w=W1, relu6=True,
                            sc_src=xs2d, sc_stride=stride,
                            out_dtype=jnp.float32)

    # Drop channel padding, NHWC -> NCHW.
    return jnp.transpose(out[..., :out_planes], (0, 3, 1, 2))


def init_basic_block_params(key, in_planes, hidden_planes, out_planes, stride):
    ks = jax.random.split(key, 16)
    p = {}
    p["w1"] = 0.1 * jax.random.normal(ks[0], (3, 3, in_planes, hidden_planes), jnp.float32)
    p["w2"] = 0.1 * jax.random.normal(ks[1], (3, 3, hidden_planes, out_planes), jnp.float32)
    p["bn1"] = (1.0 + 0.1 * jax.random.normal(ks[2], (hidden_planes,), jnp.float32),
                0.1 * jax.random.normal(ks[3], (hidden_planes,), jnp.float32),
                0.1 * jax.random.normal(ks[4], (hidden_planes,), jnp.float32),
                0.5 + jax.random.uniform(ks[5], (hidden_planes,), jnp.float32))
    p["bn2"] = (1.0 + 0.1 * jax.random.normal(ks[6], (out_planes,), jnp.float32),
                0.1 * jax.random.normal(ks[7], (out_planes,), jnp.float32),
                0.1 * jax.random.normal(ks[8], (out_planes,), jnp.float32),
                0.5 + jax.random.uniform(ks[9], (out_planes,), jnp.float32))
    if stride != 1 or in_planes != out_planes:
        p["w_sc"] = 0.1 * jax.random.normal(ks[10], (1, 1, in_planes, out_planes), jnp.float32)
        p["bn_sc"] = (1.0 + 0.1 * jax.random.normal(ks[11], (out_planes,), jnp.float32),
                      0.1 * jax.random.normal(ks[12], (out_planes,), jnp.float32),
                      0.1 * jax.random.normal(ks[13], (out_planes,), jnp.float32),
                      0.5 + jax.random.uniform(ks[14], (out_planes,), jnp.float32))
    return p


def basic_block_reference(x_nchw, params, *, in_planes, out_planes, stride):
    """Pure-JAX f32 reference of the PyTorch BasicBlock forward (inference BN)."""
    def conv(x, w_hwio, s, pad):
        return jax.lax.conv_general_dilated(
            x, w_hwio, (s, s), [(pad, pad), (pad, pad)],
            dimension_numbers=("NCHW", "HWIO", "NCHW"))

    def bn(x, p):
        scale, bias = fold_bn(*p)
        return x * scale[None, :, None, None] + bias[None, :, None, None]

    out = jnp.clip(bn(conv(x_nchw, params["w1"], stride, 1), params["bn1"]), 0.0, 6.0)
    out = bn(conv(out, params["w2"], 1, 1), params["bn2"])
    if stride != 1 or in_planes != out_planes:
        sc = bn(conv(x_nchw, params["w_sc"], stride, 0), params["bn_sc"])
    else:
        sc = x_nchw
    return jnp.clip(out + sc, 0.0, 6.0)


if __name__ == "__main__":
    key = jax.random.PRNGKey(0)

    configs = [
        # stride-2 projection shortcut (1x1 conv + BN fused into the conv2 kernel)
        dict(n=2, cin=4, hidden=8, cout=8, hw=16, stride=2),
        # stride-1 identity shortcut
        dict(n=2, cin=8, hidden=16, cout=8, hw=16, stride=1),
    ]
    for idx, cfg in enumerate(configs):
        kx, kp, key = jax.random.split(key, 3)
        x = jax.random.normal(kx, (cfg["n"], cfg["cin"], cfg["hw"], cfg["hw"]),
                              jnp.float32)
        params = init_basic_block_params(kp, cfg["cin"], cfg["hidden"],
                                         cfg["cout"], cfg["stride"])
        fwd = jax.jit(functools.partial(basic_block_forward,
                                        in_planes=cfg["cin"],
                                        out_planes=cfg["cout"],
                                        stride=cfg["stride"]))
        y = jax.block_until_ready(fwd(x, params))
        ho = (cfg["hw"] + 2 - 3) // cfg["stride"] + 1
        assert y.shape == (cfg["n"], cfg["cout"], ho, ho), y.shape

        y_ref = basic_block_reference(x, params, in_planes=cfg["cin"],
                                      out_planes=cfg["cout"], stride=cfg["stride"])
        err = float(jnp.max(jnp.abs(y - y_ref)))
        assert err < 0.1, f"config {idx}: max abs err {err}"

    print("KERNEL_OK")
</pallas_src>

<mosaic_0001>
module attributes {stable_mosaic.version = 11 : i64} {
  func.func @_conv_bn_kernel(%arg0: i32, %arg1: i32, %arg2: memref<1x9x9x512xbf16, #tpu.memory_space<vmem>>, %arg3: memref<9x128x128xbf16, #tpu.memory_space<vmem>>, %arg4: memref<1x128xf32, #tpu.memory_space<vmem>>, %arg5: memref<1x8x8x128xbf16, #tpu.memory_space<vmem>>) attributes {dimension_semantics = [#tpu.dimension_semantics<parallel>, #tpu.dimension_semantics<parallel>], iteration_bounds = array<i64: 2, 1>, scalar_prefetch = 0 : i64, scratch_operands = 0 : i64, tpu.core_type = #tpu.core_type<tc>, window_params = [{transform_indices = @transform_0, window_bounds = array<i64: 1, 9, 9, 512>}, {pipeline_mode = #tpu.pipeline_mode<synchronous>, transform_indices = @transform_1, window_bounds = array<i64: 9, 128, 128>}, {pipeline_mode = #tpu.pipeline_mode<synchronous>, transform_indices = @transform_2, window_bounds = array<i64: 1, 128>}, {transform_indices = @transform_3, window_bounds = array<i64: 1, 8, 8, 128>}]} {
    %c8_i32 = arith.constant 8 : i32
    %0 = arith.muli %arg1, %c8_i32 : i32
    %1 = tpu.assume_multiple %0, 8 : i32
    %c0 = arith.constant 0 : index
    %2 = arith.index_cast %1 : i32 to index
    %c0_0 = arith.constant 0 : index
    %c0_1 = arith.constant 0 : index
    %3 = vector.load %arg2[%c0, %2, %c0_0, %c0_1] : memref<1x9x9x512xbf16, #tpu.memory_space<vmem>>, vector<1x9x9x512xbf16>
    %4 = vector.shape_cast %3 : vector<1x9x9x512xbf16> to vector<9x9x512xbf16>
    %cst = arith.constant 0.000000e+00 : f32
    %5 = vector.broadcast %cst : f32 to vector<64x128xf32>
    %6 = vector.extract_strided_slice %4 {offsets = [0, 0, 0], sizes = [8, 8, 128], strides = [1, 1, 1]} : vector<9x9x512xbf16> to vector<8x8x128xbf16>
    %7 = vector.shape_cast %6 : vector<8x8x128xbf16> to vector<64x128xbf16>
    %c0_2 = arith.constant 0 : index
    %c0_3 = arith.constant 0 : index
    %c0_4 = arith.constant 0 : index
    %8 = vector.load %arg3[%c0_2, %c0_3, %c0_4] : memref<9x128x128xbf16, #tpu.memory_space<vmem>>, vector<1x128x128xbf16>
    %9 = vector.shape_cast %8 : vector<1x128x128xbf16> to vector<128x128xbf16>
    %cst_5 = arith.constant dense<0.000000e+00> : vector<64x128xf32>
    %10 = tpu.matmul %7, %9, %cst_5 {dimension_numbers = #tpu.dot_dimension_numbers<[1], [0], [0], [1], [0, 0, 1, 1], [], []>} : vector<64x128xbf16>, vector<128x128xbf16>, vector<64x128xf32> -> vector<64x128xf32>
    %11 = arith.addf %5, %10 : vector<64x128xf32>
    %12 = vector.extract_strided_slice %4 {offsets = [0, 0, 128], sizes = [8, 8, 128], strides = [1, 1, 1]} : vector<9x9x512xbf16> to vector<8x8x128xbf16>
    %13 = vector.shape_cast %12 : vector<8x8x128xbf16> to vector<64x128xbf16>
    %c1 = arith.constant 1 : index
    %c0_6 = arith.constant 0 : index
    %c0_7 = arith.constant 0 : index
    %14 = vector.load %arg3[%c1, %c0_6, %c0_7] : memref<9x128x128xbf16, #tpu.memory_space<vmem>>, vector<1x128x128xbf16>
    %15 = vector.shape_cast %14 : vector<1x128x128xbf16> to vector<128x128xbf16>
    %cst_8 = arith.constant dense<0.000000e+00> : vector<64x128xf32>
    %16 = tpu.matmul %13, %15, %cst_8 {dimension_numbers = #tpu.dot_dimension_numbers<[1], [0], [0], [1], [0, 0, 1, 1], [], []>} : vector<64x128xbf16>, vector<128x128xbf16>, vector<64x128xf32> -> vector<64x128xf32>
    %17 = arith.addf %11, %16 : vector<64x128xf32>
    %18 = vector.extract_strided_slice %4 {offsets = [0, 1, 0], sizes = [8, 8, 128], strides = [1, 1, 1]} : vector<9x9x512xbf16> to vector<8x8x128xbf16>
    %19 = vector.shape_cast %18 : vector<8x8x128xbf16> to vector<64x128xbf16>
    %c2 = arith.constant 2 : index
    %c0_9 = arith.constant 0 : index
    %c0_10 = arith.constant 0 : index
    %20 = vector.load %arg3[%c2, %c0_9, %c0_10] : memref<9x128x128xbf16, #tpu.memory_space<vmem>>, vector<1x128x128xbf16>
    %21 = vector.shape_cast %20 : vector<1x128x128xbf16> to vector<128x128xbf16>
    %cst_11 = arith.constant dense<0.000000e+00> : vector<64x128xf32>
    %22 = tpu.matmul %19, %21, %cst_11 {dimension_numbers = #tpu.dot_dimension_numbers<[1], [0], [0], [1], [0, 0, 1, 1], [], []>} : vector<64x128xbf16>, vector<128x128xbf16>, vector<64x128xf32> -> vector<64x128xf32>
    %23 = arith.addf %17, %22 : vector<64x128xf32>
    %24 = vector.extract_strided_slice %4 {offsets = [0, 0, 256], sizes = [8, 8, 128], strides = [1, 1, 1]} : vector<9x9x512xbf16> to vector<8x8x128xbf16>
    %25 = vector.shape_cast %24 : vector<8x8x128xbf16> to vector<64x128xbf16>
    %c3 = arith.constant 3 : index
    %c0_12 = arith.constant 0 : index
    %c0_13 = arith.constant 0 : index
    %26 = vector.load %arg3[%c3, %c0_12, %c0_13] : memref<9x128x128xbf16, #tpu.memory_space<vmem>>, vector<1x128x128xbf16>
    %27 = vector.shape_cast %26 : vector<1x128x128xbf16> to vector<128x128xbf16>
    %cst_14 = arith.constant dense<0.000000e+00> : vector<64x128xf32>
    %28 = tpu.matmul %25, %27, %cst_14 {dimension_numbers = #tpu.dot_dimension_numbers<[1], [0], [0], [1], [0, 0, 1, 1], [], []>} : vector<64x128xbf16>, vector<128x128xbf16>, vector<64x128xf32> -> vector<64x128xf32>
    %29 = arith.addf %23, %28 : vector<64x128xf32>
    %30 = vector.extract_strided_slice %4 {offsets = [0, 0, 384], sizes = [8, 8, 128], strides = [1, 1, 1]} : vector<9x9x512xbf16> to vector<8x8x128xbf16>
    %31 = vector.shape_cast %30 : vector<8x8x128xbf16> to vector<64x128xbf16>
    %c4 = arith.constant 4 : index
    %c0_15 = arith.constant 0 : index
    %c0_16 = arith.constant 0 : index
    %32 = vector.load %arg3[%c4, %c0_15, %c0_16] : memref<9x128x128xbf16, #tpu.memory_space<vmem>>, vector<1x128x128xbf16>
    %33 = vector.shape_cast %32 : vector<1x128x128xbf16> to vector<128x128xbf16>
    %cst_17 = arith.constant dense<0.000000e+00> : vector<64x128xf32>
    %34 = tpu.matmul %31, %33, %cst_17 {dimension_numbers = #tpu.dot_dimension_numbers<[1], [0], [0], [1], [0, 0, 1, 1], [], []>} : vector<64x128xbf16>, vector<128x128xbf16>, vector<64x128xf32> -> vector<64x128xf32>
    %35 = arith.addf %29, %34 : vector<64x128xf32>
    %36 = vector.extract_strided_slice %4 {offsets = [0, 1, 256], sizes = [8, 8, 128], strides = [1, 1, 1]} : vector<9x9x512xbf16> to vector<8x8x128xbf16>
    %37 = vector.shape_cast %36 : vector<8x8x128xbf16> to vector<64x128xbf16>
    %c5 = arith.constant 5 : index
    %c0_18 = arith.constant 0 : index
    %c0_19 = arith.constant 0 : index
    %38 = vector.load %arg3[%c5, %c0_18, %c0_19] : memref<9x128x128xbf16, #tpu.memory_space<vmem>>, vector<1x128x128xbf16>
    %39 = vector.shape_cast %38 : vector<1x128x128xbf16> to vector<128x128xbf16>
    %cst_20 = arith.constant dense<0.000000e+00> : vector<64x128xf32>
    %40 = tpu.matmul %37, %39, %cst_20 {dimension_numbers = #tpu.dot_dimension_numbers<[1], [0], [0], [1], [0, 0, 1, 1], [], []>} : vector<64x128xbf16>, vector<128x128xbf16>, vector<64x128xf32> -> vector<64x128xf32>
    %41 = arith.addf %35, %40 : vector<64x128xf32>
    %42 = vector.extract_strided_slice %4 {offsets = [1, 0, 0], sizes = [8, 8, 128], strides = [1, 1, 1]} : vector<9x9x512xbf16> to vector<8x8x128xbf16>
    %43 = vector.shape_cast %42 : vector<8x8x128xbf16> to vector<64x128xbf16>
    %c6 = arith.constant 6 : index
    %c0_21 = arith.constant 0 : index
    %c0_22 = arith.constant 0 : index
    %44 = vector.load %arg3[%c6, %c0_21, %c0_22] : memref<9x128x128xbf16, #tpu.memory_space<vmem>>, vector<1x128x128xbf16>
    %45 = vector.shape_cast %44 : vector<1x128x128xbf16> to vector<128x128xbf16>
    %cst_23 = arith.constant dense<0.000000e+00> : vector<64x128xf32>
    %46 = tpu.matmul %43, %45, %cst_23 {dimension_numbers = #tpu.dot_dimension_numbers<[1], [0], [0], [1], [0, 0, 1, 1], [], []>} : vector<64x128xbf16>, vector<128x128xbf16>, vector<64x128xf32> -> vector<64x128xf32>
    %47 = arith.addf %41, %46 : vector<64x128xf32>
    %48 = vector.extract_strided_slice %4 {offsets = [1, 0, 128], sizes = [8, 8, 128], strides = [1, 1, 1]} : vector<9x9x512xbf16> to vector<8x8x128xbf16>
    %49 = vector.shape_cast %48 : vector<8x8x128xbf16> to vector<64x128xbf16>
    %c7 = arith.constant 7 : index
    %c0_24 = arith.constant 0 : index
    %c0_25 = arith.constant 0 : index
    %50 = vector.load %arg3[%c7, %c0_24, %c0_25] : memref<9x128x128xbf16, #tpu.memory_space<vmem>>, vector<1x128x128xbf16>
    %51 = vector.shape_cast %50 : vector<1x128x128xbf16> to vector<128x128xbf16>
    %cst_26 = arith.constant dense<0.000000e+00> : vector<64x128xf32>
    %52 = tpu.matmul %49, %51, %cst_26 {dimension_numbers = #tpu.dot_dimension_numbers<[1], [0], [0], [1], [0, 0, 1, 1], [], []>} : vector<64x128xbf16>, vector<128x128xbf16>, vector<64x128xf32> -> vector<64x128xf32>
    %53 = arith.addf %47, %52 : vector<64x128xf32>
    %54 = vector.extract_strided_slice %4 {offsets = [1, 1, 0], sizes = [8, 8, 128], strides = [1, 1, 1]} : vector<9x9x512xbf16> to vector<8x8x128xbf16>
    %55 = vector.shape_cast %54 : vector<8x8x128xbf16> to vector<64x128xbf16>
    %c8 = arith.constant 8 : index
    %c0_27 = arith.constant 0 : index
    %c0_28 = arith.constant 0 : index
    %56 = vector.load %arg3[%c8, %c0_27, %c0_28] : memref<9x128x128xbf16, #tpu.memory_space<vmem>>, vector<1x128x128xbf16>
    %57 = vector.shape_cast %56 : vector<1x128x128xbf16> to vector<128x128xbf16>
    %cst_29 = arith.constant dense<0.000000e+00> : vector<64x128xf32>
    %58 = tpu.matmul %55, %57, %cst_29 {dimension_numbers = #tpu.dot_dimension_numbers<[1], [0], [0], [1], [0, 0, 1, 1], [], []>} : vector<64x128xbf16>, vector<128x128xbf16>, vector<64x128xf32> -> vector<64x128xf32>
    %59 = arith.addf %53, %58 : vector<64x128xf32>
    %c0_30 = arith.constant 0 : index
    %c0_31 = arith.constant 0 : index
    %60 = vector.load %arg4[%c0_30, %c0_31] : memref<1x128xf32, #tpu.memory_space<vmem>>, vector<1x128xf32>
    %61 = vector.broadcast %60 : vector<1x128xf32> to vector<64x128xf32>
    %62 = arith.addf %59, %61 : vector<64x128xf32>
    %cst_32 = arith.constant 0.000000e+00 : f32
    %cst_33 = arith.constant 6.000000e+00 : f32
    %63 = vector.broadcast %cst_32 : f32 to vector<64x128xf32>
    %64 = arith.maximumf %63, %62 : vector<64x128xf32>
    %65 = vector.broadcast %cst_33 : f32 to vector<64x128xf32>
    %66 = arith.minimumf %65, %64 : vector<64x128xf32>
    %67 = vector.shape_cast %66 : vector<64x128xf32> to vector<1x8x8x128xf32>
    %68 = arith.truncf %67 : vector<1x8x8x128xf32> to vector<1x8x8x128xbf16>
    %c0_34 = arith.constant 0 : index
    %c0_35 = arith.constant 0 : index
    %c0_36 = arith.constant 0 : index
    %c0_37 = arith.constant 0 : index
    %69 = vector.load %arg5[%c0_34, %c0_35, %c0_36, %c0_37] : memref<1x8x8x128xbf16, #tpu.memory_space<vmem>>, vector<1x8x8x128xbf16>
    tpu.vector_store %arg5[%c0_34, %c0_35, %c0_36, %c0_37], %68 {strides = array<i32>} : memref<1x8x8x128xbf16, #tpu.memory_space<vmem>>, vector<1x8x8x128xbf16>,
    return
  }
  func.func @transform_0(%arg0: i32, %arg1: i32) -> (i32, i32, i32, i32) {
    %c0_i32 = arith.constant 0 : i32
    %c0_i32_0 = arith.constant 0 : i32
    %c0_i32_1 = arith.constant 0 : i32
    %c0_i32_2 = arith.constant 0 : i32
    return %arg0, %c0_i32, %c0_i32_0, %c0_i32_1 : i32, i32, i32, i32
  }
  func.func @transform_1(%arg0: i32, %arg1: i32) -> (i32, i32, i32) {
    %c0_i32 = arith.constant 0 : i32
    %c0_i32_0 = arith.constant 0 : i32
    %c0_i32_1 = arith.constant 0 : i32
    %c0_i32_2 = arith.constant 0 : i32
    return %c0_i32, %c0_i32_0, %c0_i32_1 : i32, i32, i32
  }
  func.func @transform_2(%arg0: i32, %arg1: i32) -> (i32, i32) {
    %c0_i32 = arith.constant 0 : i32
    %c0_i32_0 = arith.constant 0 : i32
    %c0_i32_1 = arith.constant 0 : i32
    return %c0_i32, %c0_i32_0 : i32, i32
  }
  func.func @transform_3(%arg0: i32, %arg1: i32) -> (i32, i32, i32, i32) {
    %c0_i32 = arith.constant 0 : i32
    %c0_i32_0 = arith.constant 0 : i32
    %c0_i32_1 = arith.constant 0 : i32
    return %arg0, %arg1, %c0_i32, %c0_i32_0 : i32, i32, i32, i32
  }
}

module attributes {stable_mosaic.version = 11 : i64} {
  func.func @_conv_bn_kernel(%arg0: i32, %arg1: i32, %arg2: memref<1x10x10x128xbf16, #tpu.memory_space<vmem>>, %arg3: memref<9x128x128xbf16, #tpu.memory_space<vmem>>, %arg4: memref<1x128xf32, #tpu.memory_space<vmem>>, %arg5: memref<1x9x9x512xbf16, #tpu.memory_space<vmem>>, %arg6: memref<128x128xbf16, #tpu.memory_space<vmem>>, %arg7: memref<1x128xf32, #tpu.memory_space<vmem>>, %arg8: memref<1x8x8x128xf32, #tpu.memory_space<vmem>>) attributes {dimension_semantics = [#tpu.dimension_semantics<parallel>, #tpu.dimension_semantics<parallel>], iteration_bounds = array<i64: 2, 1>, scalar_prefetch = 0 : i64, scratch_operands = 0 : i64, tpu.core_type = #tpu.core_type<tc>, window_params = [{transform_indices = @transform_0, window_bounds = array<i64: 1, 10, 10, 128>}, {pipeline_mode = #tpu.pipeline_mode<synchronous>, transform_indices = @transform_1, window_bounds = array<i64: 9, 128, 128>}, {pipeline_mode = #tpu.pipeline_mode<synchronous>, transform_indices = @transform_2, window_bounds = array<i64: 1, 128>}, {transform_indices = @transform_3, window_bounds = array<i64: 1, 9, 9, 512>}, {pipeline_mode = #tpu.pipeline_mode<synchronous>, transform_indices = @transform_4, window_bounds = array<i64: 128, 128>}, {pipeline_mode = #tpu.pipeline_mode<synchronous>, transform_indices = @transform_5, window_bounds = array<i64: 1, 128>}, {transform_indices = @transform_6, window_bounds = array<i64: 1, 8, 8, 128>}]} {
    %c8_i32 = arith.constant 8 : i32
    %0 = arith.muli %arg1, %c8_i32 : i32
    %1 = tpu.assume_multiple %0, 8 : i32
    %c0 = arith.constant 0 : index
    %2 = arith.index_cast %1 : i32 to index
    %c0_0 = arith.constant 0 : index
    %c0_1 = arith.constant 0 : index
    %3 = vector.load %arg2[%c0, %2, %c0_0, %c0_1] : memref<1x10x10x128xbf16, #tpu.memory_space<vmem>>, vector<1x10x10x128xbf16>
    %4 = vector.shape_cast %3 : vector<1x10x10x128xbf16> to vector<10x10x128xbf16>
    %cst = arith.constant 0.000000e+00 : f32
    %5 = vector.broadcast %cst : f32 to vector<64x128xf32>
    %6 = vector.extract_strided_slice %4 {offsets = [0, 0, 0], sizes = [8, 8, 128], strides = [1, 1, 1]} : vector<10x10x128xbf16> to vector<8x8x128xbf16>
    %7 = vector.shape_cast %6 : vector<8x8x128xbf16> to vector<64x128xbf16>
    %c0_2 = arith.constant 0 : index
    %c0_3 = arith.constant 0 : index
    %c0_4 = arith.constant 0 : index
    %8 = vector.load %arg3[%c0_2, %c0_3, %c0_4] : memref<9x128x128xbf16, #tpu.memory_space<vmem>>, vector<1x128x128xbf16>
    %9 = vector.shape_cast %8 : vector<1x128x128xbf16> to vector<128x128xbf16>
    %cst_5 = arith.constant dense<0.000000e+00> : vector<64x128xf32>
    %10 = tpu.matmul %7, %9, %cst_5 {dimension_numbers = #tpu.dot_dimension_numbers<[1], [0], [0], [1], [0, 0, 1, 1], [], []>} : vector<64x128xbf16>, vector<128x128xbf16>, vector<64x128xf32> -> vector<64x128xf32>
    %11 = arith.addf %5, %10 : vector<64x128xf32>
    %12 = vector.extract_strided_slice %4 {offsets = [0, 1, 0], sizes = [8, 8, 128], strides = [1, 1, 1]} : vector<10x10x128xbf16> to vector<8x8x128xbf16>
    %13 = vector.shape_cast %12 : vector<8x8x128xbf16> to vector<64x128xbf16>
    %c1 = arith.constant 1 : index
    %c0_6 = arith.constant 0 : index
    %c0_7 = arith.constant 0 : index
    %14 = vector.load %arg3[%c1, %c0_6, %c0_7] : memref<9x128x128xbf16, #tpu.memory_space<vmem>>, vector<1x128x128xbf16>
    %15 = vector.shape_cast %14 : vector<1x128x128xbf16> to vector<128x128xbf16>
    %cst_8 = arith.constant dense<0.000000e+00> : vector<64x128xf32>
    %16 = tpu.matmul %13, %15, %cst_8 {dimension_numbers = #tpu.dot_dimension_numbers<[1], [0], [0], [1], [0, 0, 1, 1], [], []>} : vector<64x128xbf16>, vector<128x128xbf16>, vector<64x128xf32> -> vector<64x128xf32>
    %17 = arith.addf %11, %16 : vector<64x128xf32>
    %18 = vector.extract_strided_slice %4 {offsets = [0, 2, 0], sizes = [8, 8, 128], strides = [1, 1, 1]} : vector<10x10x128xbf16> to vector<8x8x128xbf16>
    %19 = vector.shape_cast %18 : vector<8x8x128xbf16> to vector<64x128xbf16>
    %c2 = arith.constant 2 : index
    %c0_9 = arith.constant 0 : index
    %c0_10 = arith.constant 0 : index
    %20 = vector.load %arg3[%c2, %c0_9, %c0_10] : memref<9x128x128xbf16, #tpu.memory_space<vmem>>, vector<1x128x128xbf16>
    %21 = vector.shape_cast %20 : vector<1x128x128xbf16> to vector<128x128xbf16>
    %cst_11 = arith.constant dense<0.000000e+00> : vector<64x128xf32>
    %22 = tpu.matmul %19, %21, %cst_11 {dimension_numbers = #tpu.dot_dimension_numbers<[1], [0], [0], [1], [0, 0, 1, 1], [], []>} : vector<64x128xbf16>, vector<128x128xbf16>, vector<64x128xf32> -> vector<64x128xf32>
    %23 = arith.addf %17, %22 : vector<64x128xf32>
    %24 = vector.extract_strided_slice %4 {offsets = [1, 0, 0], sizes = [8, 8, 128], strides = [1, 1, 1]} : vector<10x10x128xbf16> to vector<8x8x128xbf16>
    %25 = vector.shape_cast %24 : vector<8x8x128xbf16> to vector<64x128xbf16>
    %c3 = arith.constant 3 : index
    %c0_12 = arith.constant 0 : index
    %c0_13 = arith.constant 0 : index
    %26 = vector.load %arg3[%c3, %c0_12, %c0_13] : memref<9x128x128xbf16, #tpu.memory_space<vmem>>, vector<1x128x128xbf16>
    %27 = vector.shape_cast %26 : vector<1x128x128xbf16> to vector<128x128xbf16>
    %cst_14 = arith.constant dense<0.000000e+00> : vector<64x128xf32>
    %28 = tpu.matmul %25, %27, %cst_14 {dimension_numbers = #tpu.dot_dimension_numbers<[1], [0], [0], [1], [0, 0, 1, 1], [], []>} : vector<64x128xbf16>, vector<128x128xbf16>, vector<64x128xf32> -> vector<64x128xf32>
    %29 = arith.addf %23, %28 : vector<64x128xf32>
    %30 = vector.extract_strided_slice %4 {offsets = [1, 1, 0], sizes = [8, 8, 128], strides = [1, 1, 1]} : vector<10x10x128xbf16> to vector<8x8x128xbf16>
    %31 = vector.shape_cast %30 : vector<8x8x128xbf16> to vector<64x128xbf16>
    %c4 = arith.constant 4 : index
    %c0_15 = arith.constant 0 : index
    %c0_16 = arith.constant 0 : index
    %32 = vector.load %arg3[%c4, %c0_15, %c0_16] : memref<9x128x128xbf16, #tpu.memory_space<vmem>>, vector<1x128x128xbf16>
    %33 = vector.shape_cast %32 : vector<1x128x128xbf16> to vector<128x128xbf16>
    %cst_17 = arith.constant dense<0.000000e+00> : vector<64x128xf32>
    %34 = tpu.matmul %31, %33, %cst_17 {dimension_numbers = #tpu.dot_dimension_numbers<[1], [0], [0], [1], [0, 0, 1, 1], [], []>} : vector<64x128xbf16>, vector<128x128xbf16>, vector<64x128xf32> -> vector<64x128xf32>
    %35 = arith.addf %29, %34 : vector<64x128xf32>
    %36 = vector.extract_strided_slice %4 {offsets = [1, 2, 0], sizes = [8, 8, 128], strides = [1, 1, 1]} : vector<10x10x128xbf16> to vector<8x8x128xbf16>
    %37 = vector.shape_cast %36 : vector<8x8x128xbf16> to vector<64x128xbf16>
    %c5 = arith.constant 5 : index
    %c0_18 = arith.constant 0 : index
    %c0_19 = arith.constant 0 : index
    %38 = vector.load %arg3[%c5, %c0_18, %c0_19] : memref<9x128x128xbf16, #tpu.memory_space<vmem>>, vector<1x128x128xbf16>
    %39 = vector.shape_cast %38 : vector<1x128x128xbf16> to vector<128x128xbf16>
    %cst_20 = arith.constant dense<0.000000e+00> : vector<64x128xf32>
    %40 = tpu.matmul %37, %39, %cst_20 {dimension_numbers = #tpu.dot_dimension_numbers<[1], [0], [0], [1], [0, 0, 1, 1], [], []>} : vector<64x128xbf16>, vector<128x128xbf16>, vector<64x128xf32> -> vector<64x128xf32>
    %41 = arith.addf %35, %40 : vector<64x128xf32>
    %42 = vector.extract_strided_slice %4 {offsets = [2, 0, 0], sizes = [8, 8, 128], strides = [1, 1, 1]} : vector<10x10x128xbf16> to vector<8x8x128xbf16>
    %43 = vector.shape_cast %42 : vector<8x8x128xbf16> to vector<64x128xbf16>
    %c6 = arith.constant 6 : index
    %c0_21 = arith.constant 0 : index
    %c0_22 = arith.constant 0 : index
    %44 = vector.load %arg3[%c6, %c0_21, %c0_22] : memref<9x128x128xbf16, #tpu.memory_space<vmem>>, vector<1x128x128xbf16>
    %45 = vector.shape_cast %44 : vector<1x128x128xbf16> to vector<128x128xbf16>
    %cst_23 = arith.constant dense<0.000000e+00> : vector<64x128xf32>
    %46 = tpu.matmul %43, %45, %cst_23 {dimension_numbers = #tpu.dot_dimension_numbers<[1], [0], [0], [1], [0, 0, 1, 1], [], []>} : vector<64x128xbf16>, vector<128x128xbf16>, vector<64x128xf32> -> vector<64x128xf32>
    %47 = arith.addf %41, %46 : vector<64x128xf32>
    %48 = vector.extract_strided_slice %4 {offsets = [2, 1, 0], sizes = [8, 8, 128], strides = [1, 1, 1]} : vector<10x10x128xbf16> to vector<8x8x128xbf16>
    %49 = vector.shape_cast %48 : vector<8x8x128xbf16> to vector<64x128xbf16>
    %c7 = arith.constant 7 : index
    %c0_24 = arith.constant 0 : index
    %c0_25 = arith.constant 0 : index
    %50 = vector.load %arg3[%c7, %c0_24, %c0_25] : memref<9x128x128xbf16, #tpu.memory_space<vmem>>, vector<1x128x128xbf16>
    %51 = vector.shape_cast %50 : vector<1x128x128xbf16> to vector<128x128xbf16>
    %cst_26 = arith.constant dense<0.000000e+00> : vector<64x128xf32>
    %52 = tpu.matmul %49, %51, %cst_26 {dimension_numbers = #tpu.dot_dimension_numbers<[1], [0], [0], [1], [0, 0, 1, 1], [], []>} : vector<64x128xbf16>, vector<128x128xbf16>, vector<64x128xf32> -> vector<64x128xf32>
    %53 = arith.addf %47, %52 : vector<64x128xf32>
    %54 = vector.extract_strided_slice %4 {offsets = [2, 2, 0], sizes = [8, 8, 128], strides = [1, 1, 1]} : vector<10x10x128xbf16> to vector<8x8x128xbf16>
    %55 = vector.shape_cast %54 : vector<8x8x128xbf16> to vector<64x128xbf16>
    %c8 = arith.constant 8 : index
    %c0_27 = arith.constant 0 : index
    %c0_28 = arith.constant 0 : index
    %56 = vector.load %arg3[%c8, %c0_27, %c0_28] : memref<9x128x128xbf16, #tpu.memory_space<vmem>>, vector<1x128x128xbf16>
    %57 = vector.shape_cast %56 : vector<1x128x128xbf16> to vector<128x128xbf16>
    %cst_29 = arith.constant dense<0.000000e+00> : vector<64x128xf32>
    %58 = tpu.matmul %55, %57, %cst_29 {dimension_numbers = #tpu.dot_dimension_numbers<[1], [0], [0], [1], [0, 0, 1, 1], [], []>} : vector<64x128xbf16>, vector<128x128xbf16>, vector<64x128xf32> -> vector<64x128xf32>
    %59 = arith.addf %53, %58 : vector<64x128xf32>
    %c0_30 = arith.constant 0 : index
    %c0_31 = arith.constant 0 : index
    %60 = vector.load %arg4[%c0_30, %c0_31] : memref<1x128xf32, #tpu.memory_space<vmem>>, vector<1x128xf32>
    %61 = vector.broadcast %60 : vector<1x128xf32> to vector<64x128xf32>
    %62 = arith.addf %59, %61 : vector<64x128xf32>
    %c0_i32 = arith.constant 0 : i32
    %63 = arith.addi %1, %c0_i32 : i32
    %c0_32 = arith.constant 0 : index
    %64 = arith.index_cast %63 : i32 to index
    %c0_33 = arith.constant 0 : index
    %c0_34 = arith.constant 0 : index
    %65 = vector.load %arg5[%c0_32, %64, %c0_33, %c0_34] : memref<1x9x9x512xbf16, #tpu.memory_space<vmem>>, vector<1x8x9x512xbf16>
    %66 = vector.shape_cast %65 : vector<1x8x9x512xbf16> to vector<8x9x512xbf16>
    %67 = vector.extract_strided_slice %66 {offsets = [0, 0, 384], sizes = [8, 8, 128], strides = [1, 1, 1]} : vector<8x9x512xbf16> to vector<8x8x128xbf16>
    %68 = vector.shape_cast %67 : vector<8x8x128xbf16> to vector<64x128xbf16>
    %c0_35 = arith.constant 0 : index
    %c0_36 = arith.constant 0 : index
    %69 = vector.load %arg6[%c0_35, %c0_36] : memref<128x128xbf16, #tpu.memory_space<vmem>>, vector<128x128xbf16>
    %cst_37 = arith.constant dense<0.000000e+00> : vector<64x128xf32>
    %70 = tpu.matmul %68, %69, %cst_37 {dimension_numbers = #tpu.dot_dimension_numbers<[1], [0], [0], [1], [0, 0, 1, 1], [], []>} : vector<64x128xbf16>, vector<128x128xbf16>, vector<64x128xf32> -> vector<64x128xf32>
    %c0_38 = arith.constant 0 : index
    %c0_39 = arith.constant 0 : index
    %71 = vector.load %arg7[%c0_38, %c0_39] : memref<1x128xf32, #tpu.memory_space<vmem>>, vector<1x128xf32>
    %72 = vector.broadcast %71 : vector<1x128xf32> to vector<64x128xf32>
    %73 = arith.addf %70, %72 : vector<64x128xf32>
    %74 = arith.addf %62, %73 : vector<64x128xf32>
    %cst_40 = arith.constant 0.000000e+00 : f32
    %cst_41 = arith.constant 6.000000e+00 : f32
    %75 = vector.broadcast %cst_40 : f32 to vector<64x128xf32>
    %76 = arith.maximumf %75, %74 : vector<64x128xf32>
    %77 = vector.broadcast %cst_41 : f32 to vector<64x128xf32>
    %78 = arith.minimumf %77, %76 : vector<64x128xf32>
    %79 = vector.shape_cast %78 : vector<64x128xf32> to vector<1x8x8x128xf32>
    %c0_42 = arith.constant 0 : index
    %c0_43 = arith.constant 0 : index
    %c0_44 = arith.constant 0 : index
    %c0_45 = arith.constant 0 : index
    %80 = vector.load %arg8[%c0_42, %c0_43, %c0_44, %c0_45] : memref<1x8x8x128xf32, #tpu.memory_space<vmem>>, vector<1x8x8x128xf32>
    tpu.vector_store %arg8[%c0_42, %c0_43, %c0_44, %c0_45], %79 {strides = array<i32>} : memref<1x8x8x128xf32, #tpu.memory_space<vmem>>, vector<1x8x8x128xf32>,
    return
  }
  func.func @transform_0(%arg0: i32, %arg1: i32) -> (i32, i32, i32, i32) {
    %c0_i32 = arith.constant 0 : i32
    %c0_i32_0 = arith.constant 0 : i32
    %c0_i32_1 = arith.constant 0 : i32
    %c0_i32_2 = arith.constant 0 : i32
    return %arg0, %c0_i32, %c0_i32_0, %c0_i32_1 : i32, i32, i32, i32
  }
  func.func @transform_1(%arg0: i32, %arg1: i32) -> (i32, i32, i32) {
    %c0_i32 = arith.constant 0 : i32
    %c0_i32_0 = arith.constant 0 : i32
    %c0_i32_1 = arith.constant 0 : i32
    %c0_i32_2 = arith.constant 0 : i32
    return %c0_i32, %c0_i32_0, %c0_i32_1 : i32, i32, i32
  }
  func.func @transform_2(%arg0: i32, %arg1: i32) -> (i32, i32) {
    %c0_i32 = arith.constant 0 : i32
    %c0_i32_0 = arith.constant 0 : i32
    %c0_i32_1 = arith.constant 0 : i32
    return %c0_i32, %c0_i32_0 : i32, i32
  }
  func.func @transform_3(%arg0: i32, %arg1: i32) -> (i32, i32, i32, i32) {
    %c0_i32 = arith.constant 0 : i32
    %c0_i32_0 = arith.constant 0 : i32
    %c0_i32_1 = arith.constant 0 : i32
    %c0_i32_2 = arith.constant 0 : i32
    return %arg0, %c0_i32, %c0_i32_0, %c0_i32_1 : i32, i32, i32, i32
  }
  func.func @transform_4(%arg0: i32, %arg1: i32) -> (i32, i32) {
    %c0_i32 = arith.constant 0 : i32
    %c0_i32_0 = arith.constant 0 : i32
    %c0_i32_1 = arith.constant 0 : i32
    return %c0_i32, %c0_i32_0 : i32, i32
  }
  func.func @transform_5(%arg0: i32, %arg1: i32) -> (i32, i32) {
    %c0_i32 = arith.constant 0 : i32
    %c0_i32_0 = arith.constant 0 : i32
    %c0_i32_1 = arith.constant 0 : i32
    return %c0_i32, %c0_i32_0 : i32, i32
  }
  func.func @transform_6(%arg0: i32, %arg1: i32) -> (i32, i32, i32, i32) {
    %c0_i32 = arith.constant 0 : i32
    %c0_i32_0 = arith.constant 0 : i32
    %c0_i32_1 = arith.constant 0 : i32
    return %arg0, %arg1, %c0_i32, %c0_i32_0 : i32, i32, i32, i32
  }
}

</mosaic_0001>

<llo_original>
// kernel: basic_block_forward.2
$region0: #{basic_block_forward.2}
  #allocation0 [shape = 'u32[]', space=smem, size = 0x4, offset = 0x4, fixed_abs, tag = 'smem constant byte address 0x4 - core index']
  #allocation1 [shape = 'u32[144,128]{1,0:T(1,128)}', space=vmem, size = 0x12000, scoped, tag = 'internal scratch']
  %s0 = inlined_call_operand.vmem [shape: bf16[2,9,9,512], index: 0, kind: input, shape index: {}]
  %s1 = inlined_call_operand.vmem [shape: bf16[9,128,128], index: 1, kind: input, shape index: {}]
  %s2 = inlined_call_operand.vmem [shape: f32[1,128], index: 2, kind: input, shape index: {}]
  %s3 = inlined_call_operand.vmem [shape: bf16[2,8,8,128], index: 3, kind: output, shape index: {}]
  %s4 = sld [smem:[#allocation0]]
  $region45: #{basic_block_forward.2} parent=0
    _
  %s6 = ssub.s32 1, %s4
  %s7 = scalar_select 0, %s6, %s4
  loop: start=0, step=1, limit=4
  $region2: #{basic_block_forward.2} parent=0 // loop_pre_header
    _
  $region3: #{basic_block_forward.2} parent=0 // loop_header
    %s9 = sphi 0, %s13
    %p10 = scmp.ge.s32.totalorder %s9, 4
    %s16 = sphi 0, %s28
    %s17 = sphi 0, %s24
    %s18 = sphi 0, %s16
    %s19 = sphi 0, %s17
    %s20 = sphi 0, %s18
    %s21 = sphi 0, %s19
    %s31 = sphi 0, %s33
    %s34 = sphi 0, %s31
    %s35 = sphi 0, %s34
    %s51 = sphi 0, %s35
    %s55 = sphi 0, %s55
    %s57 = sphi 0, %s55
    %s58 = sphi 0, %s57
    %s72 = sphi 0, %s58
    %s76 = sphi 0, %s76
    %s78 = sphi 0, %s76
    %s79 = sphi 0, %s78
    %s93 = sphi 0, %s79
    %s101 = sphi 0, %s103
    %s104 = sphi 0, %s101
    %s105 = sphi 0, %s104
    %s121 = sphi 0, %s105
  $region4: #{basic_block_forward.2} parent=0 // loop_header_branch
    %12 = sbr.rel (%p10) target = $region8
  $region5: #{basic_block_forward.2} parent=0 // loop_body
    %s14 = ssub.s32 %s9, 1
    %s15 = ssub.s32 %s9, 2
    %s22 = sadd.s32 1, %s17
    %p23 = scmp.ge.s32.totalorder %s22, 1
    %s24 = scalar_select %p23, 0, %s22
    %s25 = sadd.s32 1, %s16
    %s26 = scalar_select %p23, %s25, %s16
    %p27 = scmp.ge.s32.totalorder %s26, 2
    %s28 = scalar_select %p27, 0, %s26
    %s29 = ssub.s32 %s16, %s28
    %p30 = scmp.eq.s32.totalorder %s29, 0
    %s32 = sadd.s32 %s31, 1
    %s33 = scalar_select %p30, %s31, %s32
    %p36 = pneg %p30
    %p37 = scmp.eq.s32.totalorder %s9, 1
    %p38 = por %p36, %p37
    %p39 = scmp.ne.s32.totalorder %s31, %s34
    %p40 = scmp.eq.s32.totalorder %s9, 0
    %p41 = por %p39, %p40
    %p42 = scmp.ne.s32.totalorder %s31, %s34
    %p43 = scmp.eq.s32.totalorder %s14, 1
    %p44 = por %p42, %p43
    %p45 = scmp.ne.s32.totalorder %s34, %s35
    %p46 = scmp.eq.s32.totalorder %s14, 0
    %p47 = por %p45, %p46
    %p48 = scmp.ne.s32.totalorder %s34, %s35
    %p49 = scmp.eq.s32.totalorder %s15, 1
    %p50 = por %p48, %p49
    %p52 = scmp.ne.s32.totalorder %s35, %s51
    %p53 = scmp.eq.s32.totalorder %s15, 0
    %p54 = por %p52, %p53
    %s56 = sadd.s32 %s55, 1
    %p59 = scmp.eq.s32.totalorder %s9, 1
    %p60 = scmp.ne.s32.totalorder %s55, %s57
    %p61 = scmp.eq.s32.totalorder %s9, 0
    %p62 = por %p60, %p61
    %p63 = scmp.ne.s32.totalorder %s55, %s57
    %p64 = scmp.eq.s32.totalorder %s14, 1
    %p65 = por %p63, %p64
    %p66 = scmp.ne.s32.totalorder %s57, %s58
    %p67 = scmp.eq.s32.totalorder %s14, 0
    %p68 = por %p66, %p67
    %p69 = scmp.ne.s32.totalorder %s57, %s58
    %p70 = scmp.eq.s32.totalorder %s15, 1
    %p71 = por %p69, %p70
    %p73 = scmp.ne.s32.totalorder %s58, %s72
    %p74 = scmp.eq.s32.totalorder %s15, 0
    %p75 = por %p73, %p74
    %s77 = sadd.s32 %s76, 1
    %p80 = scmp.eq.s32.totalorder %s9, 1
    %p81 = scmp.ne.s32.totalorder %s76, %s78
    %p82 = scmp.eq.s32.totalorder %s9, 0
    %p83 = por %p81, %p82
    %p84 = scmp.ne.s32.totalorder %s76, %s78
    %p85 = scmp.eq.s32.totalorder %s14, 1
    %p86 = por %p84, %p85
    %p87 = scmp.ne.s32.totalorder %s78, %s79
    %p88 = scmp.eq.s32.totalorder %s14, 0
    %p89 = por %p87, %p88
    %p90 = scmp.ne.s32.totalorder %s78, %s79
    %p91 = scmp.eq.s32.totalorder %s15, 1
    %p92 = por %p90, %p91
    %p94 = scmp.ne.s32.totalorder %s79, %s93
    %p95 = scmp.eq.s32.totalorder %s15, 0
    %p96 = por %p94, %p95
    %s97 = ssub.s32 %s16, %s28
    %s98 = ssub.s32 %s17, %s24
    %s99 = sor.u32 %s97, %s98
    %p100 = scmp.eq.s32.totalorder %s99, 0
    %s102 = sadd.s32 %s101, 1
    %s103 = scalar_select %p100, %s101, %s102
    %p106 = pneg %p100
    %p107 = scmp.eq.s32.totalorder %s9, 1
    %p108 = por %p106, %p107
    %p109 = scmp.ne.s32.totalorder %s101, %s104
    %p110 = scmp.eq.s32.totalorder %s9, 0
    %p111 = por %p109, %p110
    %p112 = scmp.ne.s32.totalorder %s101, %s104
    %p113 = scmp.eq.s32.totalorder %s14, 1
    %p114 = por %p112, %p113
    %p115 = scmp.ne.s32.totalorder %s104, %s105
    %p116 = scmp.eq.s32.totalorder %s14, 0
    %p117 = por %p115, %p116
    %p118 = scmp.ne.s32.totalorder %s104, %s105
    %p119 = scmp.eq.s32.totalorder %s15, 1
    %p120 = por %p118, %p119
    %p122 = scmp.ne.s32.totalorder %s105, %s121
    %p123 = scmp.eq.s32.totalorder %s15, 0
    %p124 = por %p122, %p123
    %p125 = scmp.le.s32.totalorder 1, %s9
    %p126 = scmp.lt.s32.totalorder %s9, 3
    %p127 = pnand %p125, %p126
    %p128 = pneg %p127
    // Predicated region
    $region9: #{basic_block_forward.2} parent=5 // pred_check
      _
    $region10: #{basic_block_forward.2} parent=5 // pred_check_branch
      %130 = sbr.rel (%p127) target = $region12
    $region11: #{basic_block_forward.2} parent=5 // pred_region
      %s131 = ssub.s32 %s9, 1
      // Predicated region
      $region13: #{basic_block_forward.2} parent=11 // pred_check
        %p132 = pneg %p68
      $region14: #{basic_block_forward.2} parent=11 // pred_check_branch
        %134 = sbr.rel (%p132) target = $region16
      $region15: #{basic_block_forward.2} parent=11 // pred_region
        _
      $region16: #{basic_block_forward.2} parent=11 // pred_fallthru
        _
      // Predicated region
      $region17: #{basic_block_forward.2} parent=11 // pred_check
        %p135 = pneg %p89
      $region18: #{basic_block_forward.2} parent=11 // pred_check_branch
        %137 = sbr.rel (%p135) target = $region20
      $region19: #{basic_block_forward.2} parent=11 // pred_region
        _
      $region20: #{basic_block_forward.2} parent=11 // pred_fallthru
        _
    $region12: #{basic_block_forward.2} parent=5 // pred_fallthru
      _
    %p138 = scmp.lt.s32.totalorder %s9, 2
    // Predicated region
    $region21: #{basic_block_forward.2} parent=5 // pred_check
      %p139 = pneg %p138
    $region22: #{basic_block_forward.2} parent=5 // pred_check_branch
      %141 = sbr.rel (%p139) target = $region24
    $region23: #{basic_block_forward.2} parent=5 // pred_region
      // Predicated region
      $region25: #{basic_block_forward.2} parent=23 // pred_check
        %p142 = pneg %p41
      $region26: #{basic_block_forward.2} parent=23 // pred_check_branch
        %144 = sbr.rel (%p142) target = $region28
      $region27: #{basic_block_forward.2} parent=23 // pred_region
        %p145 = scmp.lt.s32.totalorder %s16, 1
        %s146 = scalar_select %p145, %s16, 1
        %s147 = smul.addr %s146, 72
        %s148 = smul.addr %s147, 4
        %s149 = scalar_lea.vmem %s0, %s148
      $region28: #{basic_block_forward.2} parent=23 // pred_fallthru
        _
    $region24: #{basic_block_forward.2} parent=5 // pred_fallthru
      _
    %p150 = scmp.le.s32.totalorder 1, %s9
    %p151 = scmp.lt.s32.totalorder %s9, 3
    %p152 = pnand %p150, %p151
    %p153 = pneg %p152
    // Predicated region
    $region29: #{basic_block_forward.2} parent=5 // pred_check
      _
    $region30: #{basic_block_forward.2} parent=5 // pred_check_branch
      %155 = sbr.rel (%p152) target = $region32
    $region31: #{basic_block_forward.2} parent=5 // pred_region
      %s156 = ssub.s32 %s9, 1
      %p157 = scmp.lt.s32.totalorder %s18, 1
      %s158 = scalar_select %p157, %s18, 1
      %s159 = smul.addr %s158, 72
      %s160 = smul.addr %s159, 4
      %s161 = scalar_lea.vmem %s0, %s160
      %p162 = pneg %p47
      %p163 = pneg %p44
      %p164 = pneg %p68
      %p165 = pneg %p65
      %p166 = pneg %p89
      %p167 = pneg %p86
      %p168 = pneg %p117
      %p169 = pneg %p114
      %s170 = smul.u32 8, %s19
      %p171 = scmp.lt.s32.totalorder %s18, 1
      %s172 = scalar_select %p171, %s18, 1
      %p173 = scmp.lt.s32.totalorder %s170, 7
      %s174 = scalar_select %p173, %s170, 7
      %s175 = smul.addr %s172, 8
      %s176 = sadd.s32 %s174, %s175
      %s177 = smul.addr %s176, 4
      %s178 = scalar_lea.vmem %s3, %s177
      %p179 = scmp.lt.s32.totalorder %s18, 1
      %s180 = scalar_select %p179, %s18, 1
      %s181 = smul.addr %s180, 72
      %s182 = smul.addr %s181, 4
      %s183 = scalar_lea.vmem %s0, %s182
      %s184 = smul.u32 8, %s19
      %p185 = scmp.lt.s32.totalorder %s18, 1
      %s186 = scalar_select %p185, %s18, 1
      %p187 = scmp.lt.s32.totalorder %s184, 7
      %s188 = scalar_select %p187, %s184, 7
      %s189 = smul.addr %s186, 8
      %s190 = sadd.s32 %s188, %s189
      %s191 = smul.addr %s190, 4
      %s192 = scalar_lea.vmem %s3, %s191
      %s193 = smul.u32 8, %s19
      %s195 = smul.u32 %s19, 8
      %s196 = smul.u32 %s195, 8
      %s197 = smul.addr %s196, 4
      %s198 = scalar_lea.vmem %s183, %s197
      %v199 = vld [vmem:[%s198] sm:$0xff]
      %v200 = vld [vmem:[%s198 + $0x8] sm:$0xff]
      %v201 = vld [vmem:[%s198 + $0x10] sm:$0x11]
      %v202 = vld [vmem:[%s198 + $0x18] sm:$0x11]
      %v203 = vld [vmem:[%s198 + $0x20] sm:$0xff]
      %v204 = vld [vmem:[%s198 + $0x28] sm:$0xff]
      %v205 = vld [vmem:[%s198 + $0x30] sm:$0x11]
      %v206 = vld [vmem:[%s198 + $0x38] sm:$0x11]
      %v207 = vld [vmem:[%s198 + $0x40] sm:$0xff]
      %v208 = vld [vmem:[%s198 + $0x48] sm:$0xff]
      %v209 = vld [vmem:[%s198 + $0x50] sm:$0x11]
      %v210 = vld [vmem:[%s198 + $0x58] sm:$0x11]
      %v211 = vld [vmem:[%s198 + $0x60] sm:$0xff]
      %v212 = vld [vmem:[%s198 + $0x68] sm:$0xff]
      %v213 = vld [vmem:[%s198 + $0x70] sm:$0x11]
      %v214 = vld [vmem:[%s198 + $0x78] sm:$0x11]
      %v215 = vld [vmem:[%s198 + $0x80] sm:$0xff]
      %v216 = vld [vmem:[%s198 + $0x88] sm:$0xff]
      %v217 = vld [vmem:[%s198 + $0x90] sm:$0x11]
      %v218 = vld [vmem:[%s198 + $0x98] sm:$0x11]
      %v219 = vld [vmem:[%s198 + $0xa0] sm:$0xff]
      %v220 = vld [vmem:[%s198 + $0xa8] sm:$0xff]
      %v221 = vld [vmem:[%s198 + $0xb0] sm:$0x11]
      %v222 = vld [vmem:[%s198 + $0xb8] sm:$0x11]
      %v223 = vld [vmem:[%s198 + $0xc0] sm:$0xff]
      %v224 = vld [vmem:[%s198 + $0xc8] sm:$0xff]
      %v225 = vld [vmem:[%s198 + $0xd0] sm:$0x11]
      %v226 = vld [vmem:[%s198 + $0xd8] sm:$0x11]
      %v227 = vld [vmem:[%s198 + $0xe0] sm:$0xff]
      %v228 = vld [vmem:[%s198 + $0xe8] sm:$0xff]
      %v229 = vld [vmem:[%s198 + $0xf0] sm:$0x11]
      %v230 = vld [vmem:[%s198 + $0xf8] sm:$0x11]
      %v231 = vld [vmem:[%s198 + $0x100] sm:$0xff]
      %v232 = vld [vmem:[%s198 + $0x110] sm:$0x11]
      %v233 = vld [vmem:[%s1] sm:$0xf]
      %v234 = vld [vmem:[%s1 + $0x4] sm:$0xf]
      %v235 = vld [vmem:[%s1 + $0x8] sm:$0xf]
      %v236 = vld [vmem:[%s1 + $0xc] sm:$0xf]
      %v237 = vld [vmem:[%s1 + $0x10] sm:$0xf]
      %v238 = vld [vmem:[%s1 + $0x14] sm:$0xf]
      %v239 = vld [vmem:[%s1 + $0x18] sm:$0xf]
      %v240 = vld [vmem:[%s1 + $0x1c] sm:$0xf]
      %v241 = vld [vmem:[%s1 + $0x20] sm:$0xf]
      %v242 = vld [vmem:[%s1 + $0x24] sm:$0xf]
      %v243 = vld [vmem:[%s1 + $0x28] sm:$0xf]
      %v244 = vld [vmem:[%s1 + $0x2c] sm:$0xf]
      %v245 = vld [vmem:[%s1 + $0x30] sm:$0xf]
      %v246 = vld [vmem:[%s1 + $0x34] sm:$0xf]
      %v247 = vld [vmem:[%s1 + $0x38] sm:$0xf]
      %v248 = vld [vmem:[%s1 + $0x3c] sm:$0xf]
      %v257 = vrot.slane %v199, 4
      %v258 = vrot.slane %v203, 4
      %v259 = vrot.slane %v207, 4
      %v260 = vrot.slane %v211, 4
      %v261 = vrot.slane %v215, 4
      %v262 = vrot.slane %v219, 4
      %v263 = vrot.slane %v223, 4
      %v264 = vrot.slane %v227, 4
      %s265 = scalar_lea.vmem %s1, 64
      %v266 = vld [vmem:[%s265] sm:$0xf]
      %v267 = vld [vmem:[%s265 + $0x4] sm:$0xf]
      %v268 = vld [vmem:[%s265 + $0x8] sm:$0xf]
      %v269 = vld [vmem:[%s265 + $0xc] sm:$0xf]
      %v270 = vld [vmem:[%s265 + $0x10] sm:$0xf]
      %v271 = vld [vmem:[%s265 + $0x14] sm:$0xf]
      %v272 = vld [vmem:[%s265 + $0x18] sm:$0xf]
      %v273 = vld [vmem:[%s265 + $0x1c] sm:$0xf]
      %v274 = vld [vmem:[%s265 + $0x20] sm:$0xf]
      %v275 = vld [vmem:[%s265 + $0x24] sm:$0xf]
      %v276 = vld [vmem:[%s265 + $0x28] sm:$0xf]
      %v277 = vld [vmem:[%s265 + $0x2c] sm:$0xf]
      %v278 = vld [vmem:[%s265 + $0x30] sm:$0xf]
      %v279 = vld [vmem:[%s265 + $0x34] sm:$0xf]
      %v280 = vld [vmem:[%s265 + $0x38] sm:$0xf]
      %v281 = vld [vmem:[%s265 + $0x3c] sm:$0xf]
      %v282 = vunpack.c.l.b16 %v257
      %v283 = vunpack.c.l.b16 %v258
      %v284 = vunpack.c.l.b16 %v259
      %v285 = vunpack.c.l.b16 %v260
      %v286 = vunpack.c.l.b16 %v261
      %v287 = vunpack.c.l.b16 %v262
      %v288 = vunpack.c.l.b16 %v263
      %v289 = vunpack.c.l.b16 %v264
      %v290 = vpack.c.b16 %v283, %v282
      %v291 = vpack.c.b16 %v285, %v284
      %v292 = vpack.c.b16 %v287, %v286
      %v293 = vpack.c.b16 %v289, %v288
      %v314 = vunpack.c.l.b16 %v266
      %v315 = vunpack.c.l.b16 %v267
      %v316 = vunpack.c.l.b16 %v268
      %v317 = vunpack.c.l.b16 %v269
      %v318 = vunpack.c.l.b16 %v270
      %v319 = vunpack.c.l.b16 %v271
      %v320 = vunpack.c.l.b16 %v272
      %v321 = vunpack.c.l.b16 %v273
      %v322 = vunpack.c.l.b16 %v274
      %v323 = vunpack.c.l.b16 %v275
      %v324 = vunpack.c.l.b16 %v276
      %v325 = vunpack.c.l.b16 %v277
      %v326 = vunpack.c.l.b16 %v278
      %v327 = vunpack.c.l.b16 %v279
      %v328 = vunpack.c.l.b16 %v280
      %v329 = vunpack.c.l.b16 %v281
      %v330 = vpack.c.b16 %v315, %v314
      %v331 = vpack.c.b16 %v317, %v316
      %v332 = vpack.c.b16 %v319, %v318
      %v333 = vpack.c.b16 %v321, %v320
      %v334 = vpack.c.b16 %v323, %v322
      %v335 = vpack.c.b16 %v325, %v324
      %v336 = vpack.c.b16 %v327, %v326
      %v337 = vpack.c.b16 %v329, %v328
      %346 = vmatprep.subr.bf16.mxu0 0
      %347 = vmatpush1.bf16.msra.mxu0 %v337
      %348 = vmatprep.subr.bf16.mxu0 0
      %349 = vmatpush1.bf16.msra.mxu0 %v336
      %350 = vmatprep.subr.bf16.mxu0 0
      %351 = vmatpush1.bf16.msra.mxu0 %v335
      %352 = vmatprep.subr.bf16.mxu0 0
      %353 = vmatpush1.bf16.msra.mxu0 %v334
      %354 = vmatprep.subr.bf16.mxu0 0
      %355 = vmatpush1.bf16.msra.mxu0 %v333
      %356 = vmatprep.subr.bf16.mxu0 0
      %357 = vmatpush1.bf16.msra.mxu0 %v332
      %358 = vmatprep.subr.bf16.mxu0 0
      %359 = vmatpush1.bf16.msra.mxu0 %v331
      %360 = vmatprep.subr.bf16.mxu0 0
      %361 = vmatpush1.bf16.msra.mxu0 %v330
      %362 = vmatprep.subr.bf16.mxu0 0
      %363 = vmatpush2.bf16.msra.mxu0 0
      %364 = vmatprep.subr.bf16.mxu0 0
      %365 = vmatpush2.bf16.msra.mxu0 0
      %366 = vmatprep.subr.bf16.mxu0 0
      %367 = vmatpush2.bf16.msra.mxu0 0
      %368 = vmatprep.subr.bf16.mxu0 0
      %369 = vmatpush2.bf16.msra.mxu0 0
      %370 = vmatprep.subr.bf16.mxu0 0
      %371 = vmatpush2.bf16.msra.mxu0 0
      %372 = vmatprep.subr.bf16.mxu0 0
      %373 = vmatpush2.bf16.msra.mxu0 0
      %374 = vmatprep.subr.bf16.mxu0 0
      %375 = vmatpush2.bf16.msra.mxu0 0
      %376 = vmatprep.subr.bf16.mxu0 0
      %377 = vmatpush2.bf16.msra.mxu0 0
      %378 = vmatprep.mubr.bf16.mxu0 0
      %379 = vmatmul.mubr.bf16.gmra.mxu0 %v290
      %v380 = vpop.f32.mrf.mxu0
      %v381 = vadd.f32 0.0, %v380
      %v382 = vpop.f32.mrf.mxu0
      %v383 = vpop.f32.mrf.mxu0
      %v384 = vadd.f32 0.0, %v383
      %v385 = vpop.f32.mrf.mxu0
      %386 = vmatprep.mubr.bf16.mxu0 0
      %387 = vmatmul.mubr.bf16.gmra.mxu0 %v291
      %v388 = vpop.f32.mrf.mxu0
      %v389 = vadd.f32 0.0, %v388
      %v390 = vpop.f32.mrf.mxu0
      %v391 = vpop.f32.mrf.mxu0
      %v392 = vadd.f32 0.0, %v391
      %v393 = vpop.f32.mrf.mxu0
      %394 = vmatprep.mubr.bf16.mxu0 0
      %395 = vmatmul.mubr.bf16.gmra.mxu0 %v292
      %v396 = vpop.f32.mrf.mxu0
      %v397 = vadd.f32 0.0, %v396
      %v398 = vpop.f32.mrf.mxu0
      %v399 = vpop.f32.mrf.mxu0
      %v400 = vadd.f32 0.0, %v399
      %v401 = vpop.f32.mrf.mxu0
      %402 = vmatprep.mubr.bf16.mxu0 0
      %403 = vmatmul.mubr.bf16.gmra.mxu0 %v293
      %v404 = vpop.f32.mrf.mxu0
      %v405 = vadd.f32 0.0, %v404
      %v406 = vpop.f32.mrf.mxu0
      %v407 = vpop.f32.mrf.mxu0
      %v408 = vadd.f32 0.0, %v407
      %v409 = vpop.f32.mrf.mxu0
      %410 = vdwg.mxu0
      %v411 = vunpack.c.l.b16 %v199
      %v412 = vunpack.c.l.b16 %v203
      %v413 = vunpack.c.l.b16 %v207
      %v414 = vunpack.c.l.b16 %v211
      %v415 = vunpack.c.l.b16 %v215
      %v416 = vunpack.c.l.b16 %v219
      %v417 = vunpack.c.l.b16 %v223
      %v418 = vunpack.c.l.b16 %v227
      %v419 = vpack.c.b16 %v412, %v411
      %v420 = vpack.c.b16 %v414, %v413
      %v421 = vpack.c.b16 %v416, %v415
      %v422 = vpack.c.b16 %v418, %v417
      %v443 = vunpack.c.l.b16 %v233
      %v444 = vunpack.c.l.b16 %v234
      %v445 = vunpack.c.l.b16 %v235
      %v446 = vunpack.c.l.b16 %v236
      %v447 = vunpack.c.l.b16 %v237
      %v448 = vunpack.c.l.b16 %v238
      %v449 = vunpack.c.l.b16 %v239
      %v450 = vunpack.c.l.b16 %v240
      %v451 = vunpack.c.l.b16 %v241
      %v452 = vunpack.c.l.b16 %v242
      %v453 = vunpack.c.l.b16 %v243
      %v454 = vunpack.c.l.b16 %v244
      %v455 = vunpack.c.l.b16 %v245
      %v456 = vunpack.c.l.b16 %v246
      %v457 = vunpack.c.l.b16 %v247
      %v458 = vunpack.c.l.b16 %v248
      %v459 = vpack.c.b16 %v444, %v443
      %v460 = vpack.c.b16 %v446, %v445
      %v461 = vpack.c.b16 %v448, %v447
      %v462 = vpack.c.b16 %v450, %v449
      %v463 = vpack.c.b16 %v452, %v451
      %v464 = vpack.c.b16 %v454, %v453
      %v465 = vpack.c.b16 %v456, %v455
      %v466 = vpack.c.b16 %v458, %v457
      %475 = vmatprep.subr.bf16.mxu0 0
      %476 = vmatpush1.bf16.msra.mxu0 %v466
      %477 = vmatprep.subr.bf16.mxu0 0
      %478 = vmatpush1.bf16.msra.mxu0 %v465
      %479 = vmatprep.subr.bf16.mxu0 0
      %480 = vmatpush1.bf16.msra.mxu0 %v464
      %481 = vmatprep.subr.bf16.mxu0 0
      %482 = vmatpush1.bf16.msra.mxu0 %v463
      %483 = vmatprep.subr.bf16.mxu0 0
      %484 = vmatpush1.bf16.msra.mxu0 %v462
      %485 = vmatprep.subr.bf16.mxu0 0
      %486 = vmatpush1.bf16.msra.mxu0 %v461
      %487 = vmatprep.subr.bf16.mxu0 0
      %488 = vmatpush1.bf16.msra.mxu0 %v460
      %489 = vmatprep.subr.bf16.mxu0 0
      %490 = vmatpush1.bf16.msra.mxu0 %v459
      %491 = vmatprep.subr.bf16.mxu0 0
      %492 = vmatpush2.bf16.msra.mxu0 0
      %493 = vmatprep.subr.bf16.mxu0 0
      %494 = vmatpush2.bf16.msra.mxu0 0
      %495 = vmatprep.subr.bf16.mxu0 0
      %496 = vmatpush2.bf16.msra.mxu0 0
      %497 = vmatprep.subr.bf16.mxu0 0
      %498 = vmatpush2.bf16.msra.mxu0 0
      %499 = vmatprep.subr.bf16.mxu0 0
      %500 = vmatpush2.bf16.msra.mxu0 0
      %501 = vmatprep.subr.bf16.mxu0 0
      %502 = vmatpush2.bf16.msra.mxu0 0
      %503 = vmatprep.subr.bf16.mxu0 0
      %504 = vmatpush2.bf16.msra.mxu0 0
      %505 = vmatprep.subr.bf16.mxu0 0
      %506 = vmatpush2.bf16.msra.mxu0 0
      %507 = vmatprep.mubr.bf16.mxu0 0
      %508 = vmatmul.mubr.bf16.gmra.mxu0 %v419
      %v509 = vpop.f32.mrf.mxu0
      %v510 = vadd.f32 %v381, %v509
      %v511 = vpop.f32.mrf.mxu0
      %v512 = vpop.f32.mrf.mxu0
      %v513 = vadd.f32 %v384, %v512
      %v514 = vpop.f32.mrf.mxu0
      %515 = vmatprep.mubr.bf16.mxu0 0
      %516 = vmatmul.mubr.bf16.gmra.mxu0 %v420
      %v517 = vpop.f32.mrf.mxu0
      %v518 = vadd.f32 %v389, %v517
      %v519 = vpop.f32.mrf.mxu0
      %v520 = vpop.f32.mrf.mxu0
      %v521 = vadd.f32 %v392, %v520
      %v522 = vpop.f32.mrf.mxu0
      %523 = vmatprep.mubr.bf16.mxu0 0
      %524 = vmatmul.mubr.bf16.gmra.mxu0 %v421
      %v525 = vpop.f32.mrf.mxu0
      %v526 = vadd.f32 %v397, %v525
      %v527 = vpop.f32.mrf.mxu0
      %v528 = vpop.f32.mrf.mxu0
      %v529 = vadd.f32 %v400, %v528
      %v530 = vpop.f32.mrf.mxu0
      %531 = vmatprep.mubr.bf16.mxu0 0
      %532 = vmatmul.mubr.bf16.gmra.mxu0 %v422
      %v533 = vpop.f32.mrf.mxu0
      %v534 = vadd.f32 %v405, %v533
      %v535 = vpop.f32.mrf.mxu0
      %v536 = vpop.f32.mrf.mxu0
      %v537 = vadd.f32 %v408, %v536
      %v538 = vpop.f32.mrf.mxu0
      %539 = vdwg.mxu0
      %vm540 = vsmask.f32 3328
      %vm541 = vsmask.f32 7440
      %vm542 = vmor %vm540, %vm541
      %v544 = vshrl.u32 %v199, 16
      %v546 = vrot.slane %v544, 4
      %v547 = vshll.u32 %v199, 16
      %v549 = vrot.slane %v547, 5
      %v550 = vor.u32 %v546, %v549
      %v551 = vrot.slane %v550, 4
      %v553 = vshll.u32 %v201, 16
      %v555 = vrot.slane %v553, 5
      %v556 = vsel %vm542, %v551, %v555
      %v558 = vshrl.u32 %v203, 16
      %v560 = vrot.slane %v558, 4
      %v561 = vshll.u32 %v203, 16
      %v563 = vrot.slane %v561, 5
      %v564 = vor.u32 %v560, %v563
      %v565 = vrot.slane %v564, 4
      %v567 = vshll.u32 %v205, 16
      %v569 = vrot.slane %v567, 5
      %v570 = vsel %vm542, %v565, %v569
      %v572 = vshrl.u32 %v207, 16
      %v574 = vrot.slane %v572, 4
      %v575 = vshll.u32 %v207, 16
      %v577 = vrot.slane %v575, 5
      %v578 = vor.u32 %v574, %v577
      %v579 = vrot.slane %v578, 4
      %v581 = vshll.u32 %v209, 16
      %v583 = vrot.slane %v581, 5
      %v584 = vsel %vm542, %v579, %v583
      %v586 = vshrl.u32 %v211, 16
      %v588 = vrot.slane %v586, 4
      %v589 = vshll.u32 %v211, 16
      %v591 = vrot.slane %v589, 5
      %v592 = vor.u32 %v588, %v591
      %v593 = vrot.slane %v592, 4
      %v595 = vshll.u32 %v213, 16
      %v597 = vrot.slane %v595, 5
      %v598 = vsel %vm542, %v593, %v597
      %v600 = vshrl.u32 %v215, 16
      %v602 = vrot.slane %v600, 4
      %v603 = vshll.u32 %v215, 16
      %v605 = vrot.slane %v603, 5
      %v606 = vor.u32 %v602, %v605
      %v607 = vrot.slane %v606, 4
      %v609 = vshll.u32 %v217, 16
      %v611 = vrot.slane %v609, 5
      %v612 = vsel %vm542, %v607, %v611
      %v614 = vshrl.u32 %v219, 16
      %v616 = vrot.slane %v614, 4
      %v617 = vshll.u32 %v219, 16
      %v619 = vrot.slane %v617, 5
      %v620 = vor.u32 %v616, %v619
      %v621 = vrot.slane %v620, 4
      %v623 = vshll.u32 %v221, 16
      %v625 = vrot.slane %v623, 5
      %v626 = vsel %vm542, %v621, %v625
      %v628 = vshrl.u32 %v223, 16
      %v630 = vrot.slane %v628, 4
      %v631 = vshll.u32 %v223, 16
      %v633 = vrot.slane %v631, 5
      %v634 = vor.u32 %v630, %v633
      %v635 = vrot.slane %v634, 4
      %v637 = vshll.u32 %v225, 16
      %v639 = vrot.slane %v637, 5
      %v640 = vsel %vm542, %v635, %v639
      %v642 = vshrl.u32 %v227, 16
      %v644 = vrot.slane %v642, 4
      %v645 = vshll.u32 %v227, 16
      %v647 = vrot.slane %v645, 5
      %v648 = vor.u32 %v644, %v647
      %v649 = vrot.slane %v648, 4
      %v651 = vshll.u32 %v229, 16
      %v653 = vrot.slane %v651, 5
      %v654 = vsel %vm542, %v649, %v653
      %s655 = scalar_lea.vmem %s1, 128
      %v656 = vld [vmem:[%s655] sm:$0xf]
      %v657 = vld [vmem:[%s655 + $0x4] sm:$0xf]
      %v658 = vld [vmem:[%s655 + $0x8] sm:$0xf]
      %v659 = vld [vmem:[%s655 + $0xc] sm:$0xf]
      %v660 = vld [vmem:[%s655 + $0x10] sm:$0xf]
      %v661 = vld [vmem:[%s655 + $0x14] sm:$0xf]
      %v662 = vld [vmem:[%s655 + $0x18] sm:$0xf]
      %v663 = vld [vmem:[%s655 + $0x1c] sm:$0xf]
      %v664 = vld [vmem:[%s655 + $0x20] sm:$0xf]
      %v665 = vld [vmem:[%s655 + $0x24] sm:$0xf]
      %v666 = vld [vmem:[%s655 + $0x28] sm:$0xf]
      %v667 = vld [vmem:[%s655 + $0x2c] sm:$0xf]
      %v668 = vld [vmem:[%s655 + $0x30] sm:$0xf]
      %v669 = vld [vmem:[%s655 + $0x34] sm:$0xf]
      %v670 = vld [vmem:[%s655 + $0x38] sm:$0xf]
      %v671 = vld [vmem:[%s655 + $0x3c] sm:$0xf]
      %v672 = vunpack.c.l.b16 %v556
      %v673 = vunpack.c.l.b16 %v570
      %v674 = vunpack.c.l.b16 %v584
      %v675 = vunpack.c.l.b16 %v598
      %v676 = vunpack.c.l.b16 %v612
      %v677 = vunpack.c.l.b16 %v626
      %v678 = vunpack.c.l.b16 %v640
      %v679 = vunpack.c.l.b16 %v654
      %v680 = vpack.c.b16 %v673, %v672
      %v681 = vpack.c.b16 %v675, %v674
      %v682 = vpack.c.b16 %v677, %v676
      %v683 = vpack.c.b16 %v679, %v678
      %v704 = vunpack.c.l.b16 %v656
      %v705 = vunpack.c.l.b16 %v657
      %v706 = vunpack.c.l.b16 %v658
      %v707 = vunpack.c.l.b16 %v659
      %v708 = vunpack.c.l.b16 %v660
      %v709 = vunpack.c.l.b16 %v661
      %v710 = vunpack.c.l.b16 %v662
      %v711 = vunpack.c.l.b16 %v663
      %v712 = vunpack.c.l.b16 %v664
      %v713 = vunpack.c.l.b16 %v665
      %v714 = vunpack.c.l.b16 %v666
      %v715 = vunpack.c.l.b16 %v667
      %v716 = vunpack.c.l.b16 %v668
      %v717 = vunpack.c.l.b16 %v669
      %v718 = vunpack.c.l.b16 %v670
      %v719 = vunpack.c.l.b16 %v671
      %v720 = vpack.c.b16 %v705, %v704
      %v721 = vpack.c.b16 %v707, %v706
      %v722 = vpack.c.b16 %v709, %v708
      %v723 = vpack.c.b16 %v711, %v710
      %v724 = vpack.c.b16 %v713, %v712
      %v725 = vpack.c.b16 %v715, %v714
      %v726 = vpack.c.b16 %v717, %v716
      %v727 = vpack.c.b16 %v719, %v718
      %736 = vmatprep.subr.bf16.mxu0 0
      %737 = vmatpush1.bf16.msra.mxu0 %v727
      %738 = vmatprep.subr.bf16.mxu0 0
      %739 = vmatpush1.bf16.msra.mxu0 %v726
      %740 = vmatprep.subr.bf16.mxu0 0
      %741 = vmatpush1.bf16.msra.mxu0 %v725
      %742 = vmatprep.subr.bf16.mxu0 0
      %743 = vmatpush1.bf16.msra.mxu0 %v724
      %744 = vmatprep.subr.bf16.mxu0 0
      %745 = vmatpush1.bf16.msra.mxu0 %v723
      %746 = vmatprep.subr.bf16.mxu0 0
      %747 = vmatpush1.bf16.msra.mxu0 %v722
      %748 = vmatprep.subr.bf16.mxu0 0
      %749 = vmatpush1.bf16.msra.mxu0 %v721
      %750 = vmatprep.subr.bf16.mxu0 0
      %751 = vmatpush1.bf16.msra.mxu0 %v720
      %752 = vmatprep.subr.bf16.mxu0 0
      %753 = vmatpush2.bf16.msra.mxu0 0
      %754 = vmatprep.subr.bf16.mxu0 0
      %755 = vmatpush2.bf16.msra.mxu0 0
      %756 = vmatprep.subr.bf16.mxu0 0
      %757 = vmatpush2.bf16.msra.mxu0 0
      %758 = vmatprep.subr.bf16.mxu0 0
      %759 = vmatpush2.bf16.msra.mxu0 0
      %760 = vmatprep.subr.bf16.mxu0 0
      %761 = vmatpush2.bf16.msra.mxu0 0
      %762 = vmatprep.subr.bf16.mxu0 0
      %763 = vmatpush2.bf16.msra.mxu0 0
      %764 = vmatprep.subr.bf16.mxu0 0
      %765 = vmatpush2.bf16.msra.mxu0 0
      %766 = vmatprep.subr.bf16.mxu0 0
      %767 = vmatpush2.bf16.msra.mxu0 0
      %768 = vmatprep.mubr.bf16.mxu0 0
      %769 = vmatmul.mubr.bf16.gmra.mxu0 %v680
      %v770 = vpop.f32.mrf.mxu0
      %v771 = vadd.f32 0.0, %v770
      %v772 = vpop.f32.mrf.mxu0
      %v773 = vpop.f32.mrf.mxu0
      %v774 = vadd.f32 0.0, %v773
      %v775 = vpop.f32.mrf.mxu0
      %776 = vmatprep.mubr.bf16.mxu0 0
      %777 = vmatmul.mubr.bf16.gmra.mxu0 %v681
      %v778 = vpop.f32.mrf.mxu0
      %v779 = vadd.f32 0.0, %v778
      %v780 = vpop.f32.mrf.mxu0
      %v781 = vpop.f32.mrf.mxu0
      %v782 = vadd.f32 0.0, %v781
      %v783 = vpop.f32.mrf.mxu0
      %784 = vmatprep.mubr.bf16.mxu0 0
      %785 = vmatmul.mubr.bf16.gmra.mxu0 %v682
      %v786 = vpop.f32.mrf.mxu0
      %v787 = vadd.f32 0.0, %v786
      %v788 = vpop.f32.mrf.mxu0
      %v789 = vpop.f32.mrf.mxu0
      %v790 = vadd.f32 0.0, %v789
      %v791 = vpop.f32.mrf.mxu0
      %792 = vmatprep.mubr.bf16.mxu0 0
      %793 = vmatmul.mubr.bf16.gmra.mxu0 %v683
      %v794 = vpop.f32.mrf.mxu0
      %v795 = vadd.f32 0.0, %v794
      %v796 = vpop.f32.mrf.mxu0
      %v797 = vpop.f32.mrf.mxu0
      %v798 = vadd.f32 0.0, %v797
      %v799 = vpop.f32.mrf.mxu0
      %800 = vdwg.mxu0
      %v801 = vadd.f32 %v510, %v771
      %v802 = vadd.f32 %v513, %v774
      %v803 = vadd.f32 %v518, %v779
      %v804 = vadd.f32 %v521, %v782
      %v805 = vadd.f32 %v526, %v787
      %v806 = vadd.f32 %v529, %v790
      %v807 = vadd.f32 %v534, %v795
      %v808 = vadd.f32 %v537, %v798
      %s809 = scalar_lea.vmem %s1, 192
      %v810 = vld [vmem:[%s809] sm:$0xf]
      %v811 = vld [vmem:[%s809 + $0x4] sm:$0xf]
      %v812 = vld [vmem:[%s809 + $0x8] sm:$0xf]
      %v813 = vld [vmem:[%s809 + $0xc] sm:$0xf]
      %v814 = vld [vmem:[%s809 + $0x10] sm:$0xf]
      %v815 = vld [vmem:[%s809 + $0x14] sm:$0xf]
      %v816 = vld [vmem:[%s809 + $0x18] sm:$0xf]
      %v817 = vld [vmem:[%s809 + $0x1c] sm:$0xf]
      %v818 = vld [vmem:[%s809 + $0x20] sm:$0xf]
      %v819 = vld [vmem:[%s809 + $0x24] sm:$0xf]
      %v820 = vld [vmem:[%s809 + $0x28] sm:$0xf]
      %v821 = vld [vmem:[%s809 + $0x2c] sm:$0xf]
      %v822 = vld [vmem:[%s809 + $0x30] sm:$0xf]
      %v823 = vld [vmem:[%s809 + $0x34] sm:$0xf]
      %v824 = vld [vmem:[%s809 + $0x38] sm:$0xf]
      %v825 = vld [vmem:[%s809 + $0x3c] sm:$0xf]
      %v834 = vunpack.c.l.b16 %v200
      %v835 = vunpack.c.l.b16 %v204
      %v836 = vunpack.c.l.b16 %v208
      %v837 = vunpack.c.l.b16 %v212
      %v838 = vunpack.c.l.b16 %v216
      %v839 = vunpack.c.l.b16 %v220
      %v840 = vunpack.c.l.b16 %v224
      %v841 = vunpack.c.l.b16 %v228
      %v842 = vpack.c.b16 %v835, %v834
      %v843 = vpack.c.b16 %v837, %v836
      %v844 = vpack.c.b16 %v839, %v838
      %v845 = vpack.c.b16 %v841, %v840
      %v866 = vunpack.c.l.b16 %v810
      %v867 = vunpack.c.l.b16 %v811
      %v868 = vunpack.c.l.b16 %v812
      %v869 = vunpack.c.l.b16 %v813
      %v870 = vunpack.c.l.b16 %v814
      %v871 = vunpack.c.l.b16 %v815
      %v872 = vunpack.c.l.b16 %v816
      %v873 = vunpack.c.l.b16 %v817
      %v874 = vunpack.c.l.b16 %v818
      %v875 = vunpack.c.l.b16 %v819
      %v876 = vunpack.c.l.b16 %v820
      %v877 = vunpack.c.l.b16 %v821
      %v878 = vunpack.c.l.b16 %v822
      %v879 = vunpack.c.l.b16 %v823
      %v880 = vunpack.c.l.b16 %v824
      %v881 = vunpack.c.l.b16 %v825
      %v882 = vpack.c.b16 %v867, %v866
      %v883 = vpack.c.b16 %v869, %v868
      %v884 = vpack.c.b16 %v871, %v870
      %v885 = vpack.c.b16 %v873, %v872
      %v886 = vpack.c.b16 %v875, %v874
      %v887 = vpack.c.b16 %v877, %v876
      %v888 = vpack.c.b16 %v879, %v878
      %v889 = vpack.c.b16 %v881, %v880
      %898 = vmatprep.subr.bf16.mxu0 0
      %899 = vmatpush1.bf16.msra.mxu0 %v889
      %900 = vmatprep.subr.bf16.mxu0 0
      %901 = vmatpush1.bf16.msra.mxu0 %v888
      %902 = vmatprep.subr.bf16.mxu0 0
      %903 = vmatpush1.bf16.msra.mxu0 %v887
      %904 = vmatprep.subr.bf16.mxu0 0
      %905 = vmatpush1.bf16.msra.mxu0 %v886
      %906 = vmatprep.subr.bf16.mxu0 0
      %907 = vmatpush1.bf16.msra.mxu0 %v885
      %908 = vmatprep.subr.bf16.mxu0 0
      %909 = vmatpush1.bf16.msra.mxu0 %v884
      %910 = vmatprep.subr.bf16.mxu0 0
      %911 = vmatpush1.bf16.msra.mxu0 %v883
      %912 = vmatprep.subr.bf16.mxu0 0
      %913 = vmatpush1.bf16.msra.mxu0 %v882
      %914 = vmatprep.subr.bf16.mxu0 0
      %915 = vmatpush2.bf16.msra.mxu0 0
      %916 = vmatprep.subr.bf16.mxu0 0
      %917 = vmatpush2.bf16.msra.mxu0 0
      %918 = vmatprep.subr.bf16.mxu0 0
      %919 = vmatpush2.bf16.msra.mxu0 0
      %920 = vmatprep.subr.bf16.mxu0 0
      %921 = vmatpush2.bf16.msra.mxu0 0
      %922 = vmatprep.subr.bf16.mxu0 0
      %923 = vmatpush2.bf16.msra.mxu0 0
      %924 = vmatprep.subr.bf16.mxu0 0
      %925 = vmatpush2.bf16.msra.mxu0 0
      %926 = vmatprep.subr.bf16.mxu0 0
      %927 = vmatpush2.bf16.msra.mxu0 0
      %928 = vmatprep.subr.bf16.mxu0 0
      %929 = vmatpush2.bf16.msra.mxu0 0
      %930 = vmatprep.mubr.bf16.mxu0 0
      %931 = vmatmul.mubr.bf16.gmra.mxu0 %v842
      %v932 = vpop.f32.mrf.mxu0
      %v933 = vadd.f32 0.0, %v932
      %v934 = vpop.f32.mrf.mxu0
      %v935 = vpop.f32.mrf.mxu0
      %v936 = vadd.f32 0.0, %v935
      %v937 = vpop.f32.mrf.mxu0
      %938 = vmatprep.mubr.bf16.mxu0 0
      %939 = vmatmul.mubr.bf16.gmra.mxu0 %v843
      %v940 = vpop.f32.mrf.mxu0
      %v941 = vadd.f32 0.0, %v940
      %v942 = vpop.f32.mrf.mxu0
      %v943 = vpop.f32.mrf.mxu0
      %v944 = vadd.f32 0.0, %v943
      %v945 = vpop.f32.mrf.mxu0
      %946 = vmatprep.mubr.bf16.mxu0 0
      %947 = vmatmul.mubr.bf16.gmra.mxu0 %v844
      %v948 = vpop.f32.mrf.mxu0
      %v949 = vadd.f32 0.0, %v948
      %v950 = vpop.f32.mrf.mxu0
      %v951 = vpop.f32.mrf.mxu0
      %v952 = vadd.f32 0.0, %v951
      %v953 = vpop.f32.mrf.mxu0
      %954 = vmatprep.mubr.bf16.mxu0 0
      %955 = vmatmul.mubr.bf16.gmra.mxu0 %v845
      %v956 = vpop.f32.mrf.mxu0
      %v957 = vadd.f32 0.0, %v956
      %v958 = vpop.f32.mrf.mxu0
      %v959 = vpop.f32.mrf.mxu0
      %v960 = vadd.f32 0.0, %v959
      %v961 = vpop.f32.mrf.mxu0
      %962 = vdwg.mxu0
      %v963 = vadd.f32 %v801, %v933
      %v964 = vadd.f32 %v802, %v936
      %v965 = vadd.f32 %v803, %v941
      %v966 = vadd.f32 %v804, %v944
      %v967 = vadd.f32 %v805, %v949
      %v968 = vadd.f32 %v806, %v952
      %v969 = vadd.f32 %v807, %v957
      %v970 = vadd.f32 %v808, %v960
      %v971 = vrot.slane %v200, 4
      %v972 = vrot.slane %v204, 4
      %v973 = vrot.slane %v208, 4
      %v974 = vrot.slane %v212, 4
      %v975 = vrot.slane %v216, 4
      %v976 = vrot.slane %v220, 4
      %v977 = vrot.slane %v224, 4
      %v978 = vrot.slane %v228, 4
      %s979 = scalar_lea.vmem %s1, 256
      %v980 = vld [vmem:[%s979] sm:$0xf]
      %v981 = vld [vmem:[%s979 + $0x4] sm:$0xf]
      %v982 = vld [vmem:[%s979 + $0x8] sm:$0xf]
      %v983 = vld [vmem:[%s979 + $0xc] sm:$0xf]
      %v984 = vld [vmem:[%s979 + $0x10] sm:$0xf]
      %v985 = vld [vmem:[%s979 + $0x14] sm:$0xf]
      %v986 = vld [vmem:[%s979 + $0x18] sm:$0xf]
      %v987 = vld [vmem:[%s979 + $0x1c] sm:$0xf]
      %v988 = vld [vmem:[%s979 + $0x20] sm:$0xf]
      %v989 = vld [vmem:[%s979 + $0x24] sm:$0xf]
      %v990 = vld [vmem:[%s979 + $0x28] sm:$0xf]
      %v991 = vld [vmem:[%s979 + $0x2c] sm:$0xf]
      %v992 = vld [vmem:[%s979 + $0x30] sm:$0xf]
      %v993 = vld [vmem:[%s979 + $0x34] sm:$0xf]
      %v994 = vld [vmem:[%s979 + $0x38] sm:$0xf]
      %v995 = vld [vmem:[%s979 + $0x3c] sm:$0xf]
      %v996 = vunpack.c.l.b16 %v971
      %v997 = vunpack.c.l.b16 %v972
      %v998 = vunpack.c.l.b16 %v973
      %v999 = vunpack.c.l.b16 %v974
      %v1000 = vunpack.c.l.b16 %v975
      %v1001 = vunpack.c.l.b16 %v976
      %v1002 = vunpack.c.l.b16 %v977
      %v1003 = vunpack.c.l.b16 %v978
      %v1004 = vpack.c.b16 %v997, %v996
      %v1005 = vpack.c.b16 %v999, %v998
      %v1006 = vpack.c.b16 %v1001, %v1000
      %v1007 = vpack.c.b16 %v1003, %v1002
      %v1028 = vunpack.c.l.b16 %v980
      %v1029 = vunpack.c.l.b16 %v981
      %v1030 = vunpack.c.l.b16 %v982
      %v1031 = vunpack.c.l.b16 %v983
      %v1032 = vunpack.c.l.b16 %v984
      %v1033 = vunpack.c.l.b16 %v985
      %v1034 = vunpack.c.l.b16 %v986
      %v1035 = vunpack.c.l.b16 %v987
      %v1036 = vunpack.c.l.b16 %v988
      %v1037 = vunpack.c.l.b16 %v989
      %v1038 = vunpack.c.l.b16 %v990
      %v1039 = vunpack.c.l.b16 %v991
      %v1040 = vunpack.c.l.b16 %v992
      %v1041 = vunpack.c.l.b16 %v993
      %v1042 = vunpack.c.l.b16 %v994
      %v1043 = vunpack.c.l.b16 %v995
      %v1044 = vpack.c.b16 %v1029, %v1028
      %v1045 = vpack.c.b16 %v1031, %v1030
      %v1046 = vpack.c.b16 %v1033, %v1032
      %v1047 = vpack.c.b16 %v1035, %v1034
      %v1048 = vpack.c.b16 %v1037, %v1036
      %v1049 = vpack.c.b16 %v1039, %v1038
      %v1050 = vpack.c.b16 %v1041, %v1040
      %v1051 = vpack.c.b16 %v1043, %v1042
      %1060 = vmatprep.subr.bf16.mxu0 0
      %1061 = vmatpush1.bf16.msra.mxu0 %v1051
      %1062 = vmatprep.subr.bf16.mxu0 0
      %1063 = vmatpush1.bf16.msra.mxu0 %v1050
      %1064 = vmatprep.subr.bf16.mxu0 0
      %1065 = vmatpush1.bf16.msra.mxu0 %v1049
      %1066 = vmatprep.subr.bf16.mxu0 0
      %1067 = vmatpush1.bf16.msra.mxu0 %v1048
      %1068 = vmatprep.subr.bf16.mxu0 0
      %1069 = vmatpush1.bf16.msra.mxu0 %v1047
      %1070 = vmatprep.subr.bf16.mxu0 0
      %1071 = vmatpush1.bf16.msra.mxu0 %v1046
      %1072 = vmatprep.subr.bf16.mxu0 0
      %1073 = vmatpush1.bf16.msra.mxu0 %v1045
      %1074 = vmatprep.subr.bf16.mxu0 0
      %1075 = vmatpush1.bf16.msra.mxu0 %v1044
      %1076 = vmatprep.subr.bf16.mxu0 0
      %1077 = vmatpush2.bf16.msra.mxu0 0
      %1078 = vmatprep.subr.bf16.mxu0 0
      %1079 = vmatpush2.bf16.msra.mxu0 0
      %1080 = vmatprep.subr.bf16.mxu0 0
      %1081 = vmatpush2.bf16.msra.mxu0 0
      %1082 = vmatprep.subr.bf16.mxu0 0
      %1083 = vmatpush2.bf16.msra.mxu0 0
      %1084 = vmatprep.subr.bf16.mxu0 0
      %1085 = vmatpush2.bf16.msra.mxu0 0
      %1086 = vmatprep.subr.bf16.mxu0 0
      %1087 = vmatpush2.bf16.msra.mxu0 0
      %1088 = vmatprep.subr.bf16.mxu0 0
      %1089 = vmatpush2.bf16.msra.mxu0 0
      %1090 = vmatprep.subr.bf16.mxu0 0
      %1091 = vmatpush2.bf16.msra.mxu0 0
      %1092 = vmatprep.mubr.bf16.mxu0 0
      %1093 = vmatmul.mubr.bf16.gmra.mxu0 %v1004
      %v1094 = vpop.f32.mrf.mxu0
      %v1095 = vadd.f32 0.0, %v1094
      %v1096 = vpop.f32.mrf.mxu0
      %v1097 = vpop.f32.mrf.mxu0
      %v1098 = vadd.f32 0.0, %v1097
      %v1099 = vpop.f32.mrf.mxu0
      %1100 = vmatprep.mubr.bf16.mxu0 0
      %1101 = vmatmul.mubr.bf16.gmra.mxu0 %v1005
      %v1102 = vpop.f32.mrf.mxu0
      %v1103 = vadd.f32 0.0, %v1102
      %v1104 = vpop.f32.mrf.mxu0
      %v1105 = vpop.f32.mrf.mxu0
      %v1106 = vadd.f32 0.0, %v1105
      %v1107 = vpop.f32.mrf.mxu0
      %1108 = vmatprep.mubr.bf16.mxu0 0
      %1109 = vmatmul.mubr.bf16.gmra.mxu0 %v1006
      %v1110 = vpop.f32.mrf.mxu0
      %v1111 = vadd.f32 0.0, %v1110
      %v1112 = vpop.f32.mrf.mxu0
      %v1113 = vpop.f32.mrf.mxu0
      %v1114 = vadd.f32 0.0, %v1113
      %v1115 = vpop.f32.mrf.mxu0
      %1116 = vmatprep.mubr.bf16.mxu0 0
      %1117 = vmatmul.mubr.bf16.gmra.mxu0 %v1007
      %v1118 = vpop.f32.mrf.mxu0
      %v1119 = vadd.f32 0.0, %v1118
      %v1120 = vpop.f32.mrf.mxu0
      %v1121 = vpop.f32.mrf.mxu0
      %v1122 = vadd.f32 0.0, %v1121
      %v1123 = vpop.f32.mrf.mxu0
      %1124 = vdwg.mxu0
      %v1125 = vadd.f32 %v963, %v1095
      %v1126 = vadd.f32 %v964, %v1098
      %v1127 = vadd.f32 %v965, %v1103
      %v1128 = vadd.f32 %v966, %v1106
      %v1129 = vadd.f32 %v967, %v1111
      %v1130 = vadd.f32 %v968, %v1114
      %v1131 = vadd.f32 %v969, %v1119
      %v1132 = vadd.f32 %v970, %v1122
      %v1134 = vshrl.u32 %v200, 16
      %v1136 = vrot.slane %v1134, 4
      %v1137 = vshll.u32 %v200, 16
      %v1139 = vrot.slane %v1137, 5
      %v1140 = vor.u32 %v1136, %v1139
      %v1141 = vrot.slane %v1140, 4
      %v1143 = vshll.u32 %v202, 16
      %v1145 = vrot.slane %v1143, 5
      %v1146 = vsel %vm542, %v1141, %v1145
      %v1148 = vshrl.u32 %v204, 16
      %v1150 = vrot.slane %v1148, 4
      %v1151 = vshll.u32 %v204, 16
      %v1153 = vrot.slane %v1151, 5
      %v1154 = vor.u32 %v1150, %v1153
      %v1155 = vrot.slane %v1154, 4
      %v1157 = vshll.u32 %v206, 16
      %v1159 = vrot.slane %v1157, 5
      %v1160 = vsel %vm542, %v1155, %v1159
      %v1162 = vshrl.u32 %v208, 16
      %v1164 = vrot.slane %v1162, 4
      %v1165 = vshll.u32 %v208, 16
      %v1167 = vrot.slane %v1165, 5
      %v1168 = vor.u32 %v1164, %v1167
      %v1169 = vrot.slane %v1168, 4
      %v1171 = vshll.u32 %v210, 16
      %v1173 = vrot.slane %v1171, 5
      %v1174 = vsel %vm542, %v1169, %v1173
      %v1176 = vshrl.u32 %v212, 16
      %v1178 = vrot.slane %v1176, 4
      %v1179 = vshll.u32 %v212, 16
      %v1181 = vrot.slane %v1179, 5
      %v1182 = vor.u32 %v1178, %v1181
      %v1183 = vrot.slane %v1182, 4
      %v1185 = vshll.u32 %v214, 16
      %v1187 = vrot.slane %v1185, 5
      %v1188 = vsel %vm542, %v1183, %v1187
      %v1190 = vshrl.u32 %v216, 16
      %v1192 = vrot.slane %v1190, 4
      %v1193 = vshll.u32 %v216, 16
      %v1195 = vrot.slane %v1193, 5
      %v1196 = vor.u32 %v1192, %v1195
      %v1197 = vrot.slane %v1196, 4
      %v1199 = vshll.u32 %v218, 16
      %v1201 = vrot.slane %v1199, 5
      %v1202 = vsel %vm542, %v1197, %v1201
      %v1204 = vshrl.u32 %v220, 16
      %v1206 = vrot.slane %v1204, 4
      %v1207 = vshll.u32 %v220, 16
      %v1209 = vrot.slane %v1207, 5
      %v1210 = vor.u32 %v1206, %v1209
      %v1211 = vrot.slane %v1210, 4
      %v1213 = vshll.u32 %v222, 16
      %v1215 = vrot.slane %v1213, 5
      %v1216 = vsel %vm542, %v1211, %v1215
      %v1218 = vshrl.u32 %v224, 16
      %v1220 = vrot.slane %v1218, 4
      %v1221 = vshll.u32 %v224, 16
      %v1223 = vrot.slane %v1221, 5
      %v1224 = vor.u32 %v1220, %v1223
      %v1225 = vrot.slane %v1224, 4
      %v1227 = vshll.u32 %v226, 16
      %v1229 = vrot.slane %v1227, 5
      %v1230 = vsel %vm542, %v1225, %v1229
      %v1232 = vshrl.u32 %v228, 16
      %v1234 = vrot.slane %v1232, 4
      %v1235 = vshll.u32 %v228, 16
      %v1237 = vrot.slane %v1235, 5
      %v1238 = vor.u32 %v1234, %v1237
      %v1239 = vrot.slane %v1238, 4
      %v1241 = vshll.u32 %v230, 16
      %v1243 = vrot.slane %v1241, 5
      %v1244 = vsel %vm542, %v1239, %v1243
      %s1245 = scalar_lea.vmem %s1, 320
      %v1246 = vld [vmem:[%s1245] sm:$0xf]
      %v1247 = vld [vmem:[%s1245 + $0x4] sm:$0xf]
      %v1248 = vld [vmem:[%s1245 + $0x8] sm:$0xf]
      %v1249 = vld [vmem:[%s1245 + $0xc] sm:$0xf]
      %v1250 = vld [vmem:[%s1245 + $0x10] sm:$0xf]
      %v1251 = vld [vmem:[%s1245 + $0x14] sm:$0xf]
      %v1252 = vld [vmem:[%s1245 + $0x18] sm:$0xf]
      %v1253 = vld [vmem:[%s1245 + $0x1c] sm:$0xf]
      %v1254 = vld [vmem:[%s1245 + $0x20] sm:$0xf]
      %v1255 = vld [vmem:[%s1245 + $0x24] sm:$0xf]
      %v1256 = vld [vmem:[%s1245 + $0x28] sm:$0xf]
      %v1257 = vld [vmem:[%s1245 + $0x2c] sm:$0xf]
      %v1258 = vld [vmem:[%s1245 + $0x30] sm:$0xf]
      %v1259 = vld [vmem:[%s1245 + $0x34] sm:$0xf]
      %v1260 = vld [vmem:[%s1245 + $0x38] sm:$0xf]
      %v1261 = vld [vmem:[%s1245 + $0x3c] sm:$0xf]
      %v1262 = vunpack.c.l.b16 %v1146
      %v1263 = vunpack.c.l.b16 %v1160
      %v1264 = vunpack.c.l.b16 %v1174
      %v1265 = vunpack.c.l.b16 %v1188
      %v1266 = vunpack.c.l.b16 %v1202
      %v1267 = vunpack.c.l.b16 %v1216
      %v1268 = vunpack.c.l.b16 %v1230
      %v1269 = vunpack.c.l.b16 %v1244
      %v1270 = vpack.c.b16 %v1263, %v1262
      %v1271 = vpack.c.b16 %v1265, %v1264
      %v1272 = vpack.c.b16 %v1267, %v1266
      %v1273 = vpack.c.b16 %v1269, %v1268
      %v1294 = vunpack.c.l.b16 %v1246
      %v1295 = vunpack.c.l.b16 %v1247
      %v1296 = vunpack.c.l.b16 %v1248
      %v1297 = vunpack.c.l.b16 %v1249
      %v1298 = vunpack.c.l.b16 %v1250
      %v1299 = vunpack.c.l.b16 %v1251
      %v1300 = vunpack.c.l.b16 %v1252
      %v1301 = vunpack.c.l.b16 %v1253
      %v1302 = vunpack.c.l.b16 %v1254
      %v1303 = vunpack.c.l.b16 %v1255
      %v1304 = vunpack.c.l.b16 %v1256
      %v1305 = vunpack.c.l.b16 %v1257
      %v1306 = vunpack.c.l.b16 %v1258
      %v1307 = vunpack.c.l.b16 %v1259
      %v1308 = vunpack.c.l.b16 %v1260
      %v1309 = vunpack.c.l.b16 %v1261
      %v1310 = vpack.c.b16 %v1295, %v1294
      %v1311 = vpack.c.b16 %v1297, %v1296
      %v1312 = vpack.c.b16 %v1299, %v1298
      %v1313 = vpack.c.b16 %v1301, %v1300
      %v1314 = vpack.c.b16 %v1303, %v1302
      %v1315 = vpack.c.b16 %v1305, %v1304
      %v1316 = vpack.c.b16 %v1307, %v1306
      %v1317 = vpack.c.b16 %v1309, %v1308
      %1326 = vmatprep.subr.bf16.mxu0 0
      %1327 = vmatpush1.bf16.msra.mxu0 %v1317
      %1328 = vmatprep.subr.bf16.mxu0 0
      %1329 = vmatpush1.bf16.msra.mxu0 %v1316
      %1330 = vmatprep.subr.bf16.mxu0 0
      %1331 = vmatpush1.bf16.msra.mxu0 %v1315
      %1332 = vmatprep.subr.bf16.mxu0 0
      %1333 = vmatpush1.bf16.msra.mxu0 %v1314
      %1334 = vmatprep.subr.bf16.mxu0 0
      %1335 = vmatpush1.bf16.msra.mxu0 %v1313
      %1336 = vmatprep.subr.bf16.mxu0 0
      %1337 = vmatpush1.bf16.msra.mxu0 %v1312
      %1338 = vmatprep.subr.bf16.mxu0 0
      %1339 = vmatpush1.bf16.msra.mxu0 %v1311
      %1340 = vmatprep.subr.bf16.mxu0 0
      %1341 = vmatpush1.bf16.msra.mxu0 %v1310
      %1342 = vmatprep.subr.bf16.mxu0 0
      %1343 = vmatpush2.bf16.msra.mxu0 0
      %1344 = vmatprep.subr.bf16.mxu0 0
      %1345 = vmatpush2.bf16.msra.mxu0 0
      %1346 = vmatprep.subr.bf16.mxu0 0
      %1347 = vmatpush2.bf16.msra.mxu0 0
      %1348 = vmatprep.subr.bf16.mxu0 0
      %1349 = vmatpush2.bf16.msra.mxu0 0
      %1350 = vmatprep.subr.bf16.mxu0 0
      %1351 = vmatpush2.bf16.msra.mxu0 0
      %1352 = vmatprep.subr.bf16.mxu0 0
      %1353 = vmatpush2.bf16.msra.mxu0 0
      %1354 = vmatprep.subr.bf16.mxu0 0
      %1355 = vmatpush2.bf16.msra.mxu0 0
      %1356 = vmatprep.subr.bf16.mxu0 0
      %1357 = vmatpush2.bf16.msra.mxu0 0
      %1358 = vmatprep.mubr.bf16.mxu0 0
      %1359 = vmatmul.mubr.bf16.gmra.mxu0 %v1270
      %v1360 = vpop.f32.mrf.mxu0
      %v1361 = vadd.f32 0.0, %v1360
      %v1362 = vpop.f32.mrf.mxu0
      %v1363 = vpop.f32.mrf.mxu0
      %v1364 = vadd.f32 0.0, %v1363
      %v1365 = vpop.f32.mrf.mxu0
      %1366 = vmatprep.mubr.bf16.mxu0 0
      %1367 = vmatmul.mubr.bf16.gmra.mxu0 %v1271
      %v1368 = vpop.f32.mrf.mxu0
      %v1369 = vadd.f32 0.0, %v1368
      %v1370 = vpop.f32.mrf.mxu0
      %v1371 = vpop.f32.mrf.mxu0
      %v1372 = vadd.f32 0.0, %v1371
      %v1373 = vpop.f32.mrf.mxu0
      %1374 = vmatprep.mubr.bf16.mxu0 0
      %1375 = vmatmul.mubr.bf16.gmra.mxu0 %v1272
      %v1376 = vpop.f32.mrf.mxu0
      %v1377 = vadd.f32 0.0, %v1376
      %v1378 = vpop.f32.mrf.mxu0
      %v1379 = vpop.f32.mrf.mxu0
      %v1380 = vadd.f32 0.0, %v1379
      %v1381 = vpop.f32.mrf.mxu0
      %1382 = vmatprep.mubr.bf16.mxu0 0
      %1383 = vmatmul.mubr.bf16.gmra.mxu0 %v1273
      %v1384 = vpop.f32.mrf.mxu0
      %v1385 = vadd.f32 0.0, %v1384
      %v1386 = vpop.f32.mrf.mxu0
      %v1387 = vpop.f32.mrf.mxu0
      %v1388 = vadd.f32 0.0, %v1387
      %v1389 = vpop.f32.mrf.mxu0
      %1390 = vdwg.mxu0
      %v1391 = vadd.f32 %v1125, %v1361
      %v1392 = vadd.f32 %v1126, %v1364
      %v1393 = vadd.f32 %v1127, %v1369
      %v1394 = vadd.f32 %v1128, %v1372
      %v1395 = vadd.f32 %v1129, %v1377
      %v1396 = vadd.f32 %v1130, %v1380
      %v1397 = vadd.f32 %v1131, %v1385
      %v1398 = vadd.f32 %v1132, %v1388
      %s1399 = scalar_lea.vmem %s1, 384
      %v1400 = vld [vmem:[%s1399] sm:$0xf]
      %v1401 = vld [vmem:[%s1399 + $0x4] sm:$0xf]
      %v1402 = vld [vmem:[%s1399 + $0x8] sm:$0xf]
      %v1403 = vld [vmem:[%s1399 + $0xc] sm:$0xf]
      %v1404 = vld [vmem:[%s1399 + $0x10] sm:$0xf]
      %v1405 = vld [vmem:[%s1399 + $0x14] sm:$0xf]
      %v1406 = vld [vmem:[%s1399 + $0x18] sm:$0xf]
      %v1407 = vld [vmem:[%s1399 + $0x1c] sm:$0xf]
      %v1408 = vld [vmem:[%s1399 + $0x20] sm:$0xf]
      %v1409 = vld [vmem:[%s1399 + $0x24] sm:$0xf]
      %v1410 = vld [vmem:[%s1399 + $0x28] sm:$0xf]
      %v1411 = vld [vmem:[%s1399 + $0x2c] sm:$0xf]
      %v1412 = vld [vmem:[%s1399 + $0x30] sm:$0xf]
      %v1413 = vld [vmem:[%s1399 + $0x34] sm:$0xf]
      %v1414 = vld [vmem:[%s1399 + $0x38] sm:$0xf]
      %v1415 = vld [vmem:[%s1399 + $0x3c] sm:$0xf]
      %v1417 = vunpack.c.l.b16 %v231
      %v1418 = vpack.c.b16 %v413, %v412
      %v1419 = vpack.c.b16 %v415, %v414
      %v1420 = vpack.c.b16 %v417, %v416
      %v1421 = vpack.c.b16 %v1417, %v418
      %v1442 = vunpack.c.l.b16 %v1400
      %v1443 = vunpack.c.l.b16 %v1401
      %v1444 = vunpack.c.l.b16 %v1402
      %v1445 = vunpack.c.l.b16 %v1403
      %v1446 = vunpack.c.l.b16 %v1404
      %v1447 = vunpack.c.l.b16 %v1405
      %v1448 = vunpack.c.l.b16 %v1406
      %v1449 = vunpack.c.l.b16 %v1407
      %v1450 = vunpack.c.l.b16 %v1408
      %v1451 = vunpack.c.l.b16 %v1409
      %v1452 = vunpack.c.l.b16 %v1410
      %v1453 = vunpack.c.l.b16 %v1411
      %v1454 = vunpack.c.l.b16 %v1412
      %v1455 = vunpack.c.l.b16 %v1413
      %v1456 = vunpack.c.l.b16 %v1414
      %v1457 = vunpack.c.l.b16 %v1415
      %v1458 = vpack.c.b16 %v1443, %v1442
      %v1459 = vpack.c.b16 %v1445, %v1444
      %v1460 = vpack.c.b16 %v1447, %v1446
      %v1461 = vpack.c.b16 %v1449, %v1448
      %v1462 = vpack.c.b16 %v1451, %v1450
      %v1463 = vpack.c.b16 %v1453, %v1452
      %v1464 = vpack.c.b16 %v1455, %v1454
      %v1465 = vpack.c.b16 %v1457, %v1456
      %1474 = vmatprep.subr.bf16.mxu0 0
      %1475 = vmatpush1.bf16.msra.mxu0 %v1465
      %1476 = vmatprep.subr.bf16.mxu0 0
      %1477 = vmatpush1.bf16.msra.mxu0 %v1464
      %1478 = vmatprep.subr.bf16.mxu0 0
      %1479 = vmatpush1.bf16.msra.mxu0 %v1463
      %1480 = vmatprep.subr.bf16.mxu0 0
      %1481 = vmatpush1.bf16.msra.mxu0 %v1462
      %1482 = vmatprep.subr.bf16.mxu0 0
      %1483 = vmatpush1.bf16.msra.mxu0 %v1461
      %1484 = vmatprep.subr.bf16.mxu0 0
      %1485 = vmatpush1.bf16.msra.mxu0 %v1460
      %1486 = vmatprep.subr.bf16.mxu0 0
      %1487 = vmatpush1.bf16.msra.mxu0 %v1459
      %1488 = vmatprep.subr.bf16.mxu0 0
      %1489 = vmatpush1.bf16.msra.mxu0 %v1458
      %1490 = vmatprep.subr.bf16.mxu0 0
      %1491 = vmatpush2.bf16.msra.mxu0 0
      %1492 = vmatprep.subr.bf16.mxu0 0
      %1493 = vmatpush2.bf16.msra.mxu0 0
      %1494 = vmatprep.subr.bf16.mxu0 0
      %1495 = vmatpush2.bf16.msra.mxu0 0
      %1496 = vmatprep.subr.bf16.mxu0 0
      %1497 = vmatpush2.bf16.msra.mxu0 0
      %1498 = vmatprep.subr.bf16.mxu0 0
      %1499 = vmatpush2.bf16.msra.mxu0 0
      %1500 = vmatprep.subr.bf16.mxu0 0
      %1501 = vmatpush2.bf16.msra.mxu0 0
      %1502 = vmatprep.subr.bf16.mxu0 0
      %1503 = vmatpush2.bf16.msra.mxu0 0
      %1504 = vmatprep.subr.bf16.mxu0 0
      %1505 = vmatpush2.bf16.msra.mxu0 0
      %1506 = vmatprep.mubr.bf16.mxu0 0
      %1507 = vmatmul.mubr.bf16.gmra.mxu0 %v1418
      %v1508 = vpop.f32.mrf.mxu0
      %v1509 = vadd.f32 0.0, %v1508
      %v1510 = vpop.f32.mrf.mxu0
      %v1511 = vpop.f32.mrf.mxu0
      %v1512 = vadd.f32 0.0, %v1511
      %v1513 = vpop.f32.mrf.mxu0
      %1514 = vmatprep.mubr.bf16.mxu0 0
      %1515 = vmatmul.mubr.bf16.gmra.mxu0 %v1419
      %v1516 = vpop.f32.mrf.mxu0
      %v1517 = vadd.f32 0.0, %v1516
      %v1518 = vpop.f32.mrf.mxu0
      %v1519 = vpop.f32.mrf.mxu0
      %v1520 = vadd.f32 0.0, %v1519
      %v1521 = vpop.f32.mrf.mxu0
      %1522 = vmatprep.mubr.bf16.mxu0 0
      %1523 = vmatmul.mubr.bf16.gmra.mxu0 %v1420
      %v1524 = vpop.f32.mrf.mxu0
      %v1525 = vadd.f32 0.0, %v1524
      %v1526 = vpop.f32.mrf.mxu0
      %v1527 = vpop.f32.mrf.mxu0
      %v1528 = vadd.f32 0.0, %v1527
      %v1529 = vpop.f32.mrf.mxu0
      %1530 = vmatprep.mubr.bf16.mxu0 0
      %1531 = vmatmul.mubr.bf16.gmra.mxu0 %v1421
      %v1532 = vpop.f32.mrf.mxu0
      %v1533 = vadd.f32 0.0, %v1532
      %v1534 = vpop.f32.mrf.mxu0
      %v1535 = vpop.f32.mrf.mxu0
      %v1536 = vadd.f32 0.0, %v1535
      %v1537 = vpop.f32.mrf.mxu0
      %1538 = vdwg.mxu0
      %v1539 = vadd.f32 %v1391, %v1509
      %v1540 = vadd.f32 %v1392, %v1512
      %v1541 = vadd.f32 %v1393, %v1517
      %v1542 = vadd.f32 %v1394, %v1520
      %v1543 = vadd.f32 %v1395, %v1525
      %v1544 = vadd.f32 %v1396, %v1528
      %v1545 = vadd.f32 %v1397, %v1533
      %v1546 = vadd.f32 %v1398, %v1536
      %v1547 = vrot.slane %v231, 4
      %s1548 = scalar_lea.vmem %s1, 448
      %v1549 = vld [vmem:[%s1548] sm:$0xf]
      %v1550 = vld [vmem:[%s1548 + $0x4] sm:$0xf]
      %v1551 = vld [vmem:[%s1548 + $0x8] sm:$0xf]
      %v1552 = vld [vmem:[%s1548 + $0xc] sm:$0xf]
      %v1553 = vld [vmem:[%s1548 + $0x10] sm:$0xf]
      %v1554 = vld [vmem:[%s1548 + $0x14] sm:$0xf]
      %v1555 = vld [vmem:[%s1548 + $0x18] sm:$0xf]
      %v1556 = vld [vmem:[%s1548 + $0x1c] sm:$0xf]
      %v1557 = vld [vmem:[%s1548 + $0x20] sm:$0xf]
      %v1558 = vld [vmem:[%s1548 + $0x24] sm:$0xf]
      %v1559 = vld [vmem:[%s1548 + $0x28] sm:$0xf]
      %v1560 = vld [vmem:[%s1548 + $0x2c] sm:$0xf]
      %v1561 = vld [vmem:[%s1548 + $0x30] sm:$0xf]
      %v1562 = vld [vmem:[%s1548 + $0x34] sm:$0xf]
      %v1563 = vld [vmem:[%s1548 + $0x38] sm:$0xf]
      %v1564 = vld [vmem:[%s1548 + $0x3c] sm:$0xf]
      %v1565 = vunpack.c.l.b16 %v1547
      %v1566 = vpack.c.b16 %v284, %v283
      %v1567 = vpack.c.b16 %v286, %v285
      %v1568 = vpack.c.b16 %v288, %v287
      %v1569 = vpack.c.b16 %v1565, %v289
      %v1590 = vunpack.c.l.b16 %v1549
      %v1591 = vunpack.c.l.b16 %v1550
      %v1592 = vunpack.c.l.b16 %v1551
      %v1593 = vunpack.c.l.b16 %v1552
      %v1594 = vunpack.c.l.b16 %v1553
      %v1595 = vunpack.c.l.b16 %v1554
      %v1596 = vunpack.c.l.b16 %v1555
      %v1597 = vunpack.c.l.b16 %v1556
      %v1598 = vunpack.c.l.b16 %v1557
      %v1599 = vunpack.c.l.b16 %v1558
      %v1600 = vunpack.c.l.b16 %v1559
      %v1601 = vunpack.c.l.b16 %v1560
      %v1602 = vunpack.c.l.b16 %v1561
      %v1603 = vunpack.c.l.b16 %v1562
      %v1604 = vunpack.c.l.b16 %v1563
      %v1605 = vunpack.c.l.b16 %v1564
      %v1606 = vpack.c.b16 %v1591, %v1590
      %v1607 = vpack.c.b16 %v1593, %v1592
      %v1608 = vpack.c.b16 %v1595, %v1594
      %v1609 = vpack.c.b16 %v1597, %v1596
      %v1610 = vpack.c.b16 %v1599, %v1598
      %v1611 = vpack.c.b16 %v1601, %v1600
      %v1612 = vpack.c.b16 %v1603, %v1602
      %v1613 = vpack.c.b16 %v1605, %v1604
      %1622 = vmatprep.subr.bf16.mxu0 0
      %1623 = vmatpush1.bf16.msra.mxu0 %v1613
      %1624 = vmatprep.subr.bf16.mxu0 0
      %1625 = vmatpush1.bf16.msra.mxu0 %v1612
      %1626 = vmatprep.subr.bf16.mxu0 0
      %1627 = vmatpush1.bf16.msra.mxu0 %v1611
      %1628 = vmatprep.subr.bf16.mxu0 0
      %1629 = vmatpush1.bf16.msra.mxu0 %v1610
      %1630 = vmatprep.subr.bf16.mxu0 0
      %1631 = vmatpush1.bf16.msra.mxu0 %v1609
      %1632 = vmatprep.subr.bf16.mxu0 0
      %1633 = vmatpush1.bf16.msra.mxu0 %v1608
      %1634 = vmatprep.subr.bf16.mxu0 0
      %1635 = vmatpush1.bf16.msra.mxu0 %v1607
      %1636 = vmatprep.subr.bf16.mxu0 0
      %1637 = vmatpush1.bf16.msra.mxu0 %v1606
      %1638 = vmatprep.subr.bf16.mxu0 0
      %1639 = vmatpush2.bf16.msra.mxu0 0
      %1640 = vmatprep.subr.bf16.mxu0 0
      %1641 = vmatpush2.bf16.msra.mxu0 0
      %1642 = vmatprep.subr.bf16.mxu0 0
      %1643 = vmatpush2.bf16.msra.mxu0 0
      %1644 = vmatprep.subr.bf16.mxu0 0
      %1645 = vmatpush2.bf16.msra.mxu0 0
      %1646 = vmatprep.subr.bf16.mxu0 0
      %1647 = vmatpush2.bf16.msra.mxu0 0
      %1648 = vmatprep.subr.bf16.mxu0 0
      %1649 = vmatpush2.bf16.msra.mxu0 0
      %1650 = vmatprep.subr.bf16.mxu0 0
      %1651 = vmatpush2.bf16.msra.mxu0 0
      %1652 = vmatprep.subr.bf16.mxu0 0
      %1653 = vmatpush2.bf16.msra.mxu0 0
      %1654 = vmatprep.mubr.bf16.mxu0 0
      %1655 = vmatmul.mubr.bf16.gmra.mxu0 %v1566
      %v1656 = vpop.f32.mrf.mxu0
      %v1657 = vadd.f32 0.0, %v1656
      %v1658 = vpop.f32.mrf.mxu0
      %v1659 = vpop.f32.mrf.mxu0
      %v1660 = vadd.f32 0.0, %v1659
      %v1661 = vpop.f32.mrf.mxu0
      %1662 = vmatprep.mubr.bf16.mxu0 0
      %1663 = vmatmul.mubr.bf16.gmra.mxu0 %v1567
      %v1664 = vpop.f32.mrf.mxu0
      %v1665 = vadd.f32 0.0, %v1664
      %v1666 = vpop.f32.mrf.mxu0
      %v1667 = vpop.f32.mrf.mxu0
      %v1668 = vadd.f32 0.0, %v1667
      %v1669 = vpop.f32.mrf.mxu0
      %1670 = vmatprep.mubr.bf16.mxu0 0
      %1671 = vmatmul.mubr.bf16.gmra.mxu0 %v1568
      %v1672 = vpop.f32.mrf.mxu0
      %v1673 = vadd.f32 0.0, %v1672
      %v1674 = vpop.f32.mrf.mxu0
      %v1675 = vpop.f32.mrf.mxu0
      %v1676 = vadd.f32 0.0, %v1675
      %v1677 = vpop.f32.mrf.mxu0
      %1678 = vmatprep.mubr.bf16.mxu0 0
      %1679 = vmatmul.mubr.bf16.gmra.mxu0 %v1569
      %v1680 = vpop.f32.mrf.mxu0
      %v1681 = vadd.f32 0.0, %v1680
      %v1682 = vpop.f32.mrf.mxu0
      %v1683 = vpop.f32.mrf.mxu0
      %v1684 = vadd.f32 0.0, %v1683
      %v1685 = vpop.f32.mrf.mxu0
      %1686 = vdwg.mxu0
      %v1687 = vadd.f32 %v1539, %v1657
      %v1688 = vadd.f32 %v1540, %v1660
      %v1689 = vadd.f32 %v1541, %v1665
      %v1690 = vadd.f32 %v1542, %v1668
      %v1691 = vadd.f32 %v1543, %v1673
      %v1692 = vadd.f32 %v1544, %v1676
      %v1693 = vadd.f32 %v1545, %v1681
      %v1694 = vadd.f32 %v1546, %v1684
      %v1696 = vshrl.u32 %v231, 16
      %v1698 = vrot.slane %v1696, 4
      %v1699 = vshll.u32 %v231, 16
      %v1701 = vrot.slane %v1699, 5
      %v1702 = vor.u32 %v1698, %v1701
      %v1703 = vrot.slane %v1702, 4
      %v1705 = vshll.u32 %v232, 16
      %v1707 = vrot.slane %v1705, 5
      %v1708 = vsel %vm542, %v1703, %v1707
      %s1709 = scalar_lea.vmem %s1, 512
      %v1710 = vld [vmem:[%s1709] sm:$0xf]
      %v1711 = vld [vmem:[%s1709 + $0x4] sm:$0xf]
      %v1712 = vld [vmem:[%s1709 + $0x8] sm:$0xf]
      %v1713 = vld [vmem:[%s1709 + $0xc] sm:$0xf]
      %v1714 = vld [vmem:[%s1709 + $0x10] sm:$0xf]
      %v1715 = vld [vmem:[%s1709 + $0x14] sm:$0xf]
      %v1716 = vld [vmem:[%s1709 + $0x18] sm:$0xf]
      %v1717 = vld [vmem:[%s1709 + $0x1c] sm:$0xf]
      %v1718 = vld [vmem:[%s1709 + $0x20] sm:$0xf]
      %v1719 = vld [vmem:[%s1709 + $0x24] sm:$0xf]
      %v1720 = vld [vmem:[%s1709 + $0x28] sm:$0xf]
      %v1721 = vld [vmem:[%s1709 + $0x2c] sm:$0xf]
      %v1722 = vld [vmem:[%s1709 + $0x30] sm:$0xf]
      %v1723 = vld [vmem:[%s1709 + $0x34] sm:$0xf]
      %v1724 = vld [vmem:[%s1709 + $0x38] sm:$0xf]
      %v1725 = vld [vmem:[%s1709 + $0x3c] sm:$0xf]
      %v1726 = vunpack.c.l.b16 %v1708
      %v1727 = vpack.c.b16 %v674, %v673
      %v1728 = vpack.c.b16 %v676, %v675
      %v1729 = vpack.c.b16 %v678, %v677
      %v1730 = vpack.c.b16 %v1726, %v679
      %v1751 = vunpack.c.l.b16 %v1710
      %v1752 = vunpack.c.l.b16 %v1711
      %v1753 = vunpack.c.l.b16 %v1712
      %v1754 = vunpack.c.l.b16 %v1713
      %v1755 = vunpack.c.l.b16 %v1714
      %v1756 = vunpack.c.l.b16 %v1715
      %v1757 = vunpack.c.l.b16 %v1716
      %v1758 = vunpack.c.l.b16 %v1717
      %v1759 = vunpack.c.l.b16 %v1718
      %v1760 = vunpack.c.l.b16 %v1719
      %v1761 = vunpack.c.l.b16 %v1720
      %v1762 = vunpack.c.l.b16 %v1721
      %v1763 = vunpack.c.l.b16 %v1722
      %v1764 = vunpack.c.l.b16 %v1723
      %v1765 = vunpack.c.l.b16 %v1724
      %v1766 = vunpack.c.l.b16 %v1725
      %v1767 = vpack.c.b16 %v1752, %v1751
      %v1768 = vpack.c.b16 %v1754, %v1753
      %v1769 = vpack.c.b16 %v1756, %v1755
      %v1770 = vpack.c.b16 %v1758, %v1757
      %v1771 = vpack.c.b16 %v1760, %v1759
      %v1772 = vpack.c.b16 %v1762, %v1761
      %v1773 = vpack.c.b16 %v1764, %v1763
      %v1774 = vpack.c.b16 %v1766, %v1765
      %1783 = vmatprep.subr.bf16.mxu0 0
      %1784 = vmatpush1.bf16.msra.mxu0 %v1774
      %1785 = vmatprep.subr.bf16.mxu0 0
      %1786 = vmatpush1.bf16.msra.mxu0 %v1773
      %1787 = vmatprep.subr.bf16.mxu0 0
      %1788 = vmatpush1.bf16.msra.mxu0 %v1772
      %1789 = vmatprep.subr.bf16.mxu0 0
      %1790 = vmatpush1.bf16.msra.mxu0 %v1771
      %1791 = vmatprep.subr.bf16.mxu0 0
      %1792 = vmatpush1.bf16.msra.mxu0 %v1770
      %1793 = vmatprep.subr.bf16.mxu0 0
      %1794 = vmatpush1.bf16.msra.mxu0 %v1769
      %1795 = vmatprep.subr.bf16.mxu0 0
      %1796 = vmatpush1.bf16.msra.mxu0 %v1768
      %1797 = vmatprep.subr.bf16.mxu0 0
      %1798 = vmatpush1.bf16.msra.mxu0 %v1767
      %1799 = vmatprep.subr.bf16.mxu0 0
      %1800 = vmatpush2.bf16.msra.mxu0 0
      %1801 = vmatprep.subr.bf16.mxu0 0
      %1802 = vmatpush2.bf16.msra.mxu0 0
      %1803 = vmatprep.subr.bf16.mxu0 0
      %1804 = vmatpush2.bf16.msra.mxu0 0
      %1805 = vmatprep.subr.bf16.mxu0 0
      %1806 = vmatpush2.bf16.msra.mxu0 0
      %1807 = vmatprep.subr.bf16.mxu0 0
      %1808 = vmatpush2.bf16.msra.mxu0 0
      %1809 = vmatprep.subr.bf16.mxu0 0
      %1810 = vmatpush2.bf16.msra.mxu0 0
      %1811 = vmatprep.subr.bf16.mxu0 0
      %1812 = vmatpush2.bf16.msra.mxu0 0
      %1813 = vmatprep.subr.bf16.mxu0 0
      %1814 = vmatpush2.bf16.msra.mxu0 0
      %1815 = vmatprep.mubr.bf16.mxu0 0
      %1816 = vmatmul.mubr.bf16.gmra.mxu0 %v1727
      %v1817 = vpop.f32.mrf.mxu0
      %v1818 = vadd.f32 0.0, %v1817
      %v1819 = vpop.f32.mrf.mxu0
      %v1820 = vpop.f32.mrf.mxu0
      %v1821 = vadd.f32 0.0, %v1820
      %v1822 = vpop.f32.mrf.mxu0
      %1823 = vmatprep.mubr.bf16.mxu0 0
      %1824 = vmatmul.mubr.bf16.gmra.mxu0 %v1728
      %v1825 = vpop.f32.mrf.mxu0
      %v1826 = vadd.f32 0.0, %v1825
      %v1827 = vpop.f32.mrf.mxu0
      %v1828 = vpop.f32.mrf.mxu0
      %v1829 = vadd.f32 0.0, %v1828
      %v1830 = vpop.f32.mrf.mxu0
      %1831 = vmatprep.mubr.bf16.mxu0 0
      %1832 = vmatmul.mubr.bf16.gmra.mxu0 %v1729
      %v1833 = vpop.f32.mrf.mxu0
      %v1834 = vadd.f32 0.0, %v1833
      %v1835 = vpop.f32.mrf.mxu0
      %v1836 = vpop.f32.mrf.mxu0
      %v1837 = vadd.f32 0.0, %v1836
      %v1838 = vpop.f32.mrf.mxu0
      %1839 = vmatprep.mubr.bf16.mxu0 0
      %1840 = vmatmul.mubr.bf16.gmra.mxu0 %v1730
      %v1841 = vpop.f32.mrf.mxu0
      %v1842 = vadd.f32 0.0, %v1841
      %v1843 = vpop.f32.mrf.mxu0
      %v1844 = vpop.f32.mrf.mxu0
      %v1845 = vadd.f32 0.0, %v1844
      %v1846 = vpop.f32.mrf.mxu0
      %1847 = vdwg.mxu0
      %v1848 = vadd.f32 %v1687, %v1818
      %v1849 = vadd.f32 %v1688, %v1821
      %v1850 = vadd.f32 %v1689, %v1826
      %v1851 = vadd.f32 %v1690, %v1829
      %v1852 = vadd.f32 %v1691, %v1834
      %v1853 = vadd.f32 %v1692, %v1837
      %v1854 = vadd.f32 %v1693, %v1842
      %v1855 = vadd.f32 %v1694, %v1845
      %v1856 = vld [vmem:[%s2] sm:$0x1]
      %v1858 = vlaneseq
      %v1859 = vshrl.u32 %v1858, 7
      %v1860 = vsub.s32 0, %v1859
      %v1861 = vrot.slane %v1856, %v1860
      %v1863 = vadd.f32 %v1848, %v1861
      %v1864 = vadd.f32 %v1849, %v1861
      %v1865 = vadd.f32 %v1850, %v1861
      %v1866 = vadd.f32 %v1851, %v1861
      %v1867 = vadd.f32 %v1852, %v1861
      %v1868 = vadd.f32 %v1853, %v1861
      %v1869 = vadd.f32 %v1854, %v1861
      %v1870 = vadd.f32 %v1855, %v1861
      %v1871 = vmax.f32 %v1863, 0.0
      %v1872 = vmax.f32 %v1864, 0.0
      %v1873 = vmax.f32 %v1865, 0.0
      %v1874 = vmax.f32 %v1866, 0.0
      %v1875 = vmax.f32 %v1867, 0.0
      %v1876 = vmax.f32 %v1868, 0.0
      %v1877 = vmax.f32 %v1869, 0.0
      %v1878 = vmax.f32 %v1870, 0.0
      %v1879 = vmin.f32 %v1871, 6.0
      %v1880 = vmin.f32 %v1872, 6.0
      %v1881 = vmin.f32 %v1873, 6.0
      %v1882 = vmin.f32 %v1874, 6.0
      %v1883 = vmin.f32 %v1875, 6.0
      %v1884 = vmin.f32 %v1876, 6.0
      %v1885 = vmin.f32 %v1877, 6.0
      %v1886 = vmin.f32 %v1878, 6.0
      %v1887 = vpack.c.bf16 %v1879, %v1879
      %v1888 = vpack.c.bf16 %v1880, %v1880
      %v1889 = vpack.c.bf16 %v1881, %v1881
      %v1890 = vpack.c.bf16 %v1882, %v1882
      %v1891 = vpack.c.bf16 %v1883, %v1883
      %v1892 = vpack.c.bf16 %v1884, %v1884
      %v1893 = vpack.c.bf16 %v1885, %v1885
      %v1894 = vpack.c.bf16 %v1886, %v1886
      %1895 = vst [vmem:[%s192] sm:$0xf] %v1887
      %1896 = vst [vmem:[%s192 + $0x4] sm:$0xf] %v1888
      %1897 = vst [vmem:[%s192 + $0x8] sm:$0xf] %v1889
      %1898 = vst [vmem:[%s192 + $0xc] sm:$0xf] %v1890
      %1899 = vst [vmem:[%s192 + $0x10] sm:$0xf] %v1891
      %1900 = vst [vmem:[%s192 + $0x14] sm:$0xf] %v1892
      %1901 = vst [vmem:[%s192 + $0x18] sm:$0xf] %v1893
      %1902 = vst [vmem:[%s192 + $0x1c] sm:$0xf] %v1894
      %s1903 = smul.u32 8, %s19
      %p1904 = scmp.lt.s32.totalorder %s18, 1
      %s1905 = scalar_select %p1904, %s18, 1
      %p1906 = scmp.lt.s32.totalorder %s1903, 7
      %s1907 = scalar_select %p1906, %s1903, 7
      %s1908 = smul.addr %s1905, 8
      %s1909 = sadd.s32 %s1907, %s1908
      %s1910 = smul.addr %s1909, 4
      %s1911 = scalar_lea.vmem %s3, %s1910
      // Predicated region
      $region33: #{basic_block_forward.2} parent=31 // pred_check
        %p1912 = pneg %p114
      $region34: #{basic_block_forward.2} parent=31 // pred_check_branch
        %1914 = sbr.rel (%p1912) target = $region36
      $region35: #{basic_block_forward.2} parent=31 // pred_region
        %s1915 = smul.u32 8, %s19
      $region36: #{basic_block_forward.2} parent=31 // pred_fallthru
        _
    $region32: #{basic_block_forward.2} parent=5 // pred_fallthru
      _
    %p1916 = scmp.le.s32.totalorder 2, %s9
    // Predicated region
    $region37: #{basic_block_forward.2} parent=5 // pred_check
      %p1917 = pneg %p1916
    $region38: #{basic_block_forward.2} parent=5 // pred_check_branch
      %1919 = sbr.rel (%p1917) target = $region40
    $region39: #{basic_block_forward.2} parent=5 // pred_region
      %s1920 = ssub.s32 %s9, 2
      // Predicated region
      $region41: #{basic_block_forward.2} parent=39 // pred_check
        %p1921 = pneg %p120
      $region42: #{basic_block_forward.2} parent=39 // pred_check_branch
        %1923 = sbr.rel (%p1921) target = $region44
      $region43: #{basic_block_forward.2} parent=39 // pred_region
        %s1924 = smul.u32 8, %s21
        %p1925 = scmp.lt.s32.totalorder %s20, 1
        %s1926 = scalar_select %p1925, %s20, 1
        %p1927 = scmp.lt.s32.totalorder %s1924, 7
        %s1928 = scalar_select %p1927, %s1924, 7
        %s1929 = smul.addr %s1926, 8
        %s1930 = sadd.s32 %s1928, %s1929
        %s1931 = smul.addr %s1930, 4
        %s1932 = scalar_lea.vmem %s3, %s1931
      $region44: #{basic_block_forward.2} parent=39 // pred_fallthru
        _
    $region40: #{basic_block_forward.2} parent=5 // pred_fallthru
      _
  $region6: #{basic_block_forward.2} parent=0 // loop_footer
    %s13 = sadd.s32 1, %s9
  $region7: #{basic_block_forward.2} parent=0 // loop_footer_branch
    %8 = sbr.rel target = $region3
  $region8: #{basic_block_forward.2} parent=0 // loop_exit
    _

// kernel: basic_block_forward.3
$region0: #{basic_block_forward.3}
  #allocation0 [shape = 'u32[]', space=smem, size = 0x4, offset = 0x4, fixed_abs, tag = 'smem constant byte address 0x4 - core index']
  #allocation1 [shape = 'u32[144,128]{1,0:T(1,128)}', space=vmem, size = 0x12000, scoped, tag = 'internal scratch']
  %s0 = inlined_call_operand.vmem [shape: bf16[2,10,10,128], index: 0, kind: input, shape index: {}]
  %s1 = inlined_call_operand.vmem [shape: bf16[9,128,128], index: 1, kind: input, shape index: {}]
  %s2 = inlined_call_operand.vmem [shape: f32[1,128], index: 2, kind: input, shape index: {}]
  %s3 = inlined_call_operand.vmem [shape: bf16[2,9,9,512], index: 3, kind: input, shape index: {}]
  %s4 = inlined_call_operand.vmem [shape: bf16[128,128], index: 4, kind: input, shape index: {}]
  %s5 = inlined_call_operand.vmem [shape: f32[1,128], index: 5, kind: input, shape index: {}]
  %s6 = inlined_call_operand.vmem [shape: f32[2,8,8,128], index: 6, kind: output, shape index: {}]
  %s7 = sld [smem:[#allocation0]]
  $region57: #{basic_block_forward.3} parent=0
    _
  %s9 = ssub.s32 1, %s7
  %s10 = scalar_select 0, %s9, %s7
  loop: start=0, step=1, limit=4
  $region2: #{basic_block_forward.3} parent=0 // loop_pre_header
    _
  $region3: #{basic_block_forward.3} parent=0 // loop_header
    %s12 = sphi 0, %s16
    %p13 = scmp.ge.s32.totalorder %s12, 4
    %s19 = sphi 0, %s31
    %s20 = sphi 0, %s27
    %s21 = sphi 0, %s19
    %s22 = sphi 0, %s20
    %s23 = sphi 0, %s21
    %s24 = sphi 0, %s22
    %s34 = sphi 0, %s36
    %s37 = sphi 0, %s34
    %s38 = sphi 0, %s37
    %s54 = sphi 0, %s38
    %s58 = sphi 0, %s58
    %s60 = sphi 0, %s58
    %s61 = sphi 0, %s60
    %s75 = sphi 0, %s61
    %s79 = sphi 0, %s79
    %s81 = sphi 0, %s79
    %s82 = sphi 0, %s81
    %s96 = sphi 0, %s82
    %s102 = sphi 0, %s104
    %s105 = sphi 0, %s102
    %s106 = sphi 0, %s105
    %s122 = sphi 0, %s106
    %s126 = sphi 0, %s126
    %s128 = sphi 0, %s126
    %s129 = sphi 0, %s128
    %s143 = sphi 0, %s129
    %s147 = sphi 0, %s147
    %s149 = sphi 0, %s147
    %s150 = sphi 0, %s149
    %s164 = sphi 0, %s150
    %s172 = sphi 0, %s174
    %s175 = sphi 0, %s172
    %s176 = sphi 0, %s175
    %s192 = sphi 0, %s176
  $region4: #{basic_block_forward.3} parent=0 // loop_header_branch
    %15 = sbr.rel (%p13) target = $region8
  $region5: #{basic_block_forward.3} parent=0 // loop_body
    %s17 = ssub.s32 %s12, 1
    %s18 = ssub.s32 %s12, 2
    %s25 = sadd.s32 1, %s20
    %p26 = scmp.ge.s32.totalorder %s25, 1
    %s27 = scalar_select %p26, 0, %s25
    %s28 = sadd.s32 1, %s19
    %s29 = scalar_select %p26, %s28, %s19
    %p30 = scmp.ge.s32.totalorder %s29, 2
    %s31 = scalar_select %p30, 0, %s29
    %s32 = ssub.s32 %s19, %s31
    %p33 = scmp.eq.s32.totalorder %s32, 0
    %s35 = sadd.s32 %s34, 1
    %s36 = scalar_select %p33, %s34, %s35
    %p39 = pneg %p33
    %p40 = scmp.eq.s32.totalorder %s12, 1
    %p41 = por %p39, %p40
    %p42 = scmp.ne.s32.totalorder %s34, %s37
    %p43 = scmp.eq.s32.totalorder %s12, 0
    %p44 = por %p42, %p43
    %p45 = scmp.ne.s32.totalorder %s34, %s37
    %p46 = scmp.eq.s32.totalorder %s17, 1
    %p47 = por %p45, %p46
    %p48 = scmp.ne.s32.totalorder %s37, %s38
    %p49 = scmp.eq.s32.totalorder %s17, 0
    %p50 = por %p48, %p49
    %p51 = scmp.ne.s32.totalorder %s37, %s38
    %p52 = scmp.eq.s32.totalorder %s18, 1
    %p53 = por %p51, %p52
    %p55 = scmp.ne.s32.totalorder %s38, %s54
    %p56 = scmp.eq.s32.totalorder %s18, 0
    %p57 = por %p55, %p56
    %s59 = sadd.s32 %s58, 1
    %p62 = scmp.eq.s32.totalorder %s12, 1
    %p63 = scmp.ne.s32.totalorder %s58, %s60
    %p64 = scmp.eq.s32.totalorder %s12, 0
    %p65 = por %p63, %p64
    %p66 = scmp.ne.s32.totalorder %s58, %s60
    %p67 = scmp.eq.s32.totalorder %s17, 1
    %p68 = por %p66, %p67
    %p69 = scmp.ne.s32.totalorder %s60, %s61
    %p70 = scmp.eq.s32.totalorder %s17, 0
    %p71 = por %p69, %p70
    %p72 = scmp.ne.s32.totalorder %s60, %s61
    %p73 = scmp.eq.s32.totalorder %s18, 1
    %p74 = por %p72, %p73
    %p76 = scmp.ne.s32.totalorder %s61, %s75
    %p77 = scmp.eq.s32.totalorder %s18, 0
    %p78 = por %p76, %p77
    %s80 = sadd.s32 %s79, 1
    %p83 = scmp.eq.s32.totalorder %s12, 1
    %p84 = scmp.ne.s32.totalorder %s79, %s81
    %p85 = scmp.eq.s32.totalorder %s12, 0
    %p86 = por %p84, %p85
    %p87 = scmp.ne.s32.totalorder %s79, %s81
    %p88 = scmp.eq.s32.totalorder %s17, 1
    %p89 = por %p87, %p88
    %p90 = scmp.ne.s32.totalorder %s81, %s82
    %p91 = scmp.eq.s32.totalorder %s17, 0
    %p92 = por %p90, %p91
    %p93 = scmp.ne.s32.totalorder %s81, %s82
    %p94 = scmp.eq.s32.totalorder %s18, 1
    %p95 = por %p93, %p94
    %p97 = scmp.ne.s32.totalorder %s82, %s96
    %p98 = scmp.eq.s32.totalorder %s18, 0
    %p99 = por %p97, %p98
    %s100 = ssub.s32 %s19, %s31
    %p101 = scmp.eq.s32.totalorder %s100, 0
    %s103 = sadd.s32 %s102, 1
    %s104 = scalar_select %p101, %s102, %s103
    %p107 = pneg %p101
    %p108 = scmp.eq.s32.totalorder %s12, 1
    %p109 = por %p107, %p108
    %p110 = scmp.ne.s32.totalorder %s102, %s105
    %p111 = scmp.eq.s32.totalorder %s12, 0
    %p112 = por %p110, %p111
    %p113 = scmp.ne.s32.totalorder %s102, %s105
    %p114 = scmp.eq.s32.totalorder %s17, 1
    %p115 = por %p113, %p114
    %p116 = scmp.ne.s32.totalorder %s105, %s106
    %p117 = scmp.eq.s32.totalorder %s17, 0
    %p118 = por %p116, %p117
    %p119 = scmp.ne.s32.totalorder %s105, %s106
    %p120 = scmp.eq.s32.totalorder %s18, 1
    %p121 = por %p119, %p120
    %p123 = scmp.ne.s32.totalorder %s106, %s122
    %p124 = scmp.eq.s32.totalorder %s18, 0
    %p125 = por %p123, %p124
    %s127 = sadd.s32 %s126, 1
    %p130 = scmp.eq.s32.totalorder %s12, 1
    %p131 = scmp.ne.s32.totalorder %s126, %s128
    %p132 = scmp.eq.s32.totalorder %s12, 0
    %p133 = por %p131, %p132
    %p134 = scmp.ne.s32.totalorder %s126, %s128
    %p135 = scmp.eq.s32.totalorder %s17, 1
    %p136 = por %p134, %p135
    %p137 = scmp.ne.s32.totalorder %s128, %s129
    %p138 = scmp.eq.s32.totalorder %s17, 0
    %p139 = por %p137, %p138
    %p140 = scmp.ne.s32.totalorder %s128, %s129
    %p141 = scmp.eq.s32.totalorder %s18, 1
    %p142 = por %p140, %p141
    %p144 = scmp.ne.s32.totalorder %s129, %s143
    %p145 = scmp.eq.s32.totalorder %s18, 0
    %p146 = por %p144, %p145
    %s148 = sadd.s32 %s147, 1
    %p151 = scmp.eq.s32.totalorder %s12, 1
    %p152 = scmp.ne.s32.totalorder %s147, %s149
    %p153 = scmp.eq.s32.totalorder %s12, 0
    %p154 = por %p152, %p153
    %p155 = scmp.ne.s32.totalorder %s147, %s149
    %p156 = scmp.eq.s32.totalorder %s17, 1
    %p157 = por %p155, %p156
    %p158 = scmp.ne.s32.totalorder %s149, %s150
    %p159 = scmp.eq.s32.totalorder %s17, 0
    %p160 = por %p158, %p159
    %p161 = scmp.ne.s32.totalorder %s149, %s150
    %p162 = scmp.eq.s32.totalorder %s18, 1
    %p163 = por %p161, %p162
    %p165 = scmp.ne.s32.totalorder %s150, %s164
    %p166 = scmp.eq.s32.totalorder %s18, 0
    %p167 = por %p165, %p166
    %s168 = ssub.s32 %s19, %s31
    %s169 = ssub.s32 %s20, %s27
    %s170 = sor.u32 %s168, %s169
    %p171 = scmp.eq.s32.totalorder %s170, 0
    %s173 = sadd.s32 %s172, 1
    %s174 = scalar_select %p171, %s172, %s173
    %p177 = pneg %p171
    %p178 = scmp.eq.s32.totalorder %s12, 1
    %p179 = por %p177, %p178
    %p180 = scmp.ne.s32.totalorder %s172, %s175
    %p181 = scmp.eq.s32.totalorder %s12, 0
    %p182 = por %p180, %p181
    %p183 = scmp.ne.s32.totalorder %s172, %s175
    %p184 = scmp.eq.s32.totalorder %s17, 1
    %p185 = por %p183, %p184
    %p186 = scmp.ne.s32.totalorder %s175, %s176
    %p187 = scmp.eq.s32.totalorder %s17, 0
    %p188 = por %p186, %p187
    %p189 = scmp.ne.s32.totalorder %s175, %s176
    %p190 = scmp.eq.s32.totalorder %s18, 1
    %p191 = por %p189, %p190
    %p193 = scmp.ne.s32.totalorder %s176, %s192
    %p194 = scmp.eq.s32.totalorder %s18, 0
    %p195 = por %p193, %p194
    %p196 = scmp.le.s32.totalorder 1, %s12
    %p197 = scmp.lt.s32.totalorder %s12, 3
    %p198 = pnand %p196, %p197
    %p199 = pneg %p198
    // Predicated region
    $region9: #{basic_block_forward.3} parent=5 // pred_check
      _
    $region10: #{basic_block_forward.3} parent=5 // pred_check_branch
      %201 = sbr.rel (%p198) target = $region12
    $region11: #{basic_block_forward.3} parent=5 // pred_region
      %s202 = ssub.s32 %s12, 1
      // Predicated region
      $region13: #{basic_block_forward.3} parent=11 // pred_check
        %p203 = pneg %p71
      $region14: #{basic_block_forward.3} parent=11 // pred_check_branch
        %205 = sbr.rel (%p203) target = $region16
      $region15: #{basic_block_forward.3} parent=11 // pred_region
        _
      $region16: #{basic_block_forward.3} parent=11 // pred_fallthru
        _
      // Predicated region
      $region17: #{basic_block_forward.3} parent=11 // pred_check
        %p206 = pneg %p92
      $region18: #{basic_block_forward.3} parent=11 // pred_check_branch
        %208 = sbr.rel (%p206) target = $region20
      $region19: #{basic_block_forward.3} parent=11 // pred_region
        _
      $region20: #{basic_block_forward.3} parent=11 // pred_fallthru
        _
      // Predicated region
      $region21: #{basic_block_forward.3} parent=11 // pred_check
        %p209 = pneg %p139
      $region22: #{basic_block_forward.3} parent=11 // pred_check_branch
        %211 = sbr.rel (%p209) target = $region24
      $region23: #{basic_block_forward.3} parent=11 // pred_region
        _
      $region24: #{basic_block_forward.3} parent=11 // pred_fallthru
        _
      // Predicated region
      $region25: #{basic_block_forward.3} parent=11 // pred_check
        %p212 = pneg %p160
      $region26: #{basic_block_forward.3} parent=11 // pred_check_branch
        %214 = sbr.rel (%p212) target = $region28
      $region27: #{basic_block_forward.3} parent=11 // pred_region
        _
      $region28: #{basic_block_forward.3} parent=11 // pred_fallthru
        _
    $region12: #{basic_block_forward.3} parent=5 // pred_fallthru
      _
    %p215 = scmp.lt.s32.totalorder %s12, 2
    // Predicated region
    $region29: #{basic_block_forward.3} parent=5 // pred_check
      %p216 = pneg %p215
    $region30: #{basic_block_forward.3} parent=5 // pred_check_branch
      %218 = sbr.rel (%p216) target = $region32
    $region31: #{basic_block_forward.3} parent=5 // pred_region
      // Predicated region
      $region33: #{basic_block_forward.3} parent=31 // pred_check
        %p219 = pneg %p44
      $region34: #{basic_block_forward.3} parent=31 // pred_check_branch
        %221 = sbr.rel (%p219) target = $region36
      $region35: #{basic_block_forward.3} parent=31 // pred_region
        %p222 = scmp.lt.s32.totalorder %s19, 1
        %s223 = scalar_select %p222, %s19, 1
        %s224 = smul.addr %s223, 20
        %s225 = smul.addr %s224, 4
        %s226 = scalar_lea.vmem %s0, %s225
      $region36: #{basic_block_forward.3} parent=31 // pred_fallthru
        _
      // Predicated region
      $region37: #{basic_block_forward.3} parent=31 // pred_check
        %p227 = pneg %p112
      $region38: #{basic_block_forward.3} parent=31 // pred_check_branch
        %229 = sbr.rel (%p227) target = $region40
      $region39: #{basic_block_forward.3} parent=31 // pred_region
        %p230 = scmp.lt.s32.totalorder %s19, 1
        %s231 = scalar_select %p230, %s19, 1
        %s232 = smul.addr %s231, 72
        %s233 = smul.addr %s232, 4
        %s234 = scalar_lea.vmem %s3, %s233
      $region40: #{basic_block_forward.3} parent=31 // pred_fallthru
        _
    $region32: #{basic_block_forward.3} parent=5 // pred_fallthru
      _
    %p235 = scmp.le.s32.totalorder 1, %s12
    %p236 = scmp.lt.s32.totalorder %s12, 3
    %p237 = pnand %p235, %p236
    %p238 = pneg %p237
    // Predicated region
    $region41: #{basic_block_forward.3} parent=5 // pred_check
      _
    $region42: #{basic_block_forward.3} parent=5 // pred_check_branch
      %240 = sbr.rel (%p237) target = $region44
    $region43: #{basic_block_forward.3} parent=5 // pred_region
      %s241 = ssub.s32 %s12, 1
      %p242 = scmp.lt.s32.totalorder %s21, 1
      %s243 = scalar_select %p242, %s21, 1
      %s244 = smul.addr %s243, 20
      %s245 = smul.addr %s244, 4
      %s246 = scalar_lea.vmem %s0, %s245
      %p247 = pneg %p50
      %p248 = pneg %p47
      %p249 = pneg %p71
      %p250 = pneg %p68
      %p251 = pneg %p92
      %p252 = pneg %p89
      %p253 = scmp.lt.s32.totalorder %s21, 1
      %s254 = scalar_select %p253, %s21, 1
      %s255 = smul.addr %s254, 72
      %s256 = smul.addr %s255, 4
      %s257 = scalar_lea.vmem %s3, %s256
      %p258 = pneg %p118
      %p259 = pneg %p115
      %p260 = pneg %p139
      %p261 = pneg %p136
      %p262 = pneg %p160
      %p263 = pneg %p157
      %p264 = pneg %p188
      %p265 = pneg %p185
      %s266 = smul.u32 8, %s22
      %p267 = scmp.lt.s32.totalorder %s21, 1
      %s268 = scalar_select %p267, %s21, 1
      %p269 = scmp.lt.s32.totalorder %s266, 7
      %s270 = scalar_select %p269, %s266, 7
      %s271 = smul.addr %s268, 8
      %s272 = sadd.s32 %s270, %s271
      %s273 = smul.addr %s272, 8
      %s274 = scalar_lea.vmem %s6, %s273
      %p275 = scmp.lt.s32.totalorder %s21, 1
      %s276 = scalar_select %p275, %s21, 1
      %s277 = smul.addr %s276, 20
      %s278 = smul.addr %s277, 4
      %s279 = scalar_lea.vmem %s0, %s278
      %p280 = scmp.lt.s32.totalorder %s21, 1
      %s281 = scalar_select %p280, %s21, 1
      %s282 = smul.addr %s281, 72
      %s283 = smul.addr %s282, 4
      %s284 = scalar_lea.vmem %s3, %s283
      %s285 = smul.u32 8, %s22
      %p286 = scmp.lt.s32.totalorder %s21, 1
      %s287 = scalar_select %p286, %s21, 1
      %p288 = scmp.lt.s32.totalorder %s285, 7
      %s289 = scalar_select %p288, %s285, 7
      %s290 = smul.addr %s287, 8
      %s291 = sadd.s32 %s289, %s290
      %s292 = smul.addr %s291, 8
      %s293 = scalar_lea.vmem %s6, %s292
      %s294 = smul.u32 8, %s22
      %s296 = smul.u32 %s22, 8
      %s297 = smul.u32 %s296, 2
      %s298 = smul.addr %s297, 4
      %s299 = scalar_lea.vmem %s279, %s298
      %v300 = vld [vmem:[%s299] sm:$0xf]
      %v301 = vld [vmem:[%s299 + $0x4] sm:$0x1]
      %v302 = vld [vmem:[%s299 + $0x8] sm:$0xf]
      %v303 = vld [vmem:[%s299 + $0xc] sm:$0x1]
      %v304 = vld [vmem:[%s299 + $0x10] sm:$0xf]
      %v305 = vld [vmem:[%s299 + $0x14] sm:$0x1]
      %v306 = vld [vmem:[%s299 + $0x18] sm:$0xf]
      %v307 = vld [vmem:[%s299 + $0x1c] sm:$0x1]
      %v308 = vld [vmem:[%s299 + $0x20] sm:$0xf]
      %v309 = vld [vmem:[%s299 + $0x24] sm:$0x1]
      %v310 = vld [vmem:[%s299 + $0x28] sm:$0xf]
      %v311 = vld [vmem:[%s299 + $0x2c] sm:$0x1]
      %v312 = vld [vmem:[%s299 + $0x30] sm:$0xf]
      %v313 = vld [vmem:[%s299 + $0x34] sm:$0x1]
      %v314 = vld [vmem:[%s299 + $0x38] sm:$0xf]
      %v315 = vld [vmem:[%s299 + $0x3c] sm:$0x1]
      %v316 = vld [vmem:[%s299 + $0x40] sm:$0xf]
      %v317 = vld [vmem:[%s299 + $0x44] sm:$0x1]
      %v318 = vld [vmem:[%s299 + $0x48] sm:$0xf]
      %v319 = vld [vmem:[%s299 + $0x4c] sm:$0x1]
      %v320 = vld [vmem:[%s1] sm:$0xf]
      %v321 = vld [vmem:[%s1 + $0x4] sm:$0xf]
      %v322 = vld [vmem:[%s1 + $0x8] sm:$0xf]
      %v323 = vld [vmem:[%s1 + $0xc] sm:$0xf]
      %v324 = vld [vmem:[%s1 + $0x10] sm:$0xf]
      %v325 = vld [vmem:[%s1 + $0x14] sm:$0xf]
      %v326 = vld [vmem:[%s1 + $0x18] sm:$0xf]
      %v327 = vld [vmem:[%s1 + $0x1c] sm:$0xf]
      %v328 = vld [vmem:[%s1 + $0x20] sm:$0xf]
      %v329 = vld [vmem:[%s1 + $0x24] sm:$0xf]
      %v330 = vld [vmem:[%s1 + $0x28] sm:$0xf]
      %v331 = vld [vmem:[%s1 + $0x2c] sm:$0xf]
      %v332 = vld [vmem:[%s1 + $0x30] sm:$0xf]
      %v333 = vld [vmem:[%s1 + $0x34] sm:$0xf]
      %v334 = vld [vmem:[%s1 + $0x38] sm:$0xf]
      %v335 = vld [vmem:[%s1 + $0x3c] sm:$0xf]
      %vm336 = vsmask.f32 3328
      %vm337 = vsmask.f32 7440
      %vm338 = vmor %vm336, %vm337
      %v340 = vshrl.u32 %v300, 16
      %v342 = vrot.slane %v340, 4
      %v343 = vshll.u32 %v300, 16
      %v345 = vrot.slane %v343, 5
      %v346 = vor.u32 %v342, %v345
      %v347 = vrot.slane %v346, 4
      %v349 = vshll.u32 %v301, 16
      %v351 = vrot.slane %v349, 5
      %v352 = vsel %vm338, %v347, %v351
      %v354 = vshrl.u32 %v302, 16
      %v356 = vrot.slane %v354, 4
      %v357 = vshll.u32 %v302, 16
      %v359 = vrot.slane %v357, 5
      %v360 = vor.u32 %v356, %v359
      %v361 = vrot.slane %v360, 4
      %v363 = vshll.u32 %v303, 16
      %v365 = vrot.slane %v363, 5
      %v366 = vsel %vm338, %v361, %v365
      %v368 = vshrl.u32 %v304, 16
      %v370 = vrot.slane %v368, 4
      %v371 = vshll.u32 %v304, 16
      %v373 = vrot.slane %v371, 5
      %v374 = vor.u32 %v370, %v373
      %v375 = vrot.slane %v374, 4
      %v377 = vshll.u32 %v305, 16
      %v379 = vrot.slane %v377, 5
      %v380 = vsel %vm338, %v375, %v379
      %v382 = vshrl.u32 %v306, 16
      %v384 = vrot.slane %v382, 4
      %v385 = vshll.u32 %v306, 16
      %v387 = vrot.slane %v385, 5
      %v388 = vor.u32 %v384, %v387
      %v389 = vrot.slane %v388, 4
      %v391 = vshll.u32 %v307, 16
      %v393 = vrot.slane %v391, 5
      %v394 = vsel %vm338, %v389, %v393
      %v396 = vshrl.u32 %v308, 16
      %v398 = vrot.slane %v396, 4
      %v399 = vshll.u32 %v308, 16
      %v401 = vrot.slane %v399, 5
      %v402 = vor.u32 %v398, %v401
      %v403 = vrot.slane %v402, 4
      %v405 = vshll.u32 %v309, 16
      %v407 = vrot.slane %v405, 5
      %v408 = vsel %vm338, %v403, %v407
      %v410 = vshrl.u32 %v310, 16
      %v412 = vrot.slane %v410, 4
      %v413 = vshll.u32 %v310, 16
      %v415 = vrot.slane %v413, 5
      %v416 = vor.u32 %v412, %v415
      %v417 = vrot.slane %v416, 4
      %v419 = vshll.u32 %v311, 16
      %v421 = vrot.slane %v419, 5
      %v422 = vsel %vm338, %v417, %v421
      %v424 = vshrl.u32 %v312, 16
      %v426 = vrot.slane %v424, 4
      %v427 = vshll.u32 %v312, 16
      %v429 = vrot.slane %v427, 5
      %v430 = vor.u32 %v426, %v429
      %v431 = vrot.slane %v430, 4
      %v433 = vshll.u32 %v313, 16
      %v435 = vrot.slane %v433, 5
      %v436 = vsel %vm338, %v431, %v435
      %v438 = vshrl.u32 %v314, 16
      %v440 = vrot.slane %v438, 4
      %v441 = vshll.u32 %v314, 16
      %v443 = vrot.slane %v441, 5
      %v444 = vor.u32 %v440, %v443
      %v445 = vrot.slane %v444, 4
      %v447 = vshll.u32 %v315, 16
      %v449 = vrot.slane %v447, 5
      %v450 = vsel %vm338, %v445, %v449
      %s451 = scalar_lea.vmem %s1, 64
      %v452 = vld [vmem:[%s451] sm:$0xf]
      %v453 = vld [vmem:[%s451 + $0x4] sm:$0xf]
      %v454 = vld [vmem:[%s451 + $0x8] sm:$0xf]
      %v455 = vld [vmem:[%s451 + $0xc] sm:$0xf]
      %v456 = vld [vmem:[%s451 + $0x10] sm:$0xf]
      %v457 = vld [vmem:[%s451 + $0x14] sm:$0xf]
      %v458 = vld [vmem:[%s451 + $0x18] sm:$0xf]
      %v459 = vld [vmem:[%s451 + $0x1c] sm:$0xf]
      %v460 = vld [vmem:[%s451 + $0x20] sm:$0xf]
      %v461 = vld [vmem:[%s451 + $0x24] sm:$0xf]
      %v462 = vld [vmem:[%s451 + $0x28] sm:$0xf]
      %v463 = vld [vmem:[%s451 + $0x2c] sm:$0xf]
      %v464 = vld [vmem:[%s451 + $0x30] sm:$0xf]
      %v465 = vld [vmem:[%s451 + $0x34] sm:$0xf]
      %v466 = vld [vmem:[%s451 + $0x38] sm:$0xf]
      %v467 = vld [vmem:[%s451 + $0x3c] sm:$0xf]
      %v468 = vunpack.c.l.b16 %v352
      %v469 = vunpack.c.l.b16 %v366
      %v470 = vunpack.c.l.b16 %v380
      %v471 = vunpack.c.l.b16 %v394
      %v472 = vunpack.c.l.b16 %v408
      %v473 = vunpack.c.l.b16 %v422
      %v474 = vunpack.c.l.b16 %v436
      %v475 = vunpack.c.l.b16 %v450
      %v476 = vpack.c.b16 %v469, %v468
      %v477 = vpack.c.b16 %v471, %v470
      %v478 = vpack.c.b16 %v473, %v472
      %v479 = vpack.c.b16 %v475, %v474
      %v500 = vunpack.c.l.b16 %v452
      %v501 = vunpack.c.l.b16 %v453
      %v502 = vunpack.c.l.b16 %v454
      %v503 = vunpack.c.l.b16 %v455
      %v504 = vunpack.c.l.b16 %v456
      %v505 = vunpack.c.l.b16 %v457
      %v506 = vunpack.c.l.b16 %v458
      %v507 = vunpack.c.l.b16 %v459
      %v508 = vunpack.c.l.b16 %v460
      %v509 = vunpack.c.l.b16 %v461
      %v510 = vunpack.c.l.b16 %v462
      %v511 = vunpack.c.l.b16 %v463
      %v512 = vunpack.c.l.b16 %v464
      %v513 = vunpack.c.l.b16 %v465
      %v514 = vunpack.c.l.b16 %v466
      %v515 = vunpack.c.l.b16 %v467
      %v516 = vpack.c.b16 %v501, %v500
      %v517 = vpack.c.b16 %v503, %v502
      %v518 = vpack.c.b16 %v505, %v504
      %v519 = vpack.c.b16 %v507, %v506
      %v520 = vpack.c.b16 %v509, %v508
      %v521 = vpack.c.b16 %v511, %v510
      %v522 = vpack.c.b16 %v513, %v512
      %v523 = vpack.c.b16 %v515, %v514
      %532 = vmatprep.subr.bf16.mxu0 0
      %533 = vmatpush1.bf16.msra.mxu0 %v523
      %534 = vmatprep.subr.bf16.mxu0 0
      %535 = vmatpush1.bf16.msra.mxu0 %v522
      %536 = vmatprep.subr.bf16.mxu0 0
      %537 = vmatpush1.bf16.msra.mxu0 %v521
      %538 = vmatprep.subr.bf16.mxu0 0
      %539 = vmatpush1.bf16.msra.mxu0 %v520
      %540 = vmatprep.subr.bf16.mxu0 0
      %541 = vmatpush1.bf16.msra.mxu0 %v519
      %542 = vmatprep.subr.bf16.mxu0 0
      %543 = vmatpush1.bf16.msra.mxu0 %v518
      %544 = vmatprep.subr.bf16.mxu0 0
      %545 = vmatpush1.bf16.msra.mxu0 %v517
      %546 = vmatprep.subr.bf16.mxu0 0
      %547 = vmatpush1.bf16.msra.mxu0 %v516
      %548 = vmatprep.subr.bf16.mxu0 0
      %549 = vmatpush2.bf16.msra.mxu0 0
      %550 = vmatprep.subr.bf16.mxu0 0
      %551 = vmatpush2.bf16.msra.mxu0 0
      %552 = vmatprep.subr.bf16.mxu0 0
      %553 = vmatpush2.bf16.msra.mxu0 0
      %554 = vmatprep.subr.bf16.mxu0 0
      %555 = vmatpush2.bf16.msra.mxu0 0
      %556 = vmatprep.subr.bf16.mxu0 0
      %557 = vmatpush2.bf16.msra.mxu0 0
      %558 = vmatprep.subr.bf16.mxu0 0
      %559 = vmatpush2.bf16.msra.mxu0 0
      %560 = vmatprep.subr.bf16.mxu0 0
      %561 = vmatpush2.bf16.msra.mxu0 0
      %562 = vmatprep.subr.bf16.mxu0 0
      %563 = vmatpush2.bf16.msra.mxu0 0
      %564 = vmatprep.mubr.bf16.mxu0 0
      %565 = vmatmul.mubr.bf16.gmra.mxu0 %v476
      %v566 = vpop.f32.mrf.mxu0
      %v567 = vadd.f32 0.0, %v566
      %v568 = vpop.f32.mrf.mxu0
      %v569 = vpop.f32.mrf.mxu0
      %v570 = vadd.f32 0.0, %v569
      %v571 = vpop.f32.mrf.mxu0
      %572 = vmatprep.mubr.bf16.mxu0 0
      %573 = vmatmul.mubr.bf16.gmra.mxu0 %v477
      %v574 = vpop.f32.mrf.mxu0
      %v575 = vadd.f32 0.0, %v574
      %v576 = vpop.f32.mrf.mxu0
      %v577 = vpop.f32.mrf.mxu0
      %v578 = vadd.f32 0.0, %v577
      %v579 = vpop.f32.mrf.mxu0
      %580 = vmatprep.mubr.bf16.mxu0 0
      %581 = vmatmul.mubr.bf16.gmra.mxu0 %v478
      %v582 = vpop.f32.mrf.mxu0
      %v583 = vadd.f32 0.0, %v582
      %v584 = vpop.f32.mrf.mxu0
      %v585 = vpop.f32.mrf.mxu0
      %v586 = vadd.f32 0.0, %v585
      %v587 = vpop.f32.mrf.mxu0
      %588 = vmatprep.mubr.bf16.mxu0 0
      %589 = vmatmul.mubr.bf16.gmra.mxu0 %v479
      %v590 = vpop.f32.mrf.mxu0
      %v591 = vadd.f32 0.0, %v590
      %v592 = vpop.f32.mrf.mxu0
      %v593 = vpop.f32.mrf.mxu0
      %v594 = vadd.f32 0.0, %v593
      %v595 = vpop.f32.mrf.mxu0
      %596 = vdwg.mxu0
      %v605 = vunpack.c.l.b16 %v300
      %v606 = vunpack.c.l.b16 %v302
      %v607 = vunpack.c.l.b16 %v304
      %v608 = vunpack.c.l.b16 %v306
      %v609 = vunpack.c.l.b16 %v308
      %v610 = vunpack.c.l.b16 %v310
      %v611 = vunpack.c.l.b16 %v312
      %v612 = vunpack.c.l.b16 %v314
      %v613 = vpack.c.b16 %v606, %v605
      %v614 = vpack.c.b16 %v608, %v607
      %v615 = vpack.c.b16 %v610, %v609
      %v616 = vpack.c.b16 %v612, %v611
      %v637 = vunpack.c.l.b16 %v320
      %v638 = vunpack.c.l.b16 %v321
      %v639 = vunpack.c.l.b16 %v322
      %v640 = vunpack.c.l.b16 %v323
      %v641 = vunpack.c.l.b16 %v324
      %v642 = vunpack.c.l.b16 %v325
      %v643 = vunpack.c.l.b16 %v326
      %v644 = vunpack.c.l.b16 %v327
      %v645 = vunpack.c.l.b16 %v328
      %v646 = vunpack.c.l.b16 %v329
      %v647 = vunpack.c.l.b16 %v330
      %v648 = vunpack.c.l.b16 %v331
      %v649 = vunpack.c.l.b16 %v332
      %v650 = vunpack.c.l.b16 %v333
      %v651 = vunpack.c.l.b16 %v334
      %v652 = vunpack.c.l.b16 %v335
      %v653 = vpack.c.b16 %v638, %v637
      %v654 = vpack.c.b16 %v640, %v639
      %v655 = vpack.c.b16 %v642, %v641
      %v656 = vpack.c.b16 %v644, %v643
      %v657 = vpack.c.b16 %v646, %v645
      %v658 = vpack.c.b16 %v648, %v647
      %v659 = vpack.c.b16 %v650, %v649
      %v660 = vpack.c.b16 %v652, %v651
      %669 = vmatprep.subr.bf16.mxu0 0
      %670 = vmatpush1.bf16.msra.mxu0 %v660
      %671 = vmatprep.subr.bf16.mxu0 0
      %672 = vmatpush1.bf16.msra.mxu0 %v659
      %673 = vmatprep.subr.bf16.mxu0 0
      %674 = vmatpush1.bf16.msra.mxu0 %v658
      %675 = vmatprep.subr.bf16.mxu0 0
      %676 = vmatpush1.bf16.msra.mxu0 %v657
      %677 = vmatprep.subr.bf16.mxu0 0
      %678 = vmatpush1.bf16.msra.mxu0 %v656
      %679 = vmatprep.subr.bf16.mxu0 0
      %680 = vmatpush1.bf16.msra.mxu0 %v655
      %681 = vmatprep.subr.bf16.mxu0 0
      %682 = vmatpush1.bf16.msra.mxu0 %v654
      %683 = vmatprep.subr.bf16.mxu0 0
      %684 = vmatpush1.bf16.msra.mxu0 %v653
      %685 = vmatprep.subr.bf16.mxu0 0
      %686 = vmatpush2.bf16.msra.mxu0 0
      %687 = vmatprep.subr.bf16.mxu0 0
      %688 = vmatpush2.bf16.msra.mxu0 0
      %689 = vmatprep.subr.bf16.mxu0 0
      %690 = vmatpush2.bf16.msra.mxu0 0
      %691 = vmatprep.subr.bf16.mxu0 0
      %692 = vmatpush2.bf16.msra.mxu0 0
      %693 = vmatprep.subr.bf16.mxu0 0
      %694 = vmatpush2.bf16.msra.mxu0 0
      %695 = vmatprep.subr.bf16.mxu0 0
      %696 = vmatpush2.bf16.msra.mxu0 0
      %697 = vmatprep.subr.bf16.mxu0 0
      %698 = vmatpush2.bf16.msra.mxu0 0
      %699 = vmatprep.subr.bf16.mxu0 0
      %700 = vmatpush2.bf16.msra.mxu0 0
      %701 = vmatprep.mubr.bf16.mxu0 0
      %702 = vmatmul.mubr.bf16.gmra.mxu0 %v613
      %v703 = vpop.f32.mrf.mxu0
      %v704 = vadd.f32 %v567, %v703
      %v705 = vpop.f32.mrf.mxu0
      %v706 = vpop.f32.mrf.mxu0
      %v707 = vadd.f32 %v570, %v706
      %v708 = vpop.f32.mrf.mxu0
      %709 = vmatprep.mubr.bf16.mxu0 0
      %710 = vmatmul.mubr.bf16.gmra.mxu0 %v614
      %v711 = vpop.f32.mrf.mxu0
      %v712 = vadd.f32 %v575, %v711
      %v713 = vpop.f32.mrf.mxu0
      %v714 = vpop.f32.mrf.mxu0
      %v715 = vadd.f32 %v578, %v714
      %v716 = vpop.f32.mrf.mxu0
      %717 = vmatprep.mubr.bf16.mxu0 0
      %718 = vmatmul.mubr.bf16.gmra.mxu0 %v615
      %v719 = vpop.f32.mrf.mxu0
      %v720 = vadd.f32 %v583, %v719
      %v721 = vpop.f32.mrf.mxu0
      %v722 = vpop.f32.mrf.mxu0
      %v723 = vadd.f32 %v586, %v722
      %v724 = vpop.f32.mrf.mxu0
      %725 = vmatprep.mubr.bf16.mxu0 0
      %726 = vmatmul.mubr.bf16.gmra.mxu0 %v616
      %v727 = vpop.f32.mrf.mxu0
      %v728 = vadd.f32 %v591, %v727
      %v729 = vpop.f32.mrf.mxu0
      %v730 = vpop.f32.mrf.mxu0
      %v731 = vadd.f32 %v594, %v730
      %v732 = vpop.f32.mrf.mxu0
      %733 = vdwg.mxu0
      %vm742 = vcmask 1042432
      %vm743 = vcmask 1046532
      %vm744 = vmor %vm742, %vm743
      %v745 = vrot.slane %v300, 5
      %v746 = vrot.slane %v745, 4
      %v747 = vrot.slane %v301, 5
      %v748 = vsel %vm744, %v746, %v747
      %v749 = vrot.slane %v302, 5
      %v750 = vrot.slane %v749, 4
      %v751 = vrot.slane %v303, 5
      %v752 = vsel %vm744, %v750, %v751
      %v753 = vrot.slane %v304, 5
      %v754 = vrot.slane %v753, 4
      %v755 = vrot.slane %v305, 5
      %v756 = vsel %vm744, %v754, %v755
      %v757 = vrot.slane %v306, 5
      %v758 = vrot.slane %v757, 4
      %v759 = vrot.slane %v307, 5
      %v760 = vsel %vm744, %v758, %v759
      %v761 = vrot.slane %v308, 5
      %v762 = vrot.slane %v761, 4
      %v763 = vrot.slane %v309, 5
      %v764 = vsel %vm744, %v762, %v763
      %v765 = vrot.slane %v310, 5
      %v766 = vrot.slane %v765, 4
      %v767 = vrot.slane %v311, 5
      %v768 = vsel %vm744, %v766, %v767
      %v769 = vrot.slane %v312, 5
      %v770 = vrot.slane %v769, 4
      %v771 = vrot.slane %v313, 5
      %v772 = vsel %vm744, %v770, %v771
      %v773 = vrot.slane %v314, 5
      %v774 = vrot.slane %v773, 4
      %v775 = vrot.slane %v315, 5
      %v776 = vsel %vm744, %v774, %v775
      %s777 = scalar_lea.vmem %s1, 128
      %v778 = vld [vmem:[%s777] sm:$0xf]
      %v779 = vld [vmem:[%s777 + $0x4] sm:$0xf]
      %v780 = vld [vmem:[%s777 + $0x8] sm:$0xf]
      %v781 = vld [vmem:[%s777 + $0xc] sm:$0xf]
      %v782 = vld [vmem:[%s777 + $0x10] sm:$0xf]
      %v783 = vld [vmem:[%s777 + $0x14] sm:$0xf]
      %v784 = vld [vmem:[%s777 + $0x18] sm:$0xf]
      %v785 = vld [vmem:[%s777 + $0x1c] sm:$0xf]
      %v786 = vld [vmem:[%s777 + $0x20] sm:$0xf]
      %v787 = vld [vmem:[%s777 + $0x24] sm:$0xf]
      %v788 = vld [vmem:[%s777 + $0x28] sm:$0xf]
      %v789 = vld [vmem:[%s777 + $0x2c] sm:$0xf]
      %v790 = vld [vmem:[%s777 + $0x30] sm:$0xf]
      %v791 = vld [vmem:[%s777 + $0x34] sm:$0xf]
      %v792 = vld [vmem:[%s777 + $0x38] sm:$0xf]
      %v793 = vld [vmem:[%s777 + $0x3c] sm:$0xf]
      %v794 = vunpack.c.l.b16 %v748
      %v795 = vunpack.c.l.b16 %v752
      %v796 = vunpack.c.l.b16 %v756
      %v797 = vunpack.c.l.b16 %v760
      %v798 = vunpack.c.l.b16 %v764
      %v799 = vunpack.c.l.b16 %v768
      %v800 = vunpack.c.l.b16 %v772
      %v801 = vunpack.c.l.b16 %v776
      %v802 = vpack.c.b16 %v795, %v794
      %v803 = vpack.c.b16 %v797, %v796
      %v804 = vpack.c.b16 %v799, %v798
      %v805 = vpack.c.b16 %v801, %v800
      %v826 = vunpack.c.l.b16 %v778
      %v827 = vunpack.c.l.b16 %v779
      %v828 = vunpack.c.l.b16 %v780
      %v829 = vunpack.c.l.b16 %v781
      %v830 = vunpack.c.l.b16 %v782
      %v831 = vunpack.c.l.b16 %v783
      %v832 = vunpack.c.l.b16 %v784
      %v833 = vunpack.c.l.b16 %v785
      %v834 = vunpack.c.l.b16 %v786
      %v835 = vunpack.c.l.b16 %v787
      %v836 = vunpack.c.l.b16 %v788
      %v837 = vunpack.c.l.b16 %v789
      %v838 = vunpack.c.l.b16 %v790
      %v839 = vunpack.c.l.b16 %v791
      %v840 = vunpack.c.l.b16 %v792
      %v841 = vunpack.c.l.b16 %v793
      %v842 = vpack.c.b16 %v827, %v826
      %v843 = vpack.c.b16 %v829, %v828
      %v844 = vpack.c.b16 %v831, %v830
      %v845 = vpack.c.b16 %v833, %v832
      %v846 = vpack.c.b16 %v835, %v834
      %v847 = vpack.c.b16 %v837, %v836
      %v848 = vpack.c.b16 %v839, %v838
      %v849 = vpack.c.b16 %v841, %v840
      %858 = vmatprep.subr.bf16.mxu0 0
      %859 = vmatpush1.bf16.msra.mxu0 %v849
      %860 = vmatprep.subr.bf16.mxu0 0
      %861 = vmatpush1.bf16.msra.mxu0 %v848
      %862 = vmatprep.subr.bf16.mxu0 0
      %863 = vmatpush1.bf16.msra.mxu0 %v847
      %864 = vmatprep.subr.bf16.mxu0 0
      %865 = vmatpush1.bf16.msra.mxu0 %v846
      %866 = vmatprep.subr.bf16.mxu0 0
      %867 = vmatpush1.bf16.msra.mxu0 %v845
      %868 = vmatprep.subr.bf16.mxu0 0
      %869 = vmatpush1.bf16.msra.mxu0 %v844
      %870 = vmatprep.subr.bf16.mxu0 0
      %871 = vmatpush1.bf16.msra.mxu0 %v843
      %872 = vmatprep.subr.bf16.mxu0 0
      %873 = vmatpush1.bf16.msra.mxu0 %v842
      %874 = vmatprep.subr.bf16.mxu0 0
      %875 = vmatpush2.bf16.msra.mxu0 0
      %876 = vmatprep.subr.bf16.mxu0 0
      %877 = vmatpush2.bf16.msra.mxu0 0
      %878 = vmatprep.subr.bf16.mxu0 0
      %879 = vmatpush2.bf16.msra.mxu0 0
      %880 = vmatprep.subr.bf16.mxu0 0
      %881 = vmatpush2.bf16.msra.mxu0 0
      %882 = vmatprep.subr.bf16.mxu0 0
      %883 = vmatpush2.bf16.msra.mxu0 0
      %884 = vmatprep.subr.bf16.mxu0 0
      %885 = vmatpush2.bf16.msra.mxu0 0
      %886 = vmatprep.subr.bf16.mxu0 0
      %887 = vmatpush2.bf16.msra.mxu0 0
      %888 = vmatprep.subr.bf16.mxu0 0
      %889 = vmatpush2.bf16.msra.mxu0 0
      %890 = vmatprep.mubr.bf16.mxu0 0
      %891 = vmatmul.mubr.bf16.gmra.mxu0 %v802
      %v892 = vpop.f32.mrf.mxu0
      %v893 = vadd.f32 0.0, %v892
      %v894 = vpop.f32.mrf.mxu0
      %v895 = vpop.f32.mrf.mxu0
      %v896 = vadd.f32 0.0, %v895
      %v897 = vpop.f32.mrf.mxu0
      %898 = vmatprep.mubr.bf16.mxu0 0
      %899 = vmatmul.mubr.bf16.gmra.mxu0 %v803
      %v900 = vpop.f32.mrf.mxu0
      %v901 = vadd.f32 0.0, %v900
      %v902 = vpop.f32.mrf.mxu0
      %v903 = vpop.f32.mrf.mxu0
      %v904 = vadd.f32 0.0, %v903
      %v905 = vpop.f32.mrf.mxu0
      %906 = vmatprep.mubr.bf16.mxu0 0
      %907 = vmatmul.mubr.bf16.gmra.mxu0 %v804
      %v908 = vpop.f32.mrf.mxu0
      %v909 = vadd.f32 0.0, %v908
      %v910 = vpop.f32.mrf.mxu0
      %v911 = vpop.f32.mrf.mxu0
      %v912 = vadd.f32 0.0, %v911
      %v913 = vpop.f32.mrf.mxu0
      %914 = vmatprep.mubr.bf16.mxu0 0
      %915 = vmatmul.mubr.bf16.gmra.mxu0 %v805
      %v916 = vpop.f32.mrf.mxu0
      %v917 = vadd.f32 0.0, %v916
      %v918 = vpop.f32.mrf.mxu0
      %v919 = vpop.f32.mrf.mxu0
      %v920 = vadd.f32 0.0, %v919
      %v921 = vpop.f32.mrf.mxu0
      %922 = vdwg.mxu0
      %v923 = vadd.f32 %v704, %v893
      %v924 = vadd.f32 %v707, %v896
      %v925 = vadd.f32 %v712, %v901
      %v926 = vadd.f32 %v715, %v904
      %v927 = vadd.f32 %v720, %v909
      %v928 = vadd.f32 %v723, %v912
      %v929 = vadd.f32 %v728, %v917
      %v930 = vadd.f32 %v731, %v920
      %s931 = scalar_lea.vmem %s1, 192
      %v932 = vld [vmem:[%s931] sm:$0xf]
      %v933 = vld [vmem:[%s931 + $0x4] sm:$0xf]
      %v934 = vld [vmem:[%s931 + $0x8] sm:$0xf]
      %v935 = vld [vmem:[%s931 + $0xc] sm:$0xf]
      %v936 = vld [vmem:[%s931 + $0x10] sm:$0xf]
      %v937 = vld [vmem:[%s931 + $0x14] sm:$0xf]
      %v938 = vld [vmem:[%s931 + $0x18] sm:$0xf]
      %v939 = vld [vmem:[%s931 + $0x1c] sm:$0xf]
      %v940 = vld [vmem:[%s931 + $0x20] sm:$0xf]
      %v941 = vld [vmem:[%s931 + $0x24] sm:$0xf]
      %v942 = vld [vmem:[%s931 + $0x28] sm:$0xf]
      %v943 = vld [vmem:[%s931 + $0x2c] sm:$0xf]
      %v944 = vld [vmem:[%s931 + $0x30] sm:$0xf]
      %v945 = vld [vmem:[%s931 + $0x34] sm:$0xf]
      %v946 = vld [vmem:[%s931 + $0x38] sm:$0xf]
      %v947 = vld [vmem:[%s931 + $0x3c] sm:$0xf]
      %v949 = vunpack.c.l.b16 %v316
      %v950 = vpack.c.b16 %v607, %v606
      %v951 = vpack.c.b16 %v609, %v608
      %v952 = vpack.c.b16 %v611, %v610
      %v953 = vpack.c.b16 %v949, %v612
      %v974 = vunpack.c.l.b16 %v932
      %v975 = vunpack.c.l.b16 %v933
      %v976 = vunpack.c.l.b16 %v934
      %v977 = vunpack.c.l.b16 %v935
      %v978 = vunpack.c.l.b16 %v936
      %v979 = vunpack.c.l.b16 %v937
      %v980 = vunpack.c.l.b16 %v938
      %v981 = vunpack.c.l.b16 %v939
      %v982 = vunpack.c.l.b16 %v940
      %v983 = vunpack.c.l.b16 %v941
      %v984 = vunpack.c.l.b16 %v942
      %v985 = vunpack.c.l.b16 %v943
      %v986 = vunpack.c.l.b16 %v944
      %v987 = vunpack.c.l.b16 %v945
      %v988 = vunpack.c.l.b16 %v946
      %v989 = vunpack.c.l.b16 %v947
      %v990 = vpack.c.b16 %v975, %v974
      %v991 = vpack.c.b16 %v977, %v976
      %v992 = vpack.c.b16 %v979, %v978
      %v993 = vpack.c.b16 %v981, %v980
      %v994 = vpack.c.b16 %v983, %v982
      %v995 = vpack.c.b16 %v985, %v984
      %v996 = vpack.c.b16 %v987, %v986
      %v997 = vpack.c.b16 %v989, %v988
      %1006 = vmatprep.subr.bf16.mxu0 0
      %1007 = vmatpush1.bf16.msra.mxu0 %v997
      %1008 = vmatprep.subr.bf16.mxu0 0
      %1009 = vmatpush1.bf16.msra.mxu0 %v996
      %1010 = vmatprep.subr.bf16.mxu0 0
      %1011 = vmatpush1.bf16.msra.mxu0 %v995
      %1012 = vmatprep.subr.bf16.mxu0 0
      %1013 = vmatpush1.bf16.msra.mxu0 %v994
      %1014 = vmatprep.subr.bf16.mxu0 0
      %1015 = vmatpush1.bf16.msra.mxu0 %v993
      %1016 = vmatprep.subr.bf16.mxu0 0
      %1017 = vmatpush1.bf16.msra.mxu0 %v992
      %1018 = vmatprep.subr.bf16.mxu0 0
      %1019 = vmatpush1.bf16.msra.mxu0 %v991
      %1020 = vmatprep.subr.bf16.mxu0 0
      %1021 = vmatpush1.bf16.msra.mxu0 %v990
      %1022 = vmatprep.subr.bf16.mxu0 0
      %1023 = vmatpush2.bf16.msra.mxu0 0
      %1024 = vmatprep.subr.bf16.mxu0 0
      %1025 = vmatpush2.bf16.msra.mxu0 0
      %1026 = vmatprep.subr.bf16.mxu0 0
      %1027 = vmatpush2.bf16.msra.mxu0 0
      %1028 = vmatprep.subr.bf16.mxu0 0
      %1029 = vmatpush2.bf16.msra.mxu0 0
      %1030 = vmatprep.subr.bf16.mxu0 0
      %1031 = vmatpush2.bf16.msra.mxu0 0
      %1032 = vmatprep.subr.bf16.mxu0 0
      %1033 = vmatpush2.bf16.msra.mxu0 0
      %1034 = vmatprep.subr.bf16.mxu0 0
      %1035 = vmatpush2.bf16.msra.mxu0 0
      %1036 = vmatprep.subr.bf16.mxu0 0
      %1037 = vmatpush2.bf16.msra.mxu0 0
      %1038 = vmatprep.mubr.bf16.mxu0 0
      %1039 = vmatmul.mubr.bf16.gmra.mxu0 %v950
      %v1040 = vpop.f32.mrf.mxu0
      %v1041 = vadd.f32 0.0, %v1040
      %v1042 = vpop.f32.mrf.mxu0
      %v1043 = vpop.f32.mrf.mxu0
      %v1044 = vadd.f32 0.0, %v1043
      %v1045 = vpop.f32.mrf.mxu0
      %1046 = vmatprep.mubr.bf16.mxu0 0
      %1047 = vmatmul.mubr.bf16.gmra.mxu0 %v951
      %v1048 = vpop.f32.mrf.mxu0
      %v1049 = vadd.f32 0.0, %v1048
      %v1050 = vpop.f32.mrf.mxu0
      %v1051 = vpop.f32.mrf.mxu0
      %v1052 = vadd.f32 0.0, %v1051
      %v1053 = vpop.f32.mrf.mxu0
      %1054 = vmatprep.mubr.bf16.mxu0 0
      %1055 = vmatmul.mubr.bf16.gmra.mxu0 %v952
      %v1056 = vpop.f32.mrf.mxu0
      %v1057 = vadd.f32 0.0, %v1056
      %v1058 = vpop.f32.mrf.mxu0
      %v1059 = vpop.f32.mrf.mxu0
      %v1060 = vadd.f32 0.0, %v1059
      %v1061 = vpop.f32.mrf.mxu0
      %1062 = vmatprep.mubr.bf16.mxu0 0
      %1063 = vmatmul.mubr.bf16.gmra.mxu0 %v953
      %v1064 = vpop.f32.mrf.mxu0
      %v1065 = vadd.f32 0.0, %v1064
      %v1066 = vpop.f32.mrf.mxu0
      %v1067 = vpop.f32.mrf.mxu0
      %v1068 = vadd.f32 0.0, %v1067
      %v1069 = vpop.f32.mrf.mxu0
      %1070 = vdwg.mxu0
      %v1071 = vadd.f32 %v923, %v1041
      %v1072 = vadd.f32 %v924, %v1044
      %v1073 = vadd.f32 %v925, %v1049
      %v1074 = vadd.f32 %v926, %v1052
      %v1075 = vadd.f32 %v927, %v1057
      %v1076 = vadd.f32 %v928, %v1060
      %v1077 = vadd.f32 %v929, %v1065
      %v1078 = vadd.f32 %v930, %v1068
      %v1080 = vshrl.u32 %v316, 16
      %v1082 = vrot.slane %v1080, 4
      %v1083 = vshll.u32 %v316, 16
      %v1085 = vrot.slane %v1083, 5
      %v1086 = vor.u32 %v1082, %v1085
      %v1087 = vrot.slane %v1086, 4
      %v1089 = vshll.u32 %v317, 16
      %v1091 = vrot.slane %v1089, 5
      %v1092 = vsel %vm338, %v1087, %v1091
      %s1093 = scalar_lea.vmem %s1, 256
      %v1094 = vld [vmem:[%s1093] sm:$0xf]
      %v1095 = vld [vmem:[%s1093 + $0x4] sm:$0xf]
      %v1096 = vld [vmem:[%s1093 + $0x8] sm:$0xf]
      %v1097 = vld [vmem:[%s1093 + $0xc] sm:$0xf]
      %v1098 = vld [vmem:[%s1093 + $0x10] sm:$0xf]
      %v1099 = vld [vmem:[%s1093 + $0x14] sm:$0xf]
      %v1100 = vld [vmem:[%s1093 + $0x18] sm:$0xf]
      %v1101 = vld [vmem:[%s1093 + $0x1c] sm:$0xf]
      %v1102 = vld [vmem:[%s1093 + $0x20] sm:$0xf]
      %v1103 = vld [vmem:[%s1093 + $0x24] sm:$0xf]
      %v1104 = vld [vmem:[%s1093 + $0x28] sm:$0xf]
      %v1105 = vld [vmem:[%s1093 + $0x2c] sm:$0xf]
      %v1106 = vld [vmem:[%s1093 + $0x30] sm:$0xf]
      %v1107 = vld [vmem:[%s1093 + $0x34] sm:$0xf]
      %v1108 = vld [vmem:[%s1093 + $0x38] sm:$0xf]
      %v1109 = vld [vmem:[%s1093 + $0x3c] sm:$0xf]
      %v1110 = vunpack.c.l.b16 %v1092
      %v1111 = vpack.c.b16 %v470, %v469
      %v1112 = vpack.c.b16 %v472, %v471
      %v1113 = vpack.c.b16 %v474, %v473
      %v1114 = vpack.c.b16 %v1110, %v475
      %v1135 = vunpack.c.l.b16 %v1094
      %v1136 = vunpack.c.l.b16 %v1095
      %v1137 = vunpack.c.l.b16 %v1096
      %v1138 = vunpack.c.l.b16 %v1097
      %v1139 = vunpack.c.l.b16 %v1098
      %v1140 = vunpack.c.l.b16 %v1099
      %v1141 = vunpack.c.l.b16 %v1100
      %v1142 = vunpack.c.l.b16 %v1101
      %v1143 = vunpack.c.l.b16 %v1102
      %v1144 = vunpack.c.l.b16 %v1103
      %v1145 = vunpack.c.l.b16 %v1104
      %v1146 = vunpack.c.l.b16 %v1105
      %v1147 = vunpack.c.l.b16 %v1106
      %v1148 = vunpack.c.l.b16 %v1107
      %v1149 = vunpack.c.l.b16 %v1108
      %v1150 = vunpack.c.l.b16 %v1109
      %v1151 = vpack.c.b16 %v1136, %v1135
      %v1152 = vpack.c.b16 %v1138, %v1137
      %v1153 = vpack.c.b16 %v1140, %v1139
      %v1154 = vpack.c.b16 %v1142, %v1141
      %v1155 = vpack.c.b16 %v1144, %v1143
      %v1156 = vpack.c.b16 %v1146, %v1145
      %v1157 = vpack.c.b16 %v1148, %v1147
      %v1158 = vpack.c.b16 %v1150, %v1149
      %1167 = vmatprep.subr.bf16.mxu0 0
      %1168 = vmatpush1.bf16.msra.mxu0 %v1158
      %1169 = vmatprep.subr.bf16.mxu0 0
      %1170 = vmatpush1.bf16.msra.mxu0 %v1157
      %1171 = vmatprep.subr.bf16.mxu0 0
      %1172 = vmatpush1.bf16.msra.mxu0 %v1156
      %1173 = vmatprep.subr.bf16.mxu0 0
      %1174 = vmatpush1.bf16.msra.mxu0 %v1155
      %1175 = vmatprep.subr.bf16.mxu0 0
      %1176 = vmatpush1.bf16.msra.mxu0 %v1154
      %1177 = vmatprep.subr.bf16.mxu0 0
      %1178 = vmatpush1.bf16.msra.mxu0 %v1153
      %1179 = vmatprep.subr.bf16.mxu0 0
      %1180 = vmatpush1.bf16.msra.mxu0 %v1152
      %1181 = vmatprep.subr.bf16.mxu0 0
      %1182 = vmatpush1.bf16.msra.mxu0 %v1151
      %1183 = vmatprep.subr.bf16.mxu0 0
      %1184 = vmatpush2.bf16.msra.mxu0 0
      %1185 = vmatprep.subr.bf16.mxu0 0
      %1186 = vmatpush2.bf16.msra.mxu0 0
      %1187 = vmatprep.subr.bf16.mxu0 0
      %1188 = vmatpush2.bf16.msra.mxu0 0
      %1189 = vmatprep.subr.bf16.mxu0 0
      %1190 = vmatpush2.bf16.msra.mxu0 0
      %1191 = vmatprep.subr.bf16.mxu0 0
      %1192 = vmatpush2.bf16.msra.mxu0 0
      %1193 = vmatprep.subr.bf16.mxu0 0
      %1194 = vmatpush2.bf16.msra.mxu0 0
      %1195 = vmatprep.subr.bf16.mxu0 0
      %1196 = vmatpush2.bf16.msra.mxu0 0
      %1197 = vmatprep.subr.bf16.mxu0 0
      %1198 = vmatpush2.bf16.msra.mxu0 0
      %1199 = vmatprep.mubr.bf16.mxu0 0
      %1200 = vmatmul.mubr.bf16.gmra.mxu0 %v1111
      %v1201 = vpop.f32.mrf.mxu0
      %v1202 = vadd.f32 0.0, %v1201
      %v1203 = vpop.f32.mrf.mxu0
      %v1204 = vpop.f32.mrf.mxu0
      %v1205 = vadd.f32 0.0, %v1204
      %v1206 = vpop.f32.mrf.mxu0
      %1207 = vmatprep.mubr.bf16.mxu0 0
      %1208 = vmatmul.mubr.bf16.gmra.mxu0 %v1112
      %v1209 = vpop.f32.mrf.mxu0
      %v1210 = vadd.f32 0.0, %v1209
      %v1211 = vpop.f32.mrf.mxu0
      %v1212 = vpop.f32.mrf.mxu0
      %v1213 = vadd.f32 0.0, %v1212
      %v1214 = vpop.f32.mrf.mxu0
      %1215 = vmatprep.mubr.bf16.mxu0 0
      %1216 = vmatmul.mubr.bf16.gmra.mxu0 %v1113
      %v1217 = vpop.f32.mrf.mxu0
      %v1218 = vadd.f32 0.0, %v1217
      %v1219 = vpop.f32.mrf.mxu0
      %v1220 = vpop.f32.mrf.mxu0
      %v1221 = vadd.f32 0.0, %v1220
      %v1222 = vpop.f32.mrf.mxu0
      %1223 = vmatprep.mubr.bf16.mxu0 0
      %1224 = vmatmul.mubr.bf16.gmra.mxu0 %v1114
      %v1225 = vpop.f32.mrf.mxu0
      %v1226 = vadd.f32 0.0, %v1225
      %v1227 = vpop.f32.mrf.mxu0
      %v1228 = vpop.f32.mrf.mxu0
      %v1229 = vadd.f32 0.0, %v1228
      %v1230 = vpop.f32.mrf.mxu0
      %1231 = vdwg.mxu0
      %v1232 = vadd.f32 %v1071, %v1202
      %v1233 = vadd.f32 %v1072, %v1205
      %v1234 = vadd.f32 %v1073, %v1210
      %v1235 = vadd.f32 %v1074, %v1213
      %v1236 = vadd.f32 %v1075, %v1218
      %v1237 = vadd.f32 %v1076, %v1221
      %v1238 = vadd.f32 %v1077, %v1226
      %v1239 = vadd.f32 %v1078, %v1229
      %v1241 = vrot.slane %v316, 5
      %v1242 = vrot.slane %v1241, 4
      %v1243 = vrot.slane %v317, 5
      %v1244 = vsel %vm744, %v1242, %v1243
      %s1245 = scalar_lea.vmem %s1, 320
      %v1246 = vld [vmem:[%s1245] sm:$0xf]
      %v1247 = vld [vmem:[%s1245 + $0x4] sm:$0xf]
      %v1248 = vld [vmem:[%s1245 + $0x8] sm:$0xf]
      %v1249 = vld [vmem:[%s1245 + $0xc] sm:$0xf]
      %v1250 = vld [vmem:[%s1245 + $0x10] sm:$0xf]
      %v1251 = vld [vmem:[%s1245 + $0x14] sm:$0xf]
      %v1252 = vld [vmem:[%s1245 + $0x18] sm:$0xf]
      %v1253 = vld [vmem:[%s1245 + $0x1c] sm:$0xf]
      %v1254 = vld [vmem:[%s1245 + $0x20] sm:$0xf]
      %v1255 = vld [vmem:[%s1245 + $0x24] sm:$0xf]
      %v1256 = vld [vmem:[%s1245 + $0x28] sm:$0xf]
      %v1257 = vld [vmem:[%s1245 + $0x2c] sm:$0xf]
      %v1258 = vld [vmem:[%s1245 + $0x30] sm:$0xf]
      %v1259 = vld [vmem:[%s1245 + $0x34] sm:$0xf]
      %v1260 = vld [vmem:[%s1245 + $0x38] sm:$0xf]
      %v1261 = vld [vmem:[%s1245 + $0x3c] sm:$0xf]
      %v1262 = vunpack.c.l.b16 %v1244
      %v1263 = vpack.c.b16 %v796, %v795
      %v1264 = vpack.c.b16 %v798, %v797
      %v1265 = vpack.c.b16 %v800, %v799
      %v1266 = vpack.c.b16 %v1262, %v801
      %v1287 = vunpack.c.l.b16 %v1246
      %v1288 = vunpack.c.l.b16 %v1247
      %v1289 = vunpack.c.l.b16 %v1248
      %v1290 = vunpack.c.l.b16 %v1249
      %v1291 = vunpack.c.l.b16 %v1250
      %v1292 = vunpack.c.l.b16 %v1251
      %v1293 = vunpack.c.l.b16 %v1252
      %v1294 = vunpack.c.l.b16 %v1253
      %v1295 = vunpack.c.l.b16 %v1254
      %v1296 = vunpack.c.l.b16 %v1255
      %v1297 = vunpack.c.l.b16 %v1256
      %v1298 = vunpack.c.l.b16 %v1257
      %v1299 = vunpack.c.l.b16 %v1258
      %v1300 = vunpack.c.l.b16 %v1259
      %v1301 = vunpack.c.l.b16 %v1260
      %v1302 = vunpack.c.l.b16 %v1261
      %v1303 = vpack.c.b16 %v1288, %v1287
      %v1304 = vpack.c.b16 %v1290, %v1289
      %v1305 = vpack.c.b16 %v1292, %v1291
      %v1306 = vpack.c.b16 %v1294, %v1293
      %v1307 = vpack.c.b16 %v1296, %v1295
      %v1308 = vpack.c.b16 %v1298, %v1297
      %v1309 = vpack.c.b16 %v1300, %v1299
      %v1310 = vpack.c.b16 %v1302, %v1301
      %1319 = vmatprep.subr.bf16.mxu0 0
      %1320 = vmatpush1.bf16.msra.mxu0 %v1310
      %1321 = vmatprep.subr.bf16.mxu0 0
      %1322 = vmatpush1.bf16.msra.mxu0 %v1309
      %1323 = vmatprep.subr.bf16.mxu0 0
      %1324 = vmatpush1.bf16.msra.mxu0 %v1308
      %1325 = vmatprep.subr.bf16.mxu0 0
      %1326 = vmatpush1.bf16.msra.mxu0 %v1307
      %1327 = vmatprep.subr.bf16.mxu0 0
      %1328 = vmatpush1.bf16.msra.mxu0 %v1306
      %1329 = vmatprep.subr.bf16.mxu0 0
      %1330 = vmatpush1.bf16.msra.mxu0 %v1305
      %1331 = vmatprep.subr.bf16.mxu0 0
      %1332 = vmatpush1.bf16.msra.mxu0 %v1304
      %1333 = vmatprep.subr.bf16.mxu0 0
      %1334 = vmatpush1.bf16.msra.mxu0 %v1303
      %1335 = vmatprep.subr.bf16.mxu0 0
      %1336 = vmatpush2.bf16.msra.mxu0 0
      %1337 = vmatprep.subr.bf16.mxu0 0
      %1338 = vmatpush2.bf16.msra.mxu0 0
      %1339 = vmatprep.subr.bf16.mxu0 0
      %1340 = vmatpush2.bf16.msra.mxu0 0
      %1341 = vmatprep.subr.bf16.mxu0 0
      %1342 = vmatpush2.bf16.msra.mxu0 0
      %1343 = vmatprep.subr.bf16.mxu0 0
      %1344 = vmatpush2.bf16.msra.mxu0 0
      %1345 = vmatprep.subr.bf16.mxu0 0
      %1346 = vmatpush2.bf16.msra.mxu0 0
      %1347 = vmatprep.subr.bf16.mxu0 0
      %1348 = vmatpush2.bf16.msra.mxu0 0
      %1349 = vmatprep.subr.bf16.mxu0 0
      %1350 = vmatpush2.bf16.msra.mxu0 0
      %1351 = vmatprep.mubr.bf16.mxu0 0
      %1352 = vmatmul.mubr.bf16.gmra.mxu0 %v1263
      %v1353 = vpop.f32.mrf.mxu0
      %v1354 = vadd.f32 0.0, %v1353
      %v1355 = vpop.f32.mrf.mxu0
      %v1356 = vpop.f32.mrf.mxu0
      %v1357 = vadd.f32 0.0, %v1356
      %v1358 = vpop.f32.mrf.mxu0
      %1359 = vmatprep.mubr.bf16.mxu0 0
      %1360 = vmatmul.mubr.bf16.gmra.mxu0 %v1264
      %v1361 = vpop.f32.mrf.mxu0
      %v1362 = vadd.f32 0.0, %v1361
      %v1363 = vpop.f32.mrf.mxu0
      %v1364 = vpop.f32.mrf.mxu0
      %v1365 = vadd.f32 0.0, %v1364
      %v1366 = vpop.f32.mrf.mxu0
      %1367 = vmatprep.mubr.bf16.mxu0 0
      %1368 = vmatmul.mubr.bf16.gmra.mxu0 %v1265
      %v1369 = vpop.f32.mrf.mxu0
      %v1370 = vadd.f32 0.0, %v1369
      %v1371 = vpop.f32.mrf.mxu0
      %v1372 = vpop.f32.mrf.mxu0
      %v1373 = vadd.f32 0.0, %v1372
      %v1374 = vpop.f32.mrf.mxu0
      %1375 = vmatprep.mubr.bf16.mxu0 0
      %1376 = vmatmul.mubr.bf16.gmra.mxu0 %v1266
      %v1377 = vpop.f32.mrf.mxu0
      %v1378 = vadd.f32 0.0, %v1377
      %v1379 = vpop.f32.mrf.mxu0
      %v1380 = vpop.f32.mrf.mxu0
      %v1381 = vadd.f32 0.0, %v1380
      %v1382 = vpop.f32.mrf.mxu0
      %1383 = vdwg.mxu0
      %v1384 = vadd.f32 %v1232, %v1354
      %v1385 = vadd.f32 %v1233, %v1357
      %v1386 = vadd.f32 %v1234, %v1362
      %v1387 = vadd.f32 %v1235, %v1365
      %v1388 = vadd.f32 %v1236, %v1370
      %v1389 = vadd.f32 %v1237, %v1373
      %v1390 = vadd.f32 %v1238, %v1378
      %v1391 = vadd.f32 %v1239, %v1381
      %s1392 = scalar_lea.vmem %s1, 384
      %v1393 = vld [vmem:[%s1392] sm:$0xf]
      %v1394 = vld [vmem:[%s1392 + $0x4] sm:$0xf]
      %v1395 = vld [vmem:[%s1392 + $0x8] sm:$0xf]
      %v1396 = vld [vmem:[%s1392 + $0xc] sm:$0xf]
      %v1397 = vld [vmem:[%s1392 + $0x10] sm:$0xf]
      %v1398 = vld [vmem:[%s1392 + $0x14] sm:$0xf]
      %v1399 = vld [vmem:[%s1392 + $0x18] sm:$0xf]
      %v1400 = vld [vmem:[%s1392 + $0x1c] sm:$0xf]
      %v1401 = vld [vmem:[%s1392 + $0x20] sm:$0xf]
      %v1402 = vld [vmem:[%s1392 + $0x24] sm:$0xf]
      %v1403 = vld [vmem:[%s1392 + $0x28] sm:$0xf]
      %v1404 = vld [vmem:[%s1392 + $0x2c] sm:$0xf]
      %v1405 = vld [vmem:[%s1392 + $0x30] sm:$0xf]
      %v1406 = vld [vmem:[%s1392 + $0x34] sm:$0xf]
      %v1407 = vld [vmem:[%s1392 + $0x38] sm:$0xf]
      %v1408 = vld [vmem:[%s1392 + $0x3c] sm:$0xf]
      %v1410 = vunpack.c.l.b16 %v318
      %v1411 = vpack.c.b16 %v1410, %v949
      %v1429 = vunpack.c.l.b16 %v1393
      %v1430 = vunpack.c.l.b16 %v1394
      %v1431 = vunpack.c.l.b16 %v1395
      %v1432 = vunpack.c.l.b16 %v1396
      %v1433 = vunpack.c.l.b16 %v1397
      %v1434 = vunpack.c.l.b16 %v1398
      %v1435 = vunpack.c.l.b16 %v1399
      %v1436 = vunpack.c.l.b16 %v1400
      %v1437 = vunpack.c.l.b16 %v1401
      %v1438 = vunpack.c.l.b16 %v1402
      %v1439 = vunpack.c.l.b16 %v1403
      %v1440 = vunpack.c.l.b16 %v1404
      %v1441 = vunpack.c.l.b16 %v1405
      %v1442 = vunpack.c.l.b16 %v1406
      %v1443 = vunpack.c.l.b16 %v1407
      %v1444 = vunpack.c.l.b16 %v1408
      %v1445 = vpack.c.b16 %v1430, %v1429
      %v1446 = vpack.c.b16 %v1432, %v1431
      %v1447 = vpack.c.b16 %v1434, %v1433
      %v1448 = vpack.c.b16 %v1436, %v1435
      %v1449 = vpack.c.b16 %v1438, %v1437
      %v1450 = vpack.c.b16 %v1440, %v1439
      %v1451 = vpack.c.b16 %v1442, %v1441
      %v1452 = vpack.c.b16 %v1444, %v1443
      %1461 = vmatprep.subr.bf16.mxu0 0
      %1462 = vmatpush1.bf16.msra.mxu0 %v1452
      %1463 = vmatprep.subr.bf16.mxu0 0
      %1464 = vmatpush1.bf16.msra.mxu0 %v1451
      %1465 = vmatprep.subr.bf16.mxu0 0
      %1466 = vmatpush1.bf16.msra.mxu0 %v1450
      %1467 = vmatprep.subr.bf16.mxu0 0
      %1468 = vmatpush1.bf16.msra.mxu0 %v1449
      %1469 = vmatprep.subr.bf16.mxu0 0
      %1470 = vmatpush1.bf16.msra.mxu0 %v1448
      %1471 = vmatprep.subr.bf16.mxu0 0
      %1472 = vmatpush1.bf16.msra.mxu0 %v1447
      %1473 = vmatprep.subr.bf16.mxu0 0
      %1474 = vmatpush1.bf16.msra.mxu0 %v1446
      %1475 = vmatprep.subr.bf16.mxu0 0
      %1476 = vmatpush1.bf16.msra.mxu0 %v1445
      %1477 = vmatprep.subr.bf16.mxu0 0
      %1478 = vmatpush2.bf16.msra.mxu0 0
      %1479 = vmatprep.subr.bf16.mxu0 0
      %1480 = vmatpush2.bf16.msra.mxu0 0
      %1481 = vmatprep.subr.bf16.mxu0 0
      %1482 = vmatpush2.bf16.msra.mxu0 0
      %1483 = vmatprep.subr.bf16.mxu0 0
      %1484 = vmatpush2.bf16.msra.mxu0 0
      %1485 = vmatprep.subr.bf16.mxu0 0
      %1486 = vmatpush2.bf16.msra.mxu0 0
      %1487 = vmatprep.subr.bf16.mxu0 0
      %1488 = vmatpush2.bf16.msra.mxu0 0
      %1489 = vmatprep.subr.bf16.mxu0 0
      %1490 = vmatpush2.bf16.msra.mxu0 0
      %1491 = vmatprep.subr.bf16.mxu0 0
      %1492 = vmatpush2.bf16.msra.mxu0 0
      %1493 = vmatprep.mubr.bf16.mxu0 0
      %1494 = vmatmul.mubr.bf16.gmra.mxu0 %v614
      %v1495 = vpop.f32.mrf.mxu0
      %v1496 = vadd.f32 0.0, %v1495
      %v1497 = vpop.f32.mrf.mxu0
      %v1498 = vpop.f32.mrf.mxu0
      %v1499 = vadd.f32 0.0, %v1498
      %v1500 = vpop.f32.mrf.mxu0
      %1501 = vmatprep.mubr.bf16.mxu0 0
      %1502 = vmatmul.mubr.bf16.gmra.mxu0 %v615
      %v1503 = vpop.f32.mrf.mxu0
      %v1504 = vadd.f32 0.0, %v1503
      %v1505 = vpop.f32.mrf.mxu0
      %v1506 = vpop.f32.mrf.mxu0
      %v1507 = vadd.f32 0.0, %v1506
      %v1508 = vpop.f32.mrf.mxu0
      %1509 = vmatprep.mubr.bf16.mxu0 0
      %1510 = vmatmul.mubr.bf16.gmra.mxu0 %v616
      %v1511 = vpop.f32.mrf.mxu0
      %v1512 = vadd.f32 0.0, %v1511
      %v1513 = vpop.f32.mrf.mxu0
      %v1514 = vpop.f32.mrf.mxu0
      %v1515 = vadd.f32 0.0, %v1514
      %v1516 = vpop.f32.mrf.mxu0
      %1517 = vmatprep.mubr.bf16.mxu0 0
      %1518 = vmatmul.mubr.bf16.gmra.mxu0 %v1411
      %v1519 = vpop.f32.mrf.mxu0
      %v1520 = vadd.f32 0.0, %v1519
      %v1521 = vpop.f32.mrf.mxu0
      %v1522 = vpop.f32.mrf.mxu0
      %v1523 = vadd.f32 0.0, %v1522
      %v1524 = vpop.f32.mrf.mxu0
      %1525 = vdwg.mxu0
      %v1526 = vadd.f32 %v1384, %v1496
      %v1527 = vadd.f32 %v1385, %v1499
      %v1528 = vadd.f32 %v1386, %v1504
      %v1529 = vadd.f32 %v1387, %v1507
      %v1530 = vadd.f32 %v1388, %v1512
      %v1531 = vadd.f32 %v1389, %v1515
      %v1532 = vadd.f32 %v1390, %v1520
      %v1533 = vadd.f32 %v1391, %v1523
      %v1535 = vshrl.u32 %v318, 16
      %v1537 = vrot.slane %v1535, 4
      %v1538 = vshll.u32 %v318, 16
      %v1540 = vrot.slane %v1538, 5
      %v1541 = vor.u32 %v1537, %v1540
      %v1542 = vrot.slane %v1541, 4
      %v1544 = vshll.u32 %v319, 16
      %v1546 = vrot.slane %v1544, 5
      %v1547 = vsel %vm338, %v1542, %v1546
      %s1548 = scalar_lea.vmem %s1, 448
      %v1549 = vld [vmem:[%s1548] sm:$0xf]
      %v1550 = vld [vmem:[%s1548 + $0x4] sm:$0xf]
      %v1551 = vld [vmem:[%s1548 + $0x8] sm:$0xf]
      %v1552 = vld [vmem:[%s1548 + $0xc] sm:$0xf]
      %v1553 = vld [vmem:[%s1548 + $0x10] sm:$0xf]
      %v1554 = vld [vmem:[%s1548 + $0x14] sm:$0xf]
      %v1555 = vld [vmem:[%s1548 + $0x18] sm:$0xf]
      %v1556 = vld [vmem:[%s1548 + $0x1c] sm:$0xf]
      %v1557 = vld [vmem:[%s1548 + $0x20] sm:$0xf]
      %v1558 = vld [vmem:[%s1548 + $0x24] sm:$0xf]
      %v1559 = vld [vmem:[%s1548 + $0x28] sm:$0xf]
      %v1560 = vld [vmem:[%s1548 + $0x2c] sm:$0xf]
      %v1561 = vld [vmem:[%s1548 + $0x30] sm:$0xf]
      %v1562 = vld [vmem:[%s1548 + $0x34] sm:$0xf]
      %v1563 = vld [vmem:[%s1548 + $0x38] sm:$0xf]
      %v1564 = vld [vmem:[%s1548 + $0x3c] sm:$0xf]
      %v1565 = vunpack.c.l.b16 %v1547
      %v1566 = vpack.c.b16 %v1565, %v1110
      %v1584 = vunpack.c.l.b16 %v1549
      %v1585 = vunpack.c.l.b16 %v1550
      %v1586 = vunpack.c.l.b16 %v1551
      %v1587 = vunpack.c.l.b16 %v1552
      %v1588 = vunpack.c.l.b16 %v1553
      %v1589 = vunpack.c.l.b16 %v1554
      %v1590 = vunpack.c.l.b16 %v1555
      %v1591 = vunpack.c.l.b16 %v1556
      %v1592 = vunpack.c.l.b16 %v1557
      %v1593 = vunpack.c.l.b16 %v1558
      %v1594 = vunpack.c.l.b16 %v1559
      %v1595 = vunpack.c.l.b16 %v1560
      %v1596 = vunpack.c.l.b16 %v1561
      %v1597 = vunpack.c.l.b16 %v1562
      %v1598 = vunpack.c.l.b16 %v1563
      %v1599 = vunpack.c.l.b16 %v1564
      %v1600 = vpack.c.b16 %v1585, %v1584
      %v1601 = vpack.c.b16 %v1587, %v1586
      %v1602 = vpack.c.b16 %v1589, %v1588
      %v1603 = vpack.c.b16 %v1591, %v1590
      %v1604 = vpack.c.b16 %v1593, %v1592
      %v1605 = vpack.c.b16 %v1595, %v1594
      %v1606 = vpack.c.b16 %v1597, %v1596
      %v1607 = vpack.c.b16 %v1599, %v1598
      %1616 = vmatprep.subr.bf16.mxu0 0
      %1617 = vmatpush1.bf16.msra.mxu0 %v1607
      %1618 = vmatprep.subr.bf16.mxu0 0
      %1619 = vmatpush1.bf16.msra.mxu0 %v1606
      %1620 = vmatprep.subr.bf16.mxu0 0
      %1621 = vmatpush1.bf16.msra.mxu0 %v1605
      %1622 = vmatprep.subr.bf16.mxu0 0
      %1623 = vmatpush1.bf16.msra.mxu0 %v1604
      %1624 = vmatprep.subr.bf16.mxu0 0
      %1625 = vmatpush1.bf16.msra.mxu0 %v1603
      %1626 = vmatprep.subr.bf16.mxu0 0
      %1627 = vmatpush1.bf16.msra.mxu0 %v1602
      %1628 = vmatprep.subr.bf16.mxu0 0
      %1629 = vmatpush1.bf16.msra.mxu0 %v1601
      %1630 = vmatprep.subr.bf16.mxu0 0
      %1631 = vmatpush1.bf16.msra.mxu0 %v1600
      %1632 = vmatprep.subr.bf16.mxu0 0
      %1633 = vmatpush2.bf16.msra.mxu0 0
      %1634 = vmatprep.subr.bf16.mxu0 0
      %1635 = vmatpush2.bf16.msra.mxu0 0
      %1636 = vmatprep.subr.bf16.mxu0 0
      %1637 = vmatpush2.bf16.msra.mxu0 0
      %1638 = vmatprep.subr.bf16.mxu0 0
      %1639 = vmatpush2.bf16.msra.mxu0 0
      %1640 = vmatprep.subr.bf16.mxu0 0
      %1641 = vmatpush2.bf16.msra.mxu0 0
      %1642 = vmatprep.subr.bf16.mxu0 0
      %1643 = vmatpush2.bf16.msra.mxu0 0
      %1644 = vmatprep.subr.bf16.mxu0 0
      %1645 = vmatpush2.bf16.msra.mxu0 0
      %1646 = vmatprep.subr.bf16.mxu0 0
      %1647 = vmatpush2.bf16.msra.mxu0 0
      %1648 = vmatprep.mubr.bf16.mxu0 0
      %1649 = vmatmul.mubr.bf16.gmra.mxu0 %v477
      %v1650 = vpop.f32.mrf.mxu0
      %v1651 = vadd.f32 0.0, %v1650
      %v1652 = vpop.f32.mrf.mxu0
      %v1653 = vpop.f32.mrf.mxu0
      %v1654 = vadd.f32 0.0, %v1653
      %v1655 = vpop.f32.mrf.mxu0
      %1656 = vmatprep.mubr.bf16.mxu0 0
      %1657 = vmatmul.mubr.bf16.gmra.mxu0 %v478
      %v1658 = vpop.f32.mrf.mxu0
      %v1659 = vadd.f32 0.0, %v1658
      %v1660 = vpop.f32.mrf.mxu0
      %v1661 = vpop.f32.mrf.mxu0
      %v1662 = vadd.f32 0.0, %v1661
      %v1663 = vpop.f32.mrf.mxu0
      %1664 = vmatprep.mubr.bf16.mxu0 0
      %1665 = vmatmul.mubr.bf16.gmra.mxu0 %v479
      %v1666 = vpop.f32.mrf.mxu0
      %v1667 = vadd.f32 0.0, %v1666
      %v1668 = vpop.f32.mrf.mxu0
      %v1669 = vpop.f32.mrf.mxu0
      %v1670 = vadd.f32 0.0, %v1669
      %v1671 = vpop.f32.mrf.mxu0
      %1672 = vmatprep.mubr.bf16.mxu0 0
      %1673 = vmatmul.mubr.bf16.gmra.mxu0 %v1566
      %v1674 = vpop.f32.mrf.mxu0
      %v1675 = vadd.f32 0.0, %v1674
      %v1676 = vpop.f32.mrf.mxu0
      %v1677 = vpop.f32.mrf.mxu0
      %v1678 = vadd.f32 0.0, %v1677
      %v1679 = vpop.f32.mrf.mxu0
      %1680 = vdwg.mxu0
      %v1681 = vadd.f32 %v1526, %v1651
      %v1682 = vadd.f32 %v1527, %v1654
      %v1683 = vadd.f32 %v1528, %v1659
      %v1684 = vadd.f32 %v1529, %v1662
      %v1685 = vadd.f32 %v1530, %v1667
      %v1686 = vadd.f32 %v1531, %v1670
      %v1687 = vadd.f32 %v1532, %v1675
      %v1688 = vadd.f32 %v1533, %v1678
      %v1690 = vrot.slane %v318, 5
      %v1691 = vrot.slane %v1690, 4
      %v1692 = vrot.slane %v319, 5
      %v1693 = vsel %vm744, %v1691, %v1692
      %s1694 = scalar_lea.vmem %s1, 512
      %v1695 = vld [vmem:[%s1694] sm:$0xf]
      %v1696 = vld [vmem:[%s1694 + $0x4] sm:$0xf]
      %v1697 = vld [vmem:[%s1694 + $0x8] sm:$0xf]
      %v1698 = vld [vmem:[%s1694 + $0xc] sm:$0xf]
      %v1699 = vld [vmem:[%s1694 + $0x10] sm:$0xf]
      %v1700 = vld [vmem:[%s1694 + $0x14] sm:$0xf]
      %v1701 = vld [vmem:[%s1694 + $0x18] sm:$0xf]
      %v1702 = vld [vmem:[%s1694 + $0x1c] sm:$0xf]
      %v1703 = vld [vmem:[%s1694 + $0x20] sm:$0xf]
      %v1704 = vld [vmem:[%s1694 + $0x24] sm:$0xf]
      %v1705 = vld [vmem:[%s1694 + $0x28] sm:$0xf]
      %v1706 = vld [vmem:[%s1694 + $0x2c] sm:$0xf]
      %v1707 = vld [vmem:[%s1694 + $0x30] sm:$0xf]
      %v1708 = vld [vmem:[%s1694 + $0x34] sm:$0xf]
      %v1709 = vld [vmem:[%s1694 + $0x38] sm:$0xf]
      %v1710 = vld [vmem:[%s1694 + $0x3c] sm:$0xf]
      %v1711 = vunpack.c.l.b16 %v1693
      %v1712 = vpack.c.b16 %v1711, %v1262
      %v1730 = vunpack.c.l.b16 %v1695
      %v1731 = vunpack.c.l.b16 %v1696
      %v1732 = vunpack.c.l.b16 %v1697
      %v1733 = vunpack.c.l.b16 %v1698
      %v1734 = vunpack.c.l.b16 %v1699
      %v1735 = vunpack.c.l.b16 %v1700
      %v1736 = vunpack.c.l.b16 %v1701
      %v1737 = vunpack.c.l.b16 %v1702
      %v1738 = vunpack.c.l.b16 %v1703
      %v1739 = vunpack.c.l.b16 %v1704
      %v1740 = vunpack.c.l.b16 %v1705
      %v1741 = vunpack.c.l.b16 %v1706
      %v1742 = vunpack.c.l.b16 %v1707
      %v1743 = vunpack.c.l.b16 %v1708
      %v1744 = vunpack.c.l.b16 %v1709
      %v1745 = vunpack.c.l.b16 %v1710
      %v1746 = vpack.c.b16 %v1731, %v1730
      %v1747 = vpack.c.b16 %v1733, %v1732
      %v1748 = vpack.c.b16 %v1735, %v1734
      %v1749 = vpack.c.b16 %v1737, %v1736
      %v1750 = vpack.c.b16 %v1739, %v1738
      %v1751 = vpack.c.b16 %v1741, %v1740
      %v1752 = vpack.c.b16 %v1743, %v1742
      %v1753 = vpack.c.b16 %v1745, %v1744
      %1762 = vmatprep.subr.bf16.mxu0 0
      %1763 = vmatpush1.bf16.msra.mxu0 %v1753
      %1764 = vmatprep.subr.bf16.mxu0 0
      %1765 = vmatpush1.bf16.msra.mxu0 %v1752
      %1766 = vmatprep.subr.bf16.mxu0 0
      %1767 = vmatpush1.bf16.msra.mxu0 %v1751
      %1768 = vmatprep.subr.bf16.mxu0 0
      %1769 = vmatpush1.bf16.msra.mxu0 %v1750
      %1770 = vmatprep.subr.bf16.mxu0 0
      %1771 = vmatpush1.bf16.msra.mxu0 %v1749
      %1772 = vmatprep.subr.bf16.mxu0 0
      %1773 = vmatpush1.bf16.msra.mxu0 %v1748
      %1774 = vmatprep.subr.bf16.mxu0 0
      %1775 = vmatpush1.bf16.msra.mxu0 %v1747
      %1776 = vmatprep.subr.bf16.mxu0 0
      %1777 = vmatpush1.bf16.msra.mxu0 %v1746
      %1778 = vmatprep.subr.bf16.mxu0 0
      %1779 = vmatpush2.bf16.msra.mxu0 0
      %1780 = vmatprep.subr.bf16.mxu0 0
      %1781 = vmatpush2.bf16.msra.mxu0 0
      %1782 = vmatprep.subr.bf16.mxu0 0
      %1783 = vmatpush2.bf16.msra.mxu0 0
      %1784 = vmatprep.subr.bf16.mxu0 0
      %1785 = vmatpush2.bf16.msra.mxu0 0
      %1786 = vmatprep.subr.bf16.mxu0 0
      %1787 = vmatpush2.bf16.msra.mxu0 0
      %1788 = vmatprep.subr.bf16.mxu0 0
      %1789 = vmatpush2.bf16.msra.mxu0 0
      %1790 = vmatprep.subr.bf16.mxu0 0
      %1791 = vmatpush2.bf16.msra.mxu0 0
      %1792 = vmatprep.subr.bf16.mxu0 0
      %1793 = vmatpush2.bf16.msra.mxu0 0
      %1794 = vmatprep.mubr.bf16.mxu0 0
      %1795 = vmatmul.mubr.bf16.gmra.mxu0 %v803
      %v1796 = vpop.f32.mrf.mxu0
      %v1797 = vadd.f32 0.0, %v1796
      %v1798 = vpop.f32.mrf.mxu0
      %v1799 = vpop.f32.mrf.mxu0
      %v1800 = vadd.f32 0.0, %v1799
      %v1801 = vpop.f32.mrf.mxu0
      %1802 = vmatprep.mubr.bf16.mxu0 0
      %1803 = vmatmul.mubr.bf16.gmra.mxu0 %v804
      %v1804 = vpop.f32.mrf.mxu0
      %v1805 = vadd.f32 0.0, %v1804
      %v1806 = vpop.f32.mrf.mxu0
      %v1807 = vpop.f32.mrf.mxu0
      %v1808 = vadd.f32 0.0, %v1807
      %v1809 = vpop.f32.mrf.mxu0
      %1810 = vmatprep.mubr.bf16.mxu0 0
      %1811 = vmatmul.mubr.bf16.gmra.mxu0 %v805
      %v1812 = vpop.f32.mrf.mxu0
      %v1813 = vadd.f32 0.0, %v1812
      %v1814 = vpop.f32.mrf.mxu0
      %v1815 = vpop.f32.mrf.mxu0
      %v1816 = vadd.f32 0.0, %v1815
      %v1817 = vpop.f32.mrf.mxu0
      %1818 = vmatprep.mubr.bf16.mxu0 0
      %1819 = vmatmul.mubr.bf16.gmra.mxu0 %v1712
      %v1820 = vpop.f32.mrf.mxu0
      %v1821 = vadd.f32 0.0, %v1820
      %v1822 = vpop.f32.mrf.mxu0
      %v1823 = vpop.f32.mrf.mxu0
      %v1824 = vadd.f32 0.0, %v1823
      %v1825 = vpop.f32.mrf.mxu0
      %1826 = vdwg.mxu0
      %v1827 = vadd.f32 %v1681, %v1797
      %v1828 = vadd.f32 %v1682, %v1800
      %v1829 = vadd.f32 %v1683, %v1805
      %v1830 = vadd.f32 %v1684, %v1808
      %v1831 = vadd.f32 %v1685, %v1813
      %v1832 = vadd.f32 %v1686, %v1816
      %v1833 = vadd.f32 %v1687, %v1821
      %v1834 = vadd.f32 %v1688, %v1824
      %v1835 = vld [vmem:[%s2] sm:$0x1]
      %v1837 = vlaneseq
      %v1838 = vshrl.u32 %v1837, 7
      %v1839 = vsub.s32 0, %v1838
      %v1840 = vrot.slane %v1835, %v1839
      %v1842 = vadd.f32 %v1827, %v1840
      %v1843 = vadd.f32 %v1828, %v1840
      %v1844 = vadd.f32 %v1829, %v1840
      %v1845 = vadd.f32 %v1830, %v1840
      %v1846 = vadd.f32 %v1831, %v1840
      %v1847 = vadd.f32 %v1832, %v1840
      %v1848 = vadd.f32 %v1833, %v1840
      %v1849 = vadd.f32 %v1834, %v1840
      %s1850 = smul.u32 %s296, 8
      %s1851 = smul.addr %s1850, 4
      %s1852 = scalar_lea.vmem %s284, %s1851
      %v1853 = vld [vmem:[%s1852 + $0x8] sm:$0xff]
      %v1854 = vld [vmem:[%s1852 + $0x28] sm:$0xff]
      %v1855 = vld [vmem:[%s1852 + $0x48] sm:$0xff]
      %v1856 = vld [vmem:[%s1852 + $0x68] sm:$0xff]
      %v1857 = vld [vmem:[%s1852 + $0x88] sm:$0xff]
      %v1858 = vld [vmem:[%s1852 + $0xa8] sm:$0xff]
      %v1859 = vld [vmem:[%s1852 + $0xc8] sm:$0xff]
      %v1860 = vld [vmem:[%s1852 + $0xe8] sm:$0xff]
      %v1869 = vrot.slane %v1853, 4
      %v1870 = vrot.slane %v1854, 4
      %v1871 = vrot.slane %v1855, 4
      %v1872 = vrot.slane %v1856, 4
      %v1873 = vrot.slane %v1857, 4
      %v1874 = vrot.slane %v1858, 4
      %v1875 = vrot.slane %v1859, 4
      %v1876 = vrot.slane %v1860, 4
      %v1877 = vld [vmem:[%s4] sm:$0xf]
      %v1878 = vld [vmem:[%s4 + $0x4] sm:$0xf]
      %v1879 = vld [vmem:[%s4 + $0x8] sm:$0xf]
      %v1880 = vld [vmem:[%s4 + $0xc] sm:$0xf]
      %v1881 = vld [vmem:[%s4 + $0x10] sm:$0xf]
      %v1882 = vld [vmem:[%s4 + $0x14] sm:$0xf]
      %v1883 = vld [vmem:[%s4 + $0x18] sm:$0xf]
      %v1884 = vld [vmem:[%s4 + $0x1c] sm:$0xf]
      %v1885 = vld [vmem:[%s4 + $0x20] sm:$0xf]
      %v1886 = vld [vmem:[%s4 + $0x24] sm:$0xf]
      %v1887 = vld [vmem:[%s4 + $0x28] sm:$0xf]
      %v1888 = vld [vmem:[%s4 + $0x2c] sm:$0xf]
      %v1889 = vld [vmem:[%s4 + $0x30] sm:$0xf]
      %v1890 = vld [vmem:[%s4 + $0x34] sm:$0xf]
      %v1891 = vld [vmem:[%s4 + $0x38] sm:$0xf]
      %v1892 = vld [vmem:[%s4 + $0x3c] sm:$0xf]
      %v1893 = vld [vmem:[%s5] sm:$0x1]
      %v1895 = vlaneseq
      %v1896 = vshrl.u32 %v1895, 7
      %v1897 = vsub.s32 0, %v1896
      %v1898 = vrot.slane %v1893, %v1897
      %v1900 = vunpack.c.l.b16 %v1869
      %v1901 = vunpack.c.l.b16 %v1870
      %v1902 = vunpack.c.l.b16 %v1871
      %v1903 = vunpack.c.l.b16 %v1872
      %v1904 = vunpack.c.l.b16 %v1873
      %v1905 = vunpack.c.l.b16 %v1874
      %v1906 = vunpack.c.l.b16 %v1875
      %v1907 = vunpack.c.l.b16 %v1876
      %v1908 = vpack.c.b16 %v1901, %v1900
      %v1909 = vpack.c.b16 %v1903, %v1902
      %v1910 = vpack.c.b16 %v1905, %v1904
      %v1911 = vpack.c.b16 %v1907, %v1906
      %v1932 = vunpack.c.l.b16 %v1877
      %v1933 = vunpack.c.l.b16 %v1878
      %v1934 = vunpack.c.l.b16 %v1879
      %v1935 = vunpack.c.l.b16 %v1880
      %v1936 = vunpack.c.l.b16 %v1881
      %v1937 = vunpack.c.l.b16 %v1882
      %v1938 = vunpack.c.l.b16 %v1883
      %v1939 = vunpack.c.l.b16 %v1884
      %v1940 = vunpack.c.l.b16 %v1885
      %v1941 = vunpack.c.l.b16 %v1886
      %v1942 = vunpack.c.l.b16 %v1887
      %v1943 = vunpack.c.l.b16 %v1888
      %v1944 = vunpack.c.l.b16 %v1889
      %v1945 = vunpack.c.l.b16 %v1890
      %v1946 = vunpack.c.l.b16 %v1891
      %v1947 = vunpack.c.l.b16 %v1892
      %v1948 = vpack.c.b16 %v1933, %v1932
      %v1949 = vpack.c.b16 %v1935, %v1934
      %v1950 = vpack.c.b16 %v1937, %v1936
      %v1951 = vpack.c.b16 %v1939, %v1938
      %v1952 = vpack.c.b16 %v1941, %v1940
      %v1953 = vpack.c.b16 %v1943, %v1942
      %v1954 = vpack.c.b16 %v1945, %v1944
      %v1955 = vpack.c.b16 %v1947, %v1946
      %1964 = vmatprep.subr.bf16.mxu0 0
      %1965 = vmatpush1.bf16.msra.mxu0 %v1955
      %1966 = vmatprep.subr.bf16.mxu0 0
      %1967 = vmatpush1.bf16.msra.mxu0 %v1954
      %1968 = vmatprep.subr.bf16.mxu0 0
      %1969 = vmatpush1.bf16.msra.mxu0 %v1953
      %1970 = vmatprep.subr.bf16.mxu0 0
      %1971 = vmatpush1.bf16.msra.mxu0 %v1952
      %1972 = vmatprep.subr.bf16.mxu0 0
      %1973 = vmatpush1.bf16.msra.mxu0 %v1951
      %1974 = vmatprep.subr.bf16.mxu0 0
      %1975 = vmatpush1.bf16.msra.mxu0 %v1950
      %1976 = vmatprep.subr.bf16.mxu0 0
      %1977 = vmatpush1.bf16.msra.mxu0 %v1949
      %1978 = vmatprep.subr.bf16.mxu0 0
      %1979 = vmatpush1.bf16.msra.mxu0 %v1948
      %1980 = vmatprep.subr.bf16.mxu0 0
      %1981 = vmatpush2.bf16.msra.mxu0 0
      %1982 = vmatprep.subr.bf16.mxu0 0
      %1983 = vmatpush2.bf16.msra.mxu0 0
      %1984 = vmatprep.subr.bf16.mxu0 0
      %1985 = vmatpush2.bf16.msra.mxu0 0
      %1986 = vmatprep.subr.bf16.mxu0 0
      %1987 = vmatpush2.bf16.msra.mxu0 0
      %1988 = vmatprep.subr.bf16.mxu0 0
      %1989 = vmatpush2.bf16.msra.mxu0 0
      %1990 = vmatprep.subr.bf16.mxu0 0
      %1991 = vmatpush2.bf16.msra.mxu0 0
      %1992 = vmatprep.subr.bf16.mxu0 0
      %1993 = vmatpush2.bf16.msra.mxu0 0
      %1994 = vmatprep.subr.bf16.mxu0 0
      %1995 = vmatpush2.bf16.msra.mxu0 0
      %1996 = vmatprep.mubr.bf16.mxu0 0
      %1997 = vmatmul.mubr.bf16.gmra.mxu0 %v1908
      %v1998 = vpop.f32.mrf.mxu0
      %v1999 = vadd.f32 %v1898, %v1998
      %v2000 = vpop.f32.mrf.mxu0
      %v2001 = vpop.f32.mrf.mxu0
      %v2002 = vadd.f32 %v1898, %v2001
      %v2003 = vpop.f32.mrf.mxu0
      %2004 = vmatprep.mubr.bf16.mxu0 0
      %2005 = vmatmul.mubr.bf16.gmra.mxu0 %v1909
      %v2006 = vpop.f32.mrf.mxu0
      %v2007 = vadd.f32 %v1898, %v2006
      %v2008 = vpop.f32.mrf.mxu0
      %v2009 = vpop.f32.mrf.mxu0
      %v2010 = vadd.f32 %v1898, %v2009
      %v2011 = vpop.f32.mrf.mxu0
      %2012 = vmatprep.mubr.bf16.mxu0 0
      %2013 = vmatmul.mubr.bf16.gmra.mxu0 %v1910
      %v2014 = vpop.f32.mrf.mxu0
      %v2015 = vadd.f32 %v1898, %v2014
      %v2016 = vpop.f32.mrf.mxu0
      %v2017 = vpop.f32.mrf.mxu0
      %v2018 = vadd.f32 %v1898, %v2017
      %v2019 = vpop.f32.mrf.mxu0
      %2020 = vmatprep.mubr.bf16.mxu0 0
      %2021 = vmatmul.mubr.bf16.gmra.mxu0 %v1911
      %v2022 = vpop.f32.mrf.mxu0
      %v2023 = vadd.f32 %v1898, %v2022
      %v2024 = vpop.f32.mrf.mxu0
      %v2025 = vpop.f32.mrf.mxu0
      %v2026 = vadd.f32 %v1898, %v2025
      %v2027 = vpop.f32.mrf.mxu0
      %2028 = vdwg.mxu0
      %v2029 = vadd.f32 %v1842, %v1999
      %v2030 = vadd.f32 %v1843, %v2002
      %v2031 = vadd.f32 %v1844, %v2007
      %v2032 = vadd.f32 %v1845, %v2010
      %v2033 = vadd.f32 %v1846, %v2015
      %v2034 = vadd.f32 %v1847, %v2018
      %v2035 = vadd.f32 %v1848, %v2023
      %v2036 = vadd.f32 %v1849, %v2026
      %v2037 = vmax.f32 %v2029, 0.0
      %v2038 = vmax.f32 %v2030, 0.0
      %v2039 = vmax.f32 %v2031, 0.0
      %v2040 = vmax.f32 %v2032, 0.0
      %v2041 = vmax.f32 %v2033, 0.0
      %v2042 = vmax.f32 %v2034, 0.0
      %v2043 = vmax.f32 %v2035, 0.0
      %v2044 = vmax.f32 %v2036, 0.0
      %v2045 = vmin.f32 %v2037, 6.0
      %v2046 = vmin.f32 %v2038, 6.0
      %v2047 = vmin.f32 %v2039, 6.0
      %v2048 = vmin.f32 %v2040, 6.0
      %v2049 = vmin.f32 %v2041, 6.0
      %v2050 = vmin.f32 %v2042, 6.0
      %v2051 = vmin.f32 %v2043, 6.0
      %v2052 = vmin.f32 %v2044, 6.0
      %2053 = vst [vmem:[%s293] sm:$0xff] %v2045
      %2054 = vst [vmem:[%s293 + $0x8] sm:$0xff] %v2046
      %2055 = vst [vmem:[%s293 + $0x10] sm:$0xff] %v2047
      %2056 = vst [vmem:[%s293 + $0x18] sm:$0xff] %v2048
      %2057 = vst [vmem:[%s293 + $0x20] sm:$0xff] %v2049
      %2058 = vst [vmem:[%s293 + $0x28] sm:$0xff] %v2050
      %2059 = vst [vmem:[%s293 + $0x30] sm:$0xff] %v2051
      %2060 = vst [vmem:[%s293 + $0x38] sm:$0xff] %v2052
      %s2061 = smul.u32 8, %s22
      %p2062 = scmp.lt.s32.totalorder %s21, 1
      %s2063 = scalar_select %p2062, %s21, 1
      %p2064 = scmp.lt.s32.totalorder %s2061, 7
      %s2065 = scalar_select %p2064, %s2061, 7
      %s2066 = smul.addr %s2063, 8
      %s2067 = sadd.s32 %s2065, %s2066
      %s2068 = smul.addr %s2067, 8
      %s2069 = scalar_lea.vmem %s6, %s2068
      // Predicated region
      $region45: #{basic_block_forward.3} parent=43 // pred_check
        %p2070 = pneg %p185
      $region46: #{basic_block_forward.3} parent=43 // pred_check_branch
        %2072 = sbr.rel (%p2070) target = $region48
      $region47: #{basic_block_forward.3} parent=43 // pred_region
        %s2073 = smul.u32 8, %s22
      $region48: #{basic_block_forward.3} parent=43 // pred_fallthru
        _
    $region44: #{basic_block_forward.3} parent=5 // pred_fallthru
      _
    %p2074 = scmp.le.s32.totalorder 2, %s12
    // Predicated region
    $region49: #{basic_block_forward.3} parent=5 // pred_check
      %p2075 = pneg %p2074
    $region50: #{basic_block_forward.3} parent=5 // pred_check_branch
      %2077 = sbr.rel (%p2075) target = $region52
    $region51: #{basic_block_forward.3} parent=5 // pred_region
      %s2078 = ssub.s32 %s12, 2
      // Predicated region
      $region53: #{basic_block_forward.3} parent=51 // pred_check
        %p2079 = pneg %p191
      $region54: #{basic_block_forward.3} parent=51 // pred_check_branch
        %2081 = sbr.rel (%p2079) target = $region56
      $region55: #{basic_block_forward.3} parent=51 // pred_region
        %s2082 = smul.u32 8, %s24
        %p2083 = scmp.lt.s32.totalorder %s23, 1
        %s2084 = scalar_select %p2083, %s23, 1
        %p2085 = scmp.lt.s32.totalorder %s2082, 7
        %s2086 = scalar_select %p2085, %s2082, 7
        %s2087 = smul.addr %s2084, 8
        %s2088 = sadd.s32 %s2086, %s2087
        %s2089 = smul.addr %s2088, 8
        %s2090 = scalar_lea.vmem %s6, %s2089
      $region56: #{basic_block_forward.3} parent=51 // pred_fallthru
        _
    $region52: #{basic_block_forward.3} parent=5 // pred_fallthru
      _
  $region6: #{basic_block_forward.3} parent=0 // loop_footer
    %s16 = sadd.s32 1, %s12
  $region7: #{basic_block_forward.3} parent=0 // loop_footer_branch
    %11 = sbr.rel target = $region3
  $region8: #{basic_block_forward.3} parent=0 // loop_exit
    _

</llo_original>
